<compile_context>
chip_gen: v7x
topology: tpu7x:2x2x1
jax: 0.10.0
libtpu: 0.0.40
codegen_flags: <defaults>
</compile_context>

<pallas_src>
import jax
import jax.numpy as jnp
import numpy as np
from jax.experimental import pallas as pl
from jax.experimental.pallas import tpu as pltpu


def _vmem():
    return pl.BlockSpec(memory_space=pltpu.MemorySpace.VMEM)


# ---------------------------------------------------------------------------
# Fused kernel factory (n_layers, shapes are static Python ints at trace time)
# ---------------------------------------------------------------------------
def make_grunet_kernel(n_layers, T, B, H, O):
    def kernel(*args):
        idx = 0
        x_ref = args[idx]; idx += 1                       # (T, B, Din)
        h0_ref = args[idx]; idx += 1                      # (n_layers, B, H)
        layer_refs = args[idx: idx + 4 * n_layers]; idx += 4 * n_layers
        fcw_ref = args[idx]; idx += 1                     # (H, O)
        fcb_ref = args[idx]; idx += 1                     # (1, O)
        y_ref = args[idx]; idx += 1                       # (T, O)
        hT_ref = args[idx]; idx += 1                      # (n_layers, B, H)
        xg_scr = args[idx]; idx += 1                      # (T, B, 3H) scratch
        buf = (args[idx], args[idx + 1])                  # 2x (T, B, H) scratch

        in_ref = x_ref
        for l in range(n_layers):
            wih_ref, whh_ref, bx_ref, bhn_ref = layer_refs[4 * l: 4 * l + 4]
            out_ref = buf[l % 2]
            din = in_ref.shape[-1]

            # ---- Hoisted input projection: ONE matmul for all T timesteps.
            #      Folded biases: r/z slots already contain b_i* + b_h*; the
            #      n slot contains b_in (b_hn must stay inside r * (...)).
            x_flat = in_ref[...].reshape(T * B, din)
            xg = (jnp.dot(x_flat, wih_ref[...],
                          preferred_element_type=jnp.float32) + bx_ref[...])
            xg_scr[...] = xg.reshape(T, B, 3 * H)

            whh = whh_ref[...]                                 # (H, 3H)
            bhn = jnp.broadcast_to(bhn_ref[...], (B, H))       # hoisted broadcast

            def step(t, h, out_ref=out_ref, whh=whh, bhn=bhn):
                # Single fused recurrent matmul per step (only MXU op on the
                # serial dependence chain).
                hg = jnp.dot(h, whh, preferred_element_type=jnp.float32)  # (B, 3H)
                g = xg_scr[t]                                             # (B, 3H)
                r = jax.nn.sigmoid(g[:, 0:H] + hg[:, 0:H])
                z = jax.nn.sigmoid(g[:, H:2 * H] + hg[:, H:2 * H])
                n = jnp.tanh(g[:, 2 * H:3 * H] + r * (hg[:, 2 * H:3 * H] + bhn))
                h_new = (1.0 - z) * n + z * h
                out_ref[t] = h_new
                return h_new

            # Short, static trip count -> fully unroll for LLO scheduling.
            h_final = jax.lax.fori_loop(0, T, step, h0_ref[l], unroll=True)
            hT_ref[l] = h_final
            in_ref = out_ref

        # ---- Head: fc(relu(out[:, -1])).  out[:, -1] selects the LAST BATCH
        #      element, exactly like the PyTorch module's `out[:, -1]`.
        out_all = in_ref[...]                     # (T, B, H)
        out_last = out_all[:, B - 1, :]           # (T, H)
        y_ref[...] = (jnp.dot(jnp.maximum(out_last, 0.0), fcw_ref[...],
                              preferred_element_type=jnp.float32)
                      + fcb_ref[...])

    return kernel


# ---------------------------------------------------------------------------
# Wrapper: single fused pallas_call (everything VMEM-resident at these sizes)
# ---------------------------------------------------------------------------
def grunet_forward(params, x, h0):
    T, B, _ = x.shape
    n_layers, _, H = h0.shape
    O = params["fc_w"].shape[-1]

    flat_layer_args = []
    for p in params["gru_layers"]:
        flat_layer_args += [p["wih"], p["whh"], p["bx"], p["bhn"]]

    n_inputs = 2 + 4 * n_layers + 2
    kernel = make_grunet_kernel(n_layers, T, B, H, O)

    # TODO(synk): nn.GRU inter-layer dropout is train-only; eval semantics
    # (no dropout) are implemented here.
    y, hT = pl.pallas_call(
        kernel,
        out_shape=(jax.ShapeDtypeStruct((T, O), jnp.float32),
                   jax.ShapeDtypeStruct((n_layers, B, H), jnp.float32)),
        in_specs=[_vmem()] * n_inputs,
        out_specs=(_vmem(), _vmem()),
        scratch_shapes=[
            pltpu.VMEM((T, B, 3 * H), jnp.float32),   # precomputed input gates
            pltpu.VMEM((T, B, H), jnp.float32),       # layer output ping
            pltpu.VMEM((T, B, H), jnp.float32),       # layer output pong
        ],
    )(x, h0, *flat_layer_args, params["fc_w"], params["fc_b"])
    return y, hT


# ---------------------------------------------------------------------------
# Parameter init: per-gate params (PyTorch layout) folded into fused layout
# ---------------------------------------------------------------------------
def init_params(key, input_dim, hidden_dim, output_dim, n_layers):
    layers = []
    for l in range(n_layers):
        din = input_dim if l == 0 else hidden_dim
        key, k1, k2, k3, k4 = jax.random.split(key, 5)
        w_ih = 0.1 * jax.random.normal(k1, (3, din, hidden_dim), jnp.float32)       # (r,z,n)
        w_hh = 0.1 * jax.random.normal(k2, (3, hidden_dim, hidden_dim), jnp.float32)
        b_ih = 0.1 * jax.random.normal(k3, (3, hidden_dim), jnp.float32)
        b_hh = 0.1 * jax.random.normal(k4, (3, hidden_dim), jnp.float32)

        # Fused layout: gates concatenated along the output (lane) axis.
        wih_cat = jnp.concatenate([w_ih[0], w_ih[1], w_ih[2]], axis=-1)   # (din, 3H)
        whh_cat = jnp.concatenate([w_hh[0], w_hh[1], w_hh[2]], axis=-1)   # (H, 3H)
        # Fold biases into the hoisted input projection:
        #   r, z slots: b_i* + b_h*;  n slot: b_in only (b_hn sits inside r*(...)).
        bx = jnp.concatenate([b_ih[0] + b_hh[0],
                              b_ih[1] + b_hh[1],
                              b_ih[2]], axis=-1)[None, :]                 # (1, 3H)
        bhn = b_hh[2][None, :]                                            # (1, H)
        layers.append(dict(wih=wih_cat, whh=whh_cat, bx=bx, bhn=bhn))

    key, kw, kb = jax.random.split(key, 3)
    fc_w = 0.1 * jax.random.normal(kw, (hidden_dim, output_dim), jnp.float32)
    fc_b = 0.1 * jax.random.normal(kb, (1, output_dim), jnp.float32)
    return dict(gru_layers=layers, fc_w=fc_w, fc_b=fc_b)


# ---------------------------------------------------------------------------
# Pure-JAX reference (same math, same packed params) for a correctness check
# ---------------------------------------------------------------------------
def grunet_reference(params, x, h0):
    T, B, _ = x.shape
    n_layers, _, H = h0.shape
    layer_in = x
    h_finals = []
    for l, p in enumerate(params["gru_layers"]):
        xg = jnp.einsum("tbd,dg->tbg", layer_in, p["wih"]) + p["bx"]

        def step(h, g, p=p):
            hg = h @ p["whh"]
            r = jax.nn.sigmoid(g[:, 0:H] + hg[:, 0:H])
            z = jax.nn.sigmoid(g[:, H:2 * H] + hg[:, H:2 * H])
            n = jnp.tanh(g[:, 2 * H:] + r * (hg[:, 2 * H:] + p["bhn"]))
            h_new = (1.0 - z) * n + z * h
            return h_new, h_new

        hT, out = jax.lax.scan(step, h0[l], xg)
        h_finals.append(hT)
        layer_in = out
    y = jnp.maximum(layer_in[:, -1], 0.0) @ params["fc_w"] + params["fc_b"]
    return y, jnp.stack(h_finals, axis=0)


if __name__ == "__main__":
    seq_len, batch = 8, 2
    input_dim, hidden_dim, output_dim, n_layers = 16, 32, 8, 2

    key = jax.random.PRNGKey(0)
    key, kx = jax.random.split(key)
    params = init_params(key, input_dim, hidden_dim, output_dim, n_layers)

    x = jax.random.normal(kx, (seq_len, batch, input_dim), jnp.float32)
    h0 = jnp.zeros((n_layers, batch, hidden_dim), jnp.float32)   # init_hidden()

    fwd = jax.jit(grunet_forward)
    y, h_out = fwd(params, x, h0)
    jax.block_until_ready((y, h_out))

    assert y.shape == (seq_len, output_dim)
    assert h_out.shape == (n_layers, batch, hidden_dim)

    y_ref, h_ref = jax.jit(grunet_reference)(params, x, h0)
    np.testing.assert_allclose(np.asarray(y), np.asarray(y_ref), rtol=2e-3, atol=2e-3)
    np.testing.assert_allclose(np.asarray(h_out), np.asarray(h_ref), rtol=2e-3, atol=2e-3)

    print("KERNEL_OK")
</pallas_src>

<mosaic_0001>
module attributes {stable_mosaic.version = 11 : i64} {
  func.func @kernel(%arg0: memref<8x2x16xf32, #tpu.memory_space<vmem>>, %arg1: memref<2x2x32xf32, #tpu.memory_space<vmem>>, %arg2: memref<16x96xf32, #tpu.memory_space<vmem>>, %arg3: memref<32x96xf32, #tpu.memory_space<vmem>>, %arg4: memref<1x96xf32, #tpu.memory_space<vmem>>, %arg5: memref<1x32xf32, #tpu.memory_space<vmem>>, %arg6: memref<32x96xf32, #tpu.memory_space<vmem>>, %arg7: memref<32x96xf32, #tpu.memory_space<vmem>>, %arg8: memref<1x96xf32, #tpu.memory_space<vmem>>, %arg9: memref<1x32xf32, #tpu.memory_space<vmem>>, %arg10: memref<32x8xf32, #tpu.memory_space<vmem>>, %arg11: memref<1x8xf32, #tpu.memory_space<vmem>>, %arg12: memref<8x8xf32, #tpu.memory_space<vmem>>, %arg13: memref<2x2x32xf32, #tpu.memory_space<vmem>>, %arg14: memref<8x2x96xf32, #tpu.memory_space<vmem>>, %arg15: memref<8x2x32xf32, #tpu.memory_space<vmem>>, %arg16: memref<8x2x32xf32, #tpu.memory_space<vmem>>) attributes {dimension_semantics = [], scalar_prefetch = 0 : i64, scratch_operands = 3 : i64, tpu.core_type = #tpu.core_type<tc>} {
    %c0 = arith.constant 0 : index
    %c0_0 = arith.constant 0 : index
    %c0_1 = arith.constant 0 : index
    %0 = vector.load %arg0[%c0, %c0_0, %c0_1] : memref<8x2x16xf32, #tpu.memory_space<vmem>>, vector<8x2x16xf32>
    %1 = vector.shape_cast %0 : vector<8x2x16xf32> to vector<16x16xf32>
    %c0_2 = arith.constant 0 : index
    %c0_3 = arith.constant 0 : index
    %2 = vector.load %arg2[%c0_2, %c0_3] : memref<16x96xf32, #tpu.memory_space<vmem>>, vector<16x96xf32>
    %cst = arith.constant dense<0.000000e+00> : vector<16x96xf32>
    %3 = tpu.matmul %1, %2, %cst {dimension_numbers = #tpu.dot_dimension_numbers<[1], [0], [0], [1], [0, 0, 1, 1], [], []>} : vector<16x16xf32>, vector<16x96xf32>, vector<16x96xf32> -> vector<16x96xf32>
    %c0_4 = arith.constant 0 : index
    %c0_5 = arith.constant 0 : index
    %4 = vector.load %arg4[%c0_4, %c0_5] : memref<1x96xf32, #tpu.memory_space<vmem>>, vector<1x96xf32>
    %5 = vector.broadcast %4 : vector<1x96xf32> to vector<16x96xf32>
    %6 = arith.addf %3, %5 : vector<16x96xf32>
    %7 = vector.shape_cast %6 : vector<16x96xf32> to vector<8x2x96xf32>
    %c0_6 = arith.constant 0 : index
    %c0_7 = arith.constant 0 : index
    %c0_8 = arith.constant 0 : index
    %8 = vector.load %arg14[%c0_6, %c0_7, %c0_8] : memref<8x2x96xf32, #tpu.memory_space<vmem>>, vector<8x2x96xf32>
    tpu.vector_store %arg14[%c0_6, %c0_7, %c0_8], %7 {strides = array<i32>} : memref<8x2x96xf32, #tpu.memory_space<vmem>>, vector<8x2x96xf32>,
    %c0_9 = arith.constant 0 : index
    %c0_10 = arith.constant 0 : index
    %9 = vector.load %arg3[%c0_9, %c0_10] : memref<32x96xf32, #tpu.memory_space<vmem>>, vector<32x96xf32>
    %c0_11 = arith.constant 0 : index
    %c0_12 = arith.constant 0 : index
    %10 = vector.load %arg5[%c0_11, %c0_12] : memref<1x32xf32, #tpu.memory_space<vmem>>, vector<1x32xf32>
    %11 = vector.shape_cast %10 : vector<1x32xf32> to vector<1x32xf32>
    %12 = vector.broadcast %11 : vector<1x32xf32> to vector<2x32xf32>
    %c0_13 = arith.constant 0 : index
    %c0_14 = arith.constant 0 : index
    %c0_15 = arith.constant 0 : index
    %13 = vector.load %arg1[%c0_13, %c0_14, %c0_15] : memref<2x2x32xf32, #tpu.memory_space<vmem>>, vector<1x2x32xf32>
    %14 = vector.shape_cast %13 : vector<1x2x32xf32> to vector<2x32xf32>
    %c0_i32 = arith.constant 0 : i32
    %cst_16 = arith.constant dense<0.000000e+00> : vector<2x96xf32>
    %15 = tpu.matmul %14, %9, %cst_16 {dimension_numbers = #tpu.dot_dimension_numbers<[1], [0], [0], [1], [0, 0, 1, 1], [], []>} : vector<2x32xf32>, vector<32x96xf32>, vector<2x96xf32> -> vector<2x96xf32>
    %16 = arith.index_cast %c0_i32 : i32 to index
    %c0_17 = arith.constant 0 : index
    %c0_18 = arith.constant 0 : index
    %17 = vector.load %arg14[%16, %c0_17, %c0_18] : memref<8x2x96xf32, #tpu.memory_space<vmem>>, vector<1x2x96xf32>
    %18 = vector.shape_cast %17 : vector<1x2x96xf32> to vector<2x96xf32>
    %19 = vector.extract_strided_slice %18 {offsets = [0, 0], sizes = [2, 32], strides = [1, 1]} : vector<2x96xf32> to vector<2x32xf32>
    %20 = vector.extract_strided_slice %15 {offsets = [0, 0], sizes = [2, 32], strides = [1, 1]} : vector<2x96xf32> to vector<2x32xf32>
    %21 = arith.addf %19, %20 : vector<2x32xf32>
    %22 = arith.negf %21 : vector<2x32xf32>
    %23 = math.exp %22 : vector<2x32xf32>
    %cst_19 = arith.constant 1.000000e+00 : f32
    %24 = vector.broadcast %cst_19 : f32 to vector<2x32xf32>
    %25 = arith.addf %24, %23 : vector<2x32xf32>
    %26 = arith.divf %24, %25 : vector<2x32xf32>
    %27 = vector.extract_strided_slice %18 {offsets = [0, 32], sizes = [2, 32], strides = [1, 1]} : vector<2x96xf32> to vector<2x32xf32>
    %28 = vector.extract_strided_slice %15 {offsets = [0, 32], sizes = [2, 32], strides = [1, 1]} : vector<2x96xf32> to vector<2x32xf32>
    %29 = arith.addf %27, %28 : vector<2x32xf32>
    %30 = arith.negf %29 : vector<2x32xf32>
    %31 = math.exp %30 : vector<2x32xf32>
    %cst_20 = arith.constant 1.000000e+00 : f32
    %32 = vector.broadcast %cst_20 : f32 to vector<2x32xf32>
    %33 = arith.addf %32, %31 : vector<2x32xf32>
    %34 = arith.divf %32, %33 : vector<2x32xf32>
    %35 = vector.extract_strided_slice %18 {offsets = [0, 64], sizes = [2, 32], strides = [1, 1]} : vector<2x96xf32> to vector<2x32xf32>
    %36 = vector.extract_strided_slice %15 {offsets = [0, 64], sizes = [2, 32], strides = [1, 1]} : vector<2x96xf32> to vector<2x32xf32>
    %37 = arith.addf %36, %12 : vector<2x32xf32>
    %38 = arith.mulf %26, %37 : vector<2x32xf32>
    %39 = arith.addf %35, %38 : vector<2x32xf32>
    %40 = math.tanh %39 : vector<2x32xf32>
    %cst_21 = arith.constant 1.000000e+00 : f32
    %41 = vector.broadcast %cst_21 : f32 to vector<2x32xf32>
    %42 = arith.subf %41, %34 : vector<2x32xf32>
    %43 = arith.mulf %42, %40 : vector<2x32xf32>
    %44 = arith.mulf %34, %14 : vector<2x32xf32>
    %45 = arith.addf %43, %44 : vector<2x32xf32>
    %46 = arith.index_cast %c0_i32 : i32 to index
    %c0_22 = arith.constant 0 : index
    %c0_23 = arith.constant 0 : index
    %47 = vector.load %arg15[%46, %c0_22, %c0_23] : memref<8x2x32xf32, #tpu.memory_space<vmem>>, vector<1x2x32xf32>
    %48 = vector.shape_cast %47 : vector<1x2x32xf32> to vector<2x32xf32>
    %49 = vector.shape_cast %45 : vector<2x32xf32> to vector<1x2x32xf32>
    tpu.vector_store %arg15[%46, %c0_22, %c0_23], %49 {strides = array<i32>} : memref<8x2x32xf32, #tpu.memory_space<vmem>>, vector<1x2x32xf32>,
    %c1_i32 = arith.constant 1 : i32
    %cst_24 = arith.constant dense<0.000000e+00> : vector<2x96xf32>
    %50 = tpu.matmul %45, %9, %cst_24 {dimension_numbers = #tpu.dot_dimension_numbers<[1], [0], [0], [1], [0, 0, 1, 1], [], []>} : vector<2x32xf32>, vector<32x96xf32>, vector<2x96xf32> -> vector<2x96xf32>
    %51 = arith.index_cast %c1_i32 : i32 to index
    %c0_25 = arith.constant 0 : index
    %c0_26 = arith.constant 0 : index
    %52 = vector.load %arg14[%51, %c0_25, %c0_26] : memref<8x2x96xf32, #tpu.memory_space<vmem>>, vector<1x2x96xf32>
    %53 = vector.shape_cast %52 : vector<1x2x96xf32> to vector<2x96xf32>
    %54 = vector.extract_strided_slice %53 {offsets = [0, 0], sizes = [2, 32], strides = [1, 1]} : vector<2x96xf32> to vector<2x32xf32>
    %55 = vector.extract_strided_slice %50 {offsets = [0, 0], sizes = [2, 32], strides = [1, 1]} : vector<2x96xf32> to vector<2x32xf32>
    %56 = arith.addf %54, %55 : vector<2x32xf32>
    %57 = arith.negf %56 : vector<2x32xf32>
    %58 = math.exp %57 : vector<2x32xf32>
    %cst_27 = arith.constant 1.000000e+00 : f32
    %59 = vector.broadcast %cst_27 : f32 to vector<2x32xf32>
    %60 = arith.addf %59, %58 : vector<2x32xf32>
    %61 = arith.divf %59, %60 : vector<2x32xf32>
    %62 = vector.extract_strided_slice %53 {offsets = [0, 32], sizes = [2, 32], strides = [1, 1]} : vector<2x96xf32> to vector<2x32xf32>
    %63 = vector.extract_strided_slice %50 {offsets = [0, 32], sizes = [2, 32], strides = [1, 1]} : vector<2x96xf32> to vector<2x32xf32>
    %64 = arith.addf %62, %63 : vector<2x32xf32>
    %65 = arith.negf %64 : vector<2x32xf32>
    %66 = math.exp %65 : vector<2x32xf32>
    %cst_28 = arith.constant 1.000000e+00 : f32
    %67 = vector.broadcast %cst_28 : f32 to vector<2x32xf32>
    %68 = arith.addf %67, %66 : vector<2x32xf32>
    %69 = arith.divf %67, %68 : vector<2x32xf32>
    %70 = vector.extract_strided_slice %53 {offsets = [0, 64], sizes = [2, 32], strides = [1, 1]} : vector<2x96xf32> to vector<2x32xf32>
    %71 = vector.extract_strided_slice %50 {offsets = [0, 64], sizes = [2, 32], strides = [1, 1]} : vector<2x96xf32> to vector<2x32xf32>
    %72 = arith.addf %71, %12 : vector<2x32xf32>
    %73 = arith.mulf %61, %72 : vector<2x32xf32>
    %74 = arith.addf %70, %73 : vector<2x32xf32>
    %75 = math.tanh %74 : vector<2x32xf32>
    %cst_29 = arith.constant 1.000000e+00 : f32
    %76 = vector.broadcast %cst_29 : f32 to vector<2x32xf32>
    %77 = arith.subf %76, %69 : vector<2x32xf32>
    %78 = arith.mulf %77, %75 : vector<2x32xf32>
    %79 = arith.mulf %69, %45 : vector<2x32xf32>
    %80 = arith.addf %78, %79 : vector<2x32xf32>
    %81 = arith.index_cast %c1_i32 : i32 to index
    %c0_30 = arith.constant 0 : index
    %c0_31 = arith.constant 0 : index
    %82 = vector.load %arg15[%81, %c0_30, %c0_31] : memref<8x2x32xf32, #tpu.memory_space<vmem>>, vector<1x2x32xf32>
    %83 = vector.shape_cast %82 : vector<1x2x32xf32> to vector<2x32xf32>
    %84 = vector.shape_cast %80 : vector<2x32xf32> to vector<1x2x32xf32>
    tpu.vector_store %arg15[%81, %c0_30, %c0_31], %84 {strides = array<i32>} : memref<8x2x32xf32, #tpu.memory_space<vmem>>, vector<1x2x32xf32>,
    %c2_i32 = arith.constant 2 : i32
    %cst_32 = arith.constant dense<0.000000e+00> : vector<2x96xf32>
    %85 = tpu.matmul %80, %9, %cst_32 {dimension_numbers = #tpu.dot_dimension_numbers<[1], [0], [0], [1], [0, 0, 1, 1], [], []>} : vector<2x32xf32>, vector<32x96xf32>, vector<2x96xf32> -> vector<2x96xf32>
    %86 = arith.index_cast %c2_i32 : i32 to index
    %c0_33 = arith.constant 0 : index
    %c0_34 = arith.constant 0 : index
    %87 = vector.load %arg14[%86, %c0_33, %c0_34] : memref<8x2x96xf32, #tpu.memory_space<vmem>>, vector<1x2x96xf32>
    %88 = vector.shape_cast %87 : vector<1x2x96xf32> to vector<2x96xf32>
    %89 = vector.extract_strided_slice %88 {offsets = [0, 0], sizes = [2, 32], strides = [1, 1]} : vector<2x96xf32> to vector<2x32xf32>
    %90 = vector.extract_strided_slice %85 {offsets = [0, 0], sizes = [2, 32], strides = [1, 1]} : vector<2x96xf32> to vector<2x32xf32>
    %91 = arith.addf %89, %90 : vector<2x32xf32>
    %92 = arith.negf %91 : vector<2x32xf32>
    %93 = math.exp %92 : vector<2x32xf32>
    %cst_35 = arith.constant 1.000000e+00 : f32
    %94 = vector.broadcast %cst_35 : f32 to vector<2x32xf32>
    %95 = arith.addf %94, %93 : vector<2x32xf32>
    %96 = arith.divf %94, %95 : vector<2x32xf32>
    %97 = vector.extract_strided_slice %88 {offsets = [0, 32], sizes = [2, 32], strides = [1, 1]} : vector<2x96xf32> to vector<2x32xf32>
    %98 = vector.extract_strided_slice %85 {offsets = [0, 32], sizes = [2, 32], strides = [1, 1]} : vector<2x96xf32> to vector<2x32xf32>
    %99 = arith.addf %97, %98 : vector<2x32xf32>
    %100 = arith.negf %99 : vector<2x32xf32>
    %101 = math.exp %100 : vector<2x32xf32>
    %cst_36 = arith.constant 1.000000e+00 : f32
    %102 = vector.broadcast %cst_36 : f32 to vector<2x32xf32>
    %103 = arith.addf %102, %101 : vector<2x32xf32>
    %104 = arith.divf %102, %103 : vector<2x32xf32>
    %105 = vector.extract_strided_slice %88 {offsets = [0, 64], sizes = [2, 32], strides = [1, 1]} : vector<2x96xf32> to vector<2x32xf32>
    %106 = vector.extract_strided_slice %85 {offsets = [0, 64], sizes = [2, 32], strides = [1, 1]} : vector<2x96xf32> to vector<2x32xf32>
    %107 = arith.addf %106, %12 : vector<2x32xf32>
    %108 = arith.mulf %96, %107 : vector<2x32xf32>
    %109 = arith.addf %105, %108 : vector<2x32xf32>
    %110 = math.tanh %109 : vector<2x32xf32>
    %cst_37 = arith.constant 1.000000e+00 : f32
    %111 = vector.broadcast %cst_37 : f32 to vector<2x32xf32>
    %112 = arith.subf %111, %104 : vector<2x32xf32>
    %113 = arith.mulf %112, %110 : vector<2x32xf32>
    %114 = arith.mulf %104, %80 : vector<2x32xf32>
    %115 = arith.addf %113, %114 : vector<2x32xf32>
    %116 = arith.index_cast %c2_i32 : i32 to index
    %c0_38 = arith.constant 0 : index
    %c0_39 = arith.constant 0 : index
    %117 = vector.load %arg15[%116, %c0_38, %c0_39] : memref<8x2x32xf32, #tpu.memory_space<vmem>>, vector<1x2x32xf32>
    %118 = vector.shape_cast %117 : vector<1x2x32xf32> to vector<2x32xf32>
    %119 = vector.shape_cast %115 : vector<2x32xf32> to vector<1x2x32xf32>
    tpu.vector_store %arg15[%116, %c0_38, %c0_39], %119 {strides = array<i32>} : memref<8x2x32xf32, #tpu.memory_space<vmem>>, vector<1x2x32xf32>,
    %c3_i32 = arith.constant 3 : i32
    %cst_40 = arith.constant dense<0.000000e+00> : vector<2x96xf32>
    %120 = tpu.matmul %115, %9, %cst_40 {dimension_numbers = #tpu.dot_dimension_numbers<[1], [0], [0], [1], [0, 0, 1, 1], [], []>} : vector<2x32xf32>, vector<32x96xf32>, vector<2x96xf32> -> vector<2x96xf32>
    %121 = arith.index_cast %c3_i32 : i32 to index
    %c0_41 = arith.constant 0 : index
    %c0_42 = arith.constant 0 : index
    %122 = vector.load %arg14[%121, %c0_41, %c0_42] : memref<8x2x96xf32, #tpu.memory_space<vmem>>, vector<1x2x96xf32>
    %123 = vector.shape_cast %122 : vector<1x2x96xf32> to vector<2x96xf32>
    %124 = vector.extract_strided_slice %123 {offsets = [0, 0], sizes = [2, 32], strides = [1, 1]} : vector<2x96xf32> to vector<2x32xf32>
    %125 = vector.extract_strided_slice %120 {offsets = [0, 0], sizes = [2, 32], strides = [1, 1]} : vector<2x96xf32> to vector<2x32xf32>
    %126 = arith.addf %124, %125 : vector<2x32xf32>
    %127 = arith.negf %126 : vector<2x32xf32>
    %128 = math.exp %127 : vector<2x32xf32>
    %cst_43 = arith.constant 1.000000e+00 : f32
    %129 = vector.broadcast %cst_43 : f32 to vector<2x32xf32>
    %130 = arith.addf %129, %128 : vector<2x32xf32>
    %131 = arith.divf %129, %130 : vector<2x32xf32>
    %132 = vector.extract_strided_slice %123 {offsets = [0, 32], sizes = [2, 32], strides = [1, 1]} : vector<2x96xf32> to vector<2x32xf32>
    %133 = vector.extract_strided_slice %120 {offsets = [0, 32], sizes = [2, 32], strides = [1, 1]} : vector<2x96xf32> to vector<2x32xf32>
    %134 = arith.addf %132, %133 : vector<2x32xf32>
    %135 = arith.negf %134 : vector<2x32xf32>
    %136 = math.exp %135 : vector<2x32xf32>
    %cst_44 = arith.constant 1.000000e+00 : f32
    %137 = vector.broadcast %cst_44 : f32 to vector<2x32xf32>
    %138 = arith.addf %137, %136 : vector<2x32xf32>
    %139 = arith.divf %137, %138 : vector<2x32xf32>
    %140 = vector.extract_strided_slice %123 {offsets = [0, 64], sizes = [2, 32], strides = [1, 1]} : vector<2x96xf32> to vector<2x32xf32>
    %141 = vector.extract_strided_slice %120 {offsets = [0, 64], sizes = [2, 32], strides = [1, 1]} : vector<2x96xf32> to vector<2x32xf32>
    %142 = arith.addf %141, %12 : vector<2x32xf32>
    %143 = arith.mulf %131, %142 : vector<2x32xf32>
    %144 = arith.addf %140, %143 : vector<2x32xf32>
    %145 = math.tanh %144 : vector<2x32xf32>
    %cst_45 = arith.constant 1.000000e+00 : f32
    %146 = vector.broadcast %cst_45 : f32 to vector<2x32xf32>
    %147 = arith.subf %146, %139 : vector<2x32xf32>
    %148 = arith.mulf %147, %145 : vector<2x32xf32>
    %149 = arith.mulf %139, %115 : vector<2x32xf32>
    %150 = arith.addf %148, %149 : vector<2x32xf32>
    %151 = arith.index_cast %c3_i32 : i32 to index
    %c0_46 = arith.constant 0 : index
    %c0_47 = arith.constant 0 : index
    %152 = vector.load %arg15[%151, %c0_46, %c0_47] : memref<8x2x32xf32, #tpu.memory_space<vmem>>, vector<1x2x32xf32>
    %153 = vector.shape_cast %152 : vector<1x2x32xf32> to vector<2x32xf32>
    %154 = vector.shape_cast %150 : vector<2x32xf32> to vector<1x2x32xf32>
    tpu.vector_store %arg15[%151, %c0_46, %c0_47], %154 {strides = array<i32>} : memref<8x2x32xf32, #tpu.memory_space<vmem>>, vector<1x2x32xf32>,
    %c4_i32 = arith.constant 4 : i32
    %cst_48 = arith.constant dense<0.000000e+00> : vector<2x96xf32>
    %155 = tpu.matmul %150, %9, %cst_48 {dimension_numbers = #tpu.dot_dimension_numbers<[1], [0], [0], [1], [0, 0, 1, 1], [], []>} : vector<2x32xf32>, vector<32x96xf32>, vector<2x96xf32> -> vector<2x96xf32>
    %156 = arith.index_cast %c4_i32 : i32 to index
    %c0_49 = arith.constant 0 : index
    %c0_50 = arith.constant 0 : index
    %157 = vector.load %arg14[%156, %c0_49, %c0_50] : memref<8x2x96xf32, #tpu.memory_space<vmem>>, vector<1x2x96xf32>
    %158 = vector.shape_cast %157 : vector<1x2x96xf32> to vector<2x96xf32>
    %159 = vector.extract_strided_slice %158 {offsets = [0, 0], sizes = [2, 32], strides = [1, 1]} : vector<2x96xf32> to vector<2x32xf32>
    %160 = vector.extract_strided_slice %155 {offsets = [0, 0], sizes = [2, 32], strides = [1, 1]} : vector<2x96xf32> to vector<2x32xf32>
    %161 = arith.addf %159, %160 : vector<2x32xf32>
    %162 = arith.negf %161 : vector<2x32xf32>
    %163 = math.exp %162 : vector<2x32xf32>
    %cst_51 = arith.constant 1.000000e+00 : f32
    %164 = vector.broadcast %cst_51 : f32 to vector<2x32xf32>
    %165 = arith.addf %164, %163 : vector<2x32xf32>
    %166 = arith.divf %164, %165 : vector<2x32xf32>
    %167 = vector.extract_strided_slice %158 {offsets = [0, 32], sizes = [2, 32], strides = [1, 1]} : vector<2x96xf32> to vector<2x32xf32>
    %168 = vector.extract_strided_slice %155 {offsets = [0, 32], sizes = [2, 32], strides = [1, 1]} : vector<2x96xf32> to vector<2x32xf32>
    %169 = arith.addf %167, %168 : vector<2x32xf32>
    %170 = arith.negf %169 : vector<2x32xf32>
    %171 = math.exp %170 : vector<2x32xf32>
    %cst_52 = arith.constant 1.000000e+00 : f32
    %172 = vector.broadcast %cst_52 : f32 to vector<2x32xf32>
    %173 = arith.addf %172, %171 : vector<2x32xf32>
    %174 = arith.divf %172, %173 : vector<2x32xf32>
    %175 = vector.extract_strided_slice %158 {offsets = [0, 64], sizes = [2, 32], strides = [1, 1]} : vector<2x96xf32> to vector<2x32xf32>
    %176 = vector.extract_strided_slice %155 {offsets = [0, 64], sizes = [2, 32], strides = [1, 1]} : vector<2x96xf32> to vector<2x32xf32>
    %177 = arith.addf %176, %12 : vector<2x32xf32>
    %178 = arith.mulf %166, %177 : vector<2x32xf32>
    %179 = arith.addf %175, %178 : vector<2x32xf32>
    %180 = math.tanh %179 : vector<2x32xf32>
    %cst_53 = arith.constant 1.000000e+00 : f32
    %181 = vector.broadcast %cst_53 : f32 to vector<2x32xf32>
    %182 = arith.subf %181, %174 : vector<2x32xf32>
    %183 = arith.mulf %182, %180 : vector<2x32xf32>
    %184 = arith.mulf %174, %150 : vector<2x32xf32>
    %185 = arith.addf %183, %184 : vector<2x32xf32>
    %186 = arith.index_cast %c4_i32 : i32 to index
    %c0_54 = arith.constant 0 : index
    %c0_55 = arith.constant 0 : index
    %187 = vector.load %arg15[%186, %c0_54, %c0_55] : memref<8x2x32xf32, #tpu.memory_space<vmem>>, vector<1x2x32xf32>
    %188 = vector.shape_cast %187 : vector<1x2x32xf32> to vector<2x32xf32>
    %189 = vector.shape_cast %185 : vector<2x32xf32> to vector<1x2x32xf32>
    tpu.vector_store %arg15[%186, %c0_54, %c0_55], %189 {strides = array<i32>} : memref<8x2x32xf32, #tpu.memory_space<vmem>>, vector<1x2x32xf32>,
    %c5_i32 = arith.constant 5 : i32
    %cst_56 = arith.constant dense<0.000000e+00> : vector<2x96xf32>
    %190 = tpu.matmul %185, %9, %cst_56 {dimension_numbers = #tpu.dot_dimension_numbers<[1], [0], [0], [1], [0, 0, 1, 1], [], []>} : vector<2x32xf32>, vector<32x96xf32>, vector<2x96xf32> -> vector<2x96xf32>
    %191 = arith.index_cast %c5_i32 : i32 to index
    %c0_57 = arith.constant 0 : index
    %c0_58 = arith.constant 0 : index
    %192 = vector.load %arg14[%191, %c0_57, %c0_58] : memref<8x2x96xf32, #tpu.memory_space<vmem>>, vector<1x2x96xf32>
    %193 = vector.shape_cast %192 : vector<1x2x96xf32> to vector<2x96xf32>
    %194 = vector.extract_strided_slice %193 {offsets = [0, 0], sizes = [2, 32], strides = [1, 1]} : vector<2x96xf32> to vector<2x32xf32>
    %195 = vector.extract_strided_slice %190 {offsets = [0, 0], sizes = [2, 32], strides = [1, 1]} : vector<2x96xf32> to vector<2x32xf32>
    %196 = arith.addf %194, %195 : vector<2x32xf32>
    %197 = arith.negf %196 : vector<2x32xf32>
    %198 = math.exp %197 : vector<2x32xf32>
    %cst_59 = arith.constant 1.000000e+00 : f32
    %199 = vector.broadcast %cst_59 : f32 to vector<2x32xf32>
    %200 = arith.addf %199, %198 : vector<2x32xf32>
    %201 = arith.divf %199, %200 : vector<2x32xf32>
    %202 = vector.extract_strided_slice %193 {offsets = [0, 32], sizes = [2, 32], strides = [1, 1]} : vector<2x96xf32> to vector<2x32xf32>
    %203 = vector.extract_strided_slice %190 {offsets = [0, 32], sizes = [2, 32], strides = [1, 1]} : vector<2x96xf32> to vector<2x32xf32>
    %204 = arith.addf %202, %203 : vector<2x32xf32>
    %205 = arith.negf %204 : vector<2x32xf32>
    %206 = math.exp %205 : vector<2x32xf32>
    %cst_60 = arith.constant 1.000000e+00 : f32
    %207 = vector.broadcast %cst_60 : f32 to vector<2x32xf32>
    %208 = arith.addf %207, %206 : vector<2x32xf32>
    %209 = arith.divf %207, %208 : vector<2x32xf32>
    %210 = vector.extract_strided_slice %193 {offsets = [0, 64], sizes = [2, 32], strides = [1, 1]} : vector<2x96xf32> to vector<2x32xf32>
    %211 = vector.extract_strided_slice %190 {offsets = [0, 64], sizes = [2, 32], strides = [1, 1]} : vector<2x96xf32> to vector<2x32xf32>
    %212 = arith.addf %211, %12 : vector<2x32xf32>
    %213 = arith.mulf %201, %212 : vector<2x32xf32>
    %214 = arith.addf %210, %213 : vector<2x32xf32>
    %215 = math.tanh %214 : vector<2x32xf32>
    %cst_61 = arith.constant 1.000000e+00 : f32
    %216 = vector.broadcast %cst_61 : f32 to vector<2x32xf32>
    %217 = arith.subf %216, %209 : vector<2x32xf32>
    %218 = arith.mulf %217, %215 : vector<2x32xf32>
    %219 = arith.mulf %209, %185 : vector<2x32xf32>
    %220 = arith.addf %218, %219 : vector<2x32xf32>
    %221 = arith.index_cast %c5_i32 : i32 to index
    %c0_62 = arith.constant 0 : index
    %c0_63 = arith.constant 0 : index
    %222 = vector.load %arg15[%221, %c0_62, %c0_63] : memref<8x2x32xf32, #tpu.memory_space<vmem>>, vector<1x2x32xf32>
    %223 = vector.shape_cast %222 : vector<1x2x32xf32> to vector<2x32xf32>
    %224 = vector.shape_cast %220 : vector<2x32xf32> to vector<1x2x32xf32>
    tpu.vector_store %arg15[%221, %c0_62, %c0_63], %224 {strides = array<i32>} : memref<8x2x32xf32, #tpu.memory_space<vmem>>, vector<1x2x32xf32>,
    %c6_i32 = arith.constant 6 : i32
    %cst_64 = arith.constant dense<0.000000e+00> : vector<2x96xf32>
    %225 = tpu.matmul %220, %9, %cst_64 {dimension_numbers = #tpu.dot_dimension_numbers<[1], [0], [0], [1], [0, 0, 1, 1], [], []>} : vector<2x32xf32>, vector<32x96xf32>, vector<2x96xf32> -> vector<2x96xf32>
    %226 = arith.index_cast %c6_i32 : i32 to index
    %c0_65 = arith.constant 0 : index
    %c0_66 = arith.constant 0 : index
    %227 = vector.load %arg14[%226, %c0_65, %c0_66] : memref<8x2x96xf32, #tpu.memory_space<vmem>>, vector<1x2x96xf32>
    %228 = vector.shape_cast %227 : vector<1x2x96xf32> to vector<2x96xf32>
    %229 = vector.extract_strided_slice %228 {offsets = [0, 0], sizes = [2, 32], strides = [1, 1]} : vector<2x96xf32> to vector<2x32xf32>
    %230 = vector.extract_strided_slice %225 {offsets = [0, 0], sizes = [2, 32], strides = [1, 1]} : vector<2x96xf32> to vector<2x32xf32>
    %231 = arith.addf %229, %230 : vector<2x32xf32>
    %232 = arith.negf %231 : vector<2x32xf32>
    %233 = math.exp %232 : vector<2x32xf32>
    %cst_67 = arith.constant 1.000000e+00 : f32
    %234 = vector.broadcast %cst_67 : f32 to vector<2x32xf32>
    %235 = arith.addf %234, %233 : vector<2x32xf32>
    %236 = arith.divf %234, %235 : vector<2x32xf32>
    %237 = vector.extract_strided_slice %228 {offsets = [0, 32], sizes = [2, 32], strides = [1, 1]} : vector<2x96xf32> to vector<2x32xf32>
    %238 = vector.extract_strided_slice %225 {offsets = [0, 32], sizes = [2, 32], strides = [1, 1]} : vector<2x96xf32> to vector<2x32xf32>
    %239 = arith.addf %237, %238 : vector<2x32xf32>
    %240 = arith.negf %239 : vector<2x32xf32>
    %241 = math.exp %240 : vector<2x32xf32>
    %cst_68 = arith.constant 1.000000e+00 : f32
    %242 = vector.broadcast %cst_68 : f32 to vector<2x32xf32>
    %243 = arith.addf %242, %241 : vector<2x32xf32>
    %244 = arith.divf %242, %243 : vector<2x32xf32>
    %245 = vector.extract_strided_slice %228 {offsets = [0, 64], sizes = [2, 32], strides = [1, 1]} : vector<2x96xf32> to vector<2x32xf32>
    %246 = vector.extract_strided_slice %225 {offsets = [0, 64], sizes = [2, 32], strides = [1, 1]} : vector<2x96xf32> to vector<2x32xf32>
    %247 = arith.addf %246, %12 : vector<2x32xf32>
    %248 = arith.mulf %236, %247 : vector<2x32xf32>
    %249 = arith.addf %245, %248 : vector<2x32xf32>
    %250 = math.tanh %249 : vector<2x32xf32>
    %cst_69 = arith.constant 1.000000e+00 : f32
    %251 = vector.broadcast %cst_69 : f32 to vector<2x32xf32>
    %252 = arith.subf %251, %244 : vector<2x32xf32>
    %253 = arith.mulf %252, %250 : vector<2x32xf32>
    %254 = arith.mulf %244, %220 : vector<2x32xf32>
    %255 = arith.addf %253, %254 : vector<2x32xf32>
    %256 = arith.index_cast %c6_i32 : i32 to index
    %c0_70 = arith.constant 0 : index
    %c0_71 = arith.constant 0 : index
    %257 = vector.load %arg15[%256, %c0_70, %c0_71] : memref<8x2x32xf32, #tpu.memory_space<vmem>>, vector<1x2x32xf32>
    %258 = vector.shape_cast %257 : vector<1x2x32xf32> to vector<2x32xf32>
    %259 = vector.shape_cast %255 : vector<2x32xf32> to vector<1x2x32xf32>
    tpu.vector_store %arg15[%256, %c0_70, %c0_71], %259 {strides = array<i32>} : memref<8x2x32xf32, #tpu.memory_space<vmem>>, vector<1x2x32xf32>,
    %c7_i32 = arith.constant 7 : i32
    %cst_72 = arith.constant dense<0.000000e+00> : vector<2x96xf32>
    %260 = tpu.matmul %255, %9, %cst_72 {dimension_numbers = #tpu.dot_dimension_numbers<[1], [0], [0], [1], [0, 0, 1, 1], [], []>} : vector<2x32xf32>, vector<32x96xf32>, vector<2x96xf32> -> vector<2x96xf32>
    %261 = arith.index_cast %c7_i32 : i32 to index
    %c0_73 = arith.constant 0 : index
    %c0_74 = arith.constant 0 : index
    %262 = vector.load %arg14[%261, %c0_73, %c0_74] : memref<8x2x96xf32, #tpu.memory_space<vmem>>, vector<1x2x96xf32>
    %263 = vector.shape_cast %262 : vector<1x2x96xf32> to vector<2x96xf32>
    %264 = vector.extract_strided_slice %263 {offsets = [0, 0], sizes = [2, 32], strides = [1, 1]} : vector<2x96xf32> to vector<2x32xf32>
    %265 = vector.extract_strided_slice %260 {offsets = [0, 0], sizes = [2, 32], strides = [1, 1]} : vector<2x96xf32> to vector<2x32xf32>
    %266 = arith.addf %264, %265 : vector<2x32xf32>
    %267 = arith.negf %266 : vector<2x32xf32>
    %268 = math.exp %267 : vector<2x32xf32>
    %cst_75 = arith.constant 1.000000e+00 : f32
    %269 = vector.broadcast %cst_75 : f32 to vector<2x32xf32>
    %270 = arith.addf %269, %268 : vector<2x32xf32>
    %271 = arith.divf %269, %270 : vector<2x32xf32>
    %272 = vector.extract_strided_slice %263 {offsets = [0, 32], sizes = [2, 32], strides = [1, 1]} : vector<2x96xf32> to vector<2x32xf32>
    %273 = vector.extract_strided_slice %260 {offsets = [0, 32], sizes = [2, 32], strides = [1, 1]} : vector<2x96xf32> to vector<2x32xf32>
    %274 = arith.addf %272, %273 : vector<2x32xf32>
    %275 = arith.negf %274 : vector<2x32xf32>
    %276 = math.exp %275 : vector<2x32xf32>
    %cst_76 = arith.constant 1.000000e+00 : f32
    %277 = vector.broadcast %cst_76 : f32 to vector<2x32xf32>
    %278 = arith.addf %277, %276 : vector<2x32xf32>
    %279 = arith.divf %277, %278 : vector<2x32xf32>
    %280 = vector.extract_strided_slice %263 {offsets = [0, 64], sizes = [2, 32], strides = [1, 1]} : vector<2x96xf32> to vector<2x32xf32>
    %281 = vector.extract_strided_slice %260 {offsets = [0, 64], sizes = [2, 32], strides = [1, 1]} : vector<2x96xf32> to vector<2x32xf32>
    %282 = arith.addf %281, %12 : vector<2x32xf32>
    %283 = arith.mulf %271, %282 : vector<2x32xf32>
    %284 = arith.addf %280, %283 : vector<2x32xf32>
    %285 = math.tanh %284 : vector<2x32xf32>
    %cst_77 = arith.constant 1.000000e+00 : f32
    %286 = vector.broadcast %cst_77 : f32 to vector<2x32xf32>
    %287 = arith.subf %286, %279 : vector<2x32xf32>
    %288 = arith.mulf %287, %285 : vector<2x32xf32>
    %289 = arith.mulf %279, %255 : vector<2x32xf32>
    %290 = arith.addf %288, %289 : vector<2x32xf32>
    %291 = arith.index_cast %c7_i32 : i32 to index
    %c0_78 = arith.constant 0 : index
    %c0_79 = arith.constant 0 : index
    %292 = vector.load %arg15[%291, %c0_78, %c0_79] : memref<8x2x32xf32, #tpu.memory_space<vmem>>, vector<1x2x32xf32>
    %293 = vector.shape_cast %292 : vector<1x2x32xf32> to vector<2x32xf32>
    %294 = vector.shape_cast %290 : vector<2x32xf32> to vector<1x2x32xf32>
    tpu.vector_store %arg15[%291, %c0_78, %c0_79], %294 {strides = array<i32>} : memref<8x2x32xf32, #tpu.memory_space<vmem>>, vector<1x2x32xf32>,
    %c8_i32 = arith.constant 8 : i32
    %c0_80 = arith.constant 0 : index
    %c0_81 = arith.constant 0 : index
    %c0_82 = arith.constant 0 : index
    %295 = vector.load %arg13[%c0_80, %c0_81, %c0_82] : memref<2x2x32xf32, #tpu.memory_space<vmem>>, vector<1x2x32xf32>
    %296 = vector.shape_cast %295 : vector<1x2x32xf32> to vector<2x32xf32>
    %297 = vector.shape_cast %290 : vector<2x32xf32> to vector<1x2x32xf32>
    tpu.vector_store %arg13[%c0_80, %c0_81, %c0_82], %297 {strides = array<i32>} : memref<2x2x32xf32, #tpu.memory_space<vmem>>, vector<1x2x32xf32>,
    %c0_83 = arith.constant 0 : index
    %c0_84 = arith.constant 0 : index
    %c0_85 = arith.constant 0 : index
    %298 = vector.load %arg15[%c0_83, %c0_84, %c0_85] : memref<8x2x32xf32, #tpu.memory_space<vmem>>, vector<8x2x32xf32>
    %299 = vector.shape_cast %298 : vector<8x2x32xf32> to vector<16x32xf32>
    %c0_86 = arith.constant 0 : index
    %c0_87 = arith.constant 0 : index
    %300 = vector.load %arg6[%c0_86, %c0_87] : memref<32x96xf32, #tpu.memory_space<vmem>>, vector<32x96xf32>
    %cst_88 = arith.constant dense<0.000000e+00> : vector<16x96xf32>
    %301 = tpu.matmul %299, %300, %cst_88 {dimension_numbers = #tpu.dot_dimension_numbers<[1], [0], [0], [1], [0, 0, 1, 1], [], []>} : vector<16x32xf32>, vector<32x96xf32>, vector<16x96xf32> -> vector<16x96xf32>
    %c0_89 = arith.constant 0 : index
    %c0_90 = arith.constant 0 : index
    %302 = vector.load %arg8[%c0_89, %c0_90] : memref<1x96xf32, #tpu.memory_space<vmem>>, vector<1x96xf32>
    %303 = vector.broadcast %302 : vector<1x96xf32> to vector<16x96xf32>
    %304 = arith.addf %301, %303 : vector<16x96xf32>
    %305 = vector.shape_cast %304 : vector<16x96xf32> to vector<8x2x96xf32>
    %c0_91 = arith.constant 0 : index
    %c0_92 = arith.constant 0 : index
    %c0_93 = arith.constant 0 : index
    %306 = vector.load %arg14[%c0_91, %c0_92, %c0_93] : memref<8x2x96xf32, #tpu.memory_space<vmem>>, vector<8x2x96xf32>
    tpu.vector_store %arg14[%c0_91, %c0_92, %c0_93], %305 {strides = array<i32>} : memref<8x2x96xf32, #tpu.memory_space<vmem>>, vector<8x2x96xf32>,
    %c0_94 = arith.constant 0 : index
    %c0_95 = arith.constant 0 : index
    %307 = vector.load %arg7[%c0_94, %c0_95] : memref<32x96xf32, #tpu.memory_space<vmem>>, vector<32x96xf32>
    %c0_96 = arith.constant 0 : index
    %c0_97 = arith.constant 0 : index
    %308 = vector.load %arg9[%c0_96, %c0_97] : memref<1x32xf32, #tpu.memory_space<vmem>>, vector<1x32xf32>
    %309 = vector.shape_cast %308 : vector<1x32xf32> to vector<1x32xf32>
    %310 = vector.broadcast %309 : vector<1x32xf32> to vector<2x32xf32>
    %c1 = arith.constant 1 : index
    %c0_98 = arith.constant 0 : index
    %c0_99 = arith.constant 0 : index
    %311 = vector.load %arg1[%c1, %c0_98, %c0_99] : memref<2x2x32xf32, #tpu.memory_space<vmem>>, vector<1x2x32xf32>
    %312 = vector.shape_cast %311 : vector<1x2x32xf32> to vector<2x32xf32>
    %c0_i32_100 = arith.constant 0 : i32
    %cst_101 = arith.constant dense<0.000000e+00> : vector<2x96xf32>
    %313 = tpu.matmul %312, %307, %cst_101 {dimension_numbers = #tpu.dot_dimension_numbers<[1], [0], [0], [1], [0, 0, 1, 1], [], []>} : vector<2x32xf32>, vector<32x96xf32>, vector<2x96xf32> -> vector<2x96xf32>
    %314 = arith.index_cast %c0_i32_100 : i32 to index
    %c0_102 = arith.constant 0 : index
    %c0_103 = arith.constant 0 : index
    %315 = vector.load %arg14[%314, %c0_102, %c0_103] : memref<8x2x96xf32, #tpu.memory_space<vmem>>, vector<1x2x96xf32>
    %316 = vector.shape_cast %315 : vector<1x2x96xf32> to vector<2x96xf32>
    %317 = vector.extract_strided_slice %316 {offsets = [0, 0], sizes = [2, 32], strides = [1, 1]} : vector<2x96xf32> to vector<2x32xf32>
    %318 = vector.extract_strided_slice %313 {offsets = [0, 0], sizes = [2, 32], strides = [1, 1]} : vector<2x96xf32> to vector<2x32xf32>
    %319 = arith.addf %317, %318 : vector<2x32xf32>
    %320 = arith.negf %319 : vector<2x32xf32>
    %321 = math.exp %320 : vector<2x32xf32>
    %cst_104 = arith.constant 1.000000e+00 : f32
    %322 = vector.broadcast %cst_104 : f32 to vector<2x32xf32>
    %323 = arith.addf %322, %321 : vector<2x32xf32>
    %324 = arith.divf %322, %323 : vector<2x32xf32>
    %325 = vector.extract_strided_slice %316 {offsets = [0, 32], sizes = [2, 32], strides = [1, 1]} : vector<2x96xf32> to vector<2x32xf32>
    %326 = vector.extract_strided_slice %313 {offsets = [0, 32], sizes = [2, 32], strides = [1, 1]} : vector<2x96xf32> to vector<2x32xf32>
    %327 = arith.addf %325, %326 : vector<2x32xf32>
    %328 = arith.negf %327 : vector<2x32xf32>
    %329 = math.exp %328 : vector<2x32xf32>
    %cst_105 = arith.constant 1.000000e+00 : f32
    %330 = vector.broadcast %cst_105 : f32 to vector<2x32xf32>
    %331 = arith.addf %330, %329 : vector<2x32xf32>
    %332 = arith.divf %330, %331 : vector<2x32xf32>
    %333 = vector.extract_strided_slice %316 {offsets = [0, 64], sizes = [2, 32], strides = [1, 1]} : vector<2x96xf32> to vector<2x32xf32>
    %334 = vector.extract_strided_slice %313 {offsets = [0, 64], sizes = [2, 32], strides = [1, 1]} : vector<2x96xf32> to vector<2x32xf32>
    %335 = arith.addf %334, %310 : vector<2x32xf32>
    %336 = arith.mulf %324, %335 : vector<2x32xf32>
    %337 = arith.addf %333, %336 : vector<2x32xf32>
    %338 = math.tanh %337 : vector<2x32xf32>
    %cst_106 = arith.constant 1.000000e+00 : f32
    %339 = vector.broadcast %cst_106 : f32 to vector<2x32xf32>
    %340 = arith.subf %339, %332 : vector<2x32xf32>
    %341 = arith.mulf %340, %338 : vector<2x32xf32>
    %342 = arith.mulf %332, %312 : vector<2x32xf32>
    %343 = arith.addf %341, %342 : vector<2x32xf32>
    %344 = arith.index_cast %c0_i32_100 : i32 to index
    %c0_107 = arith.constant 0 : index
    %c0_108 = arith.constant 0 : index
    %345 = vector.load %arg16[%344, %c0_107, %c0_108] : memref<8x2x32xf32, #tpu.memory_space<vmem>>, vector<1x2x32xf32>
    %346 = vector.shape_cast %345 : vector<1x2x32xf32> to vector<2x32xf32>
    %347 = vector.shape_cast %343 : vector<2x32xf32> to vector<1x2x32xf32>
    tpu.vector_store %arg16[%344, %c0_107, %c0_108], %347 {strides = array<i32>} : memref<8x2x32xf32, #tpu.memory_space<vmem>>, vector<1x2x32xf32>,
    %c1_i32_109 = arith.constant 1 : i32
    %cst_110 = arith.constant dense<0.000000e+00> : vector<2x96xf32>
    %348 = tpu.matmul %343, %307, %cst_110 {dimension_numbers = #tpu.dot_dimension_numbers<[1], [0], [0], [1], [0, 0, 1, 1], [], []>} : vector<2x32xf32>, vector<32x96xf32>, vector<2x96xf32> -> vector<2x96xf32>
    %349 = arith.index_cast %c1_i32_109 : i32 to index
    %c0_111 = arith.constant 0 : index
    %c0_112 = arith.constant 0 : index
    %350 = vector.load %arg14[%349, %c0_111, %c0_112] : memref<8x2x96xf32, #tpu.memory_space<vmem>>, vector<1x2x96xf32>
    %351 = vector.shape_cast %350 : vector<1x2x96xf32> to vector<2x96xf32>
    %352 = vector.extract_strided_slice %351 {offsets = [0, 0], sizes = [2, 32], strides = [1, 1]} : vector<2x96xf32> to vector<2x32xf32>
    %353 = vector.extract_strided_slice %348 {offsets = [0, 0], sizes = [2, 32], strides = [1, 1]} : vector<2x96xf32> to vector<2x32xf32>
    %354 = arith.addf %352, %353 : vector<2x32xf32>
    %355 = arith.negf %354 : vector<2x32xf32>
    %356 = math.exp %355 : vector<2x32xf32>
    %cst_113 = arith.constant 1.000000e+00 : f32
    %357 = vector.broadcast %cst_113 : f32 to vector<2x32xf32>
    %358 = arith.addf %357, %356 : vector<2x32xf32>
    %359 = arith.divf %357, %358 : vector<2x32xf32>
    %360 = vector.extract_strided_slice %351 {offsets = [0, 32], sizes = [2, 32], strides = [1, 1]} : vector<2x96xf32> to vector<2x32xf32>
    %361 = vector.extract_strided_slice %348 {offsets = [0, 32], sizes = [2, 32], strides = [1, 1]} : vector<2x96xf32> to vector<2x32xf32>
    %362 = arith.addf %360, %361 : vector<2x32xf32>
    %363 = arith.negf %362 : vector<2x32xf32>
    %364 = math.exp %363 : vector<2x32xf32>
    %cst_114 = arith.constant 1.000000e+00 : f32
    %365 = vector.broadcast %cst_114 : f32 to vector<2x32xf32>
    %366 = arith.addf %365, %364 : vector<2x32xf32>
    %367 = arith.divf %365, %366 : vector<2x32xf32>
    %368 = vector.extract_strided_slice %351 {offsets = [0, 64], sizes = [2, 32], strides = [1, 1]} : vector<2x96xf32> to vector<2x32xf32>
    %369 = vector.extract_strided_slice %348 {offsets = [0, 64], sizes = [2, 32], strides = [1, 1]} : vector<2x96xf32> to vector<2x32xf32>
    %370 = arith.addf %369, %310 : vector<2x32xf32>
    %371 = arith.mulf %359, %370 : vector<2x32xf32>
    %372 = arith.addf %368, %371 : vector<2x32xf32>
    %373 = math.tanh %372 : vector<2x32xf32>
    %cst_115 = arith.constant 1.000000e+00 : f32
    %374 = vector.broadcast %cst_115 : f32 to vector<2x32xf32>
    %375 = arith.subf %374, %367 : vector<2x32xf32>
    %376 = arith.mulf %375, %373 : vector<2x32xf32>
    %377 = arith.mulf %367, %343 : vector<2x32xf32>
    %378 = arith.addf %376, %377 : vector<2x32xf32>
    %379 = arith.index_cast %c1_i32_109 : i32 to index
    %c0_116 = arith.constant 0 : index
    %c0_117 = arith.constant 0 : index
    %380 = vector.load %arg16[%379, %c0_116, %c0_117] : memref<8x2x32xf32, #tpu.memory_space<vmem>>, vector<1x2x32xf32>
    %381 = vector.shape_cast %380 : vector<1x2x32xf32> to vector<2x32xf32>
    %382 = vector.shape_cast %378 : vector<2x32xf32> to vector<1x2x32xf32>
    tpu.vector_store %arg16[%379, %c0_116, %c0_117], %382 {strides = array<i32>} : memref<8x2x32xf32, #tpu.memory_space<vmem>>, vector<1x2x32xf32>,
    %c2_i32_118 = arith.constant 2 : i32
    %cst_119 = arith.constant dense<0.000000e+00> : vector<2x96xf32>
    %383 = tpu.matmul %378, %307, %cst_119 {dimension_numbers = #tpu.dot_dimension_numbers<[1], [0], [0], [1], [0, 0, 1, 1], [], []>} : vector<2x32xf32>, vector<32x96xf32>, vector<2x96xf32> -> vector<2x96xf32>
    %384 = arith.index_cast %c2_i32_118 : i32 to index
    %c0_120 = arith.constant 0 : index
    %c0_121 = arith.constant 0 : index
    %385 = vector.load %arg14[%384, %c0_120, %c0_121] : memref<8x2x96xf32, #tpu.memory_space<vmem>>, vector<1x2x96xf32>
    %386 = vector.shape_cast %385 : vector<1x2x96xf32> to vector<2x96xf32>
    %387 = vector.extract_strided_slice %386 {offsets = [0, 0], sizes = [2, 32], strides = [1, 1]} : vector<2x96xf32> to vector<2x32xf32>
    %388 = vector.extract_strided_slice %383 {offsets = [0, 0], sizes = [2, 32], strides = [1, 1]} : vector<2x96xf32> to vector<2x32xf32>
    %389 = arith.addf %387, %388 : vector<2x32xf32>
    %390 = arith.negf %389 : vector<2x32xf32>
    %391 = math.exp %390 : vector<2x32xf32>
    %cst_122 = arith.constant 1.000000e+00 : f32
    %392 = vector.broadcast %cst_122 : f32 to vector<2x32xf32>
    %393 = arith.addf %392, %391 : vector<2x32xf32>
    %394 = arith.divf %392, %393 : vector<2x32xf32>
    %395 = vector.extract_strided_slice %386 {offsets = [0, 32], sizes = [2, 32], strides = [1, 1]} : vector<2x96xf32> to vector<2x32xf32>
    %396 = vector.extract_strided_slice %383 {offsets = [0, 32], sizes = [2, 32], strides = [1, 1]} : vector<2x96xf32> to vector<2x32xf32>
    %397 = arith.addf %395, %396 : vector<2x32xf32>
    %398 = arith.negf %397 : vector<2x32xf32>
    %399 = math.exp %398 : vector<2x32xf32>
    %cst_123 = arith.constant 1.000000e+00 : f32
    %400 = vector.broadcast %cst_123 : f32 to vector<2x32xf32>
    %401 = arith.addf %400, %399 : vector<2x32xf32>
    %402 = arith.divf %400, %401 : vector<2x32xf32>
    %403 = vector.extract_strided_slice %386 {offsets = [0, 64], sizes = [2, 32], strides = [1, 1]} : vector<2x96xf32> to vector<2x32xf32>
    %404 = vector.extract_strided_slice %383 {offsets = [0, 64], sizes = [2, 32], strides = [1, 1]} : vector<2x96xf32> to vector<2x32xf32>
    %405 = arith.addf %404, %310 : vector<2x32xf32>
    %406 = arith.mulf %394, %405 : vector<2x32xf32>
    %407 = arith.addf %403, %406 : vector<2x32xf32>
    %408 = math.tanh %407 : vector<2x32xf32>
    %cst_124 = arith.constant 1.000000e+00 : f32
    %409 = vector.broadcast %cst_124 : f32 to vector<2x32xf32>
    %410 = arith.subf %409, %402 : vector<2x32xf32>
    %411 = arith.mulf %410, %408 : vector<2x32xf32>
    %412 = arith.mulf %402, %378 : vector<2x32xf32>
    %413 = arith.addf %411, %412 : vector<2x32xf32>
    %414 = arith.index_cast %c2_i32_118 : i32 to index
    %c0_125 = arith.constant 0 : index
    %c0_126 = arith.constant 0 : index
    %415 = vector.load %arg16[%414, %c0_125, %c0_126] : memref<8x2x32xf32, #tpu.memory_space<vmem>>, vector<1x2x32xf32>
    %416 = vector.shape_cast %415 : vector<1x2x32xf32> to vector<2x32xf32>
    %417 = vector.shape_cast %413 : vector<2x32xf32> to vector<1x2x32xf32>
    tpu.vector_store %arg16[%414, %c0_125, %c0_126], %417 {strides = array<i32>} : memref<8x2x32xf32, #tpu.memory_space<vmem>>, vector<1x2x32xf32>,
    %c3_i32_127 = arith.constant 3 : i32
    %cst_128 = arith.constant dense<0.000000e+00> : vector<2x96xf32>
    %418 = tpu.matmul %413, %307, %cst_128 {dimension_numbers = #tpu.dot_dimension_numbers<[1], [0], [0], [1], [0, 0, 1, 1], [], []>} : vector<2x32xf32>, vector<32x96xf32>, vector<2x96xf32> -> vector<2x96xf32>
    %419 = arith.index_cast %c3_i32_127 : i32 to index
    %c0_129 = arith.constant 0 : index
    %c0_130 = arith.constant 0 : index
    %420 = vector.load %arg14[%419, %c0_129, %c0_130] : memref<8x2x96xf32, #tpu.memory_space<vmem>>, vector<1x2x96xf32>
    %421 = vector.shape_cast %420 : vector<1x2x96xf32> to vector<2x96xf32>
    %422 = vector.extract_strided_slice %421 {offsets = [0, 0], sizes = [2, 32], strides = [1, 1]} : vector<2x96xf32> to vector<2x32xf32>
    %423 = vector.extract_strided_slice %418 {offsets = [0, 0], sizes = [2, 32], strides = [1, 1]} : vector<2x96xf32> to vector<2x32xf32>
    %424 = arith.addf %422, %423 : vector<2x32xf32>
    %425 = arith.negf %424 : vector<2x32xf32>
    %426 = math.exp %425 : vector<2x32xf32>
    %cst_131 = arith.constant 1.000000e+00 : f32
    %427 = vector.broadcast %cst_131 : f32 to vector<2x32xf32>
    %428 = arith.addf %427, %426 : vector<2x32xf32>
    %429 = arith.divf %427, %428 : vector<2x32xf32>
    %430 = vector.extract_strided_slice %421 {offsets = [0, 32], sizes = [2, 32], strides = [1, 1]} : vector<2x96xf32> to vector<2x32xf32>
    %431 = vector.extract_strided_slice %418 {offsets = [0, 32], sizes = [2, 32], strides = [1, 1]} : vector<2x96xf32> to vector<2x32xf32>
    %432 = arith.addf %430, %431 : vector<2x32xf32>
    %433 = arith.negf %432 : vector<2x32xf32>
    %434 = math.exp %433 : vector<2x32xf32>
    %cst_132 = arith.constant 1.000000e+00 : f32
    %435 = vector.broadcast %cst_132 : f32 to vector<2x32xf32>
    %436 = arith.addf %435, %434 : vector<2x32xf32>
    %437 = arith.divf %435, %436 : vector<2x32xf32>
    %438 = vector.extract_strided_slice %421 {offsets = [0, 64], sizes = [2, 32], strides = [1, 1]} : vector<2x96xf32> to vector<2x32xf32>
    %439 = vector.extract_strided_slice %418 {offsets = [0, 64], sizes = [2, 32], strides = [1, 1]} : vector<2x96xf32> to vector<2x32xf32>
    %440 = arith.addf %439, %310 : vector<2x32xf32>
    %441 = arith.mulf %429, %440 : vector<2x32xf32>
    %442 = arith.addf %438, %441 : vector<2x32xf32>
    %443 = math.tanh %442 : vector<2x32xf32>
    %cst_133 = arith.constant 1.000000e+00 : f32
    %444 = vector.broadcast %cst_133 : f32 to vector<2x32xf32>
    %445 = arith.subf %444, %437 : vector<2x32xf32>
    %446 = arith.mulf %445, %443 : vector<2x32xf32>
    %447 = arith.mulf %437, %413 : vector<2x32xf32>
    %448 = arith.addf %446, %447 : vector<2x32xf32>
    %449 = arith.index_cast %c3_i32_127 : i32 to index
    %c0_134 = arith.constant 0 : index
    %c0_135 = arith.constant 0 : index
    %450 = vector.load %arg16[%449, %c0_134, %c0_135] : memref<8x2x32xf32, #tpu.memory_space<vmem>>, vector<1x2x32xf32>
    %451 = vector.shape_cast %450 : vector<1x2x32xf32> to vector<2x32xf32>
    %452 = vector.shape_cast %448 : vector<2x32xf32> to vector<1x2x32xf32>
    tpu.vector_store %arg16[%449, %c0_134, %c0_135], %452 {strides = array<i32>} : memref<8x2x32xf32, #tpu.memory_space<vmem>>, vector<1x2x32xf32>,
    %c4_i32_136 = arith.constant 4 : i32
    %cst_137 = arith.constant dense<0.000000e+00> : vector<2x96xf32>
    %453 = tpu.matmul %448, %307, %cst_137 {dimension_numbers = #tpu.dot_dimension_numbers<[1], [0], [0], [1], [0, 0, 1, 1], [], []>} : vector<2x32xf32>, vector<32x96xf32>, vector<2x96xf32> -> vector<2x96xf32>
    %454 = arith.index_cast %c4_i32_136 : i32 to index
    %c0_138 = arith.constant 0 : index
    %c0_139 = arith.constant 0 : index
    %455 = vector.load %arg14[%454, %c0_138, %c0_139] : memref<8x2x96xf32, #tpu.memory_space<vmem>>, vector<1x2x96xf32>
    %456 = vector.shape_cast %455 : vector<1x2x96xf32> to vector<2x96xf32>
    %457 = vector.extract_strided_slice %456 {offsets = [0, 0], sizes = [2, 32], strides = [1, 1]} : vector<2x96xf32> to vector<2x32xf32>
    %458 = vector.extract_strided_slice %453 {offsets = [0, 0], sizes = [2, 32], strides = [1, 1]} : vector<2x96xf32> to vector<2x32xf32>
    %459 = arith.addf %457, %458 : vector<2x32xf32>
    %460 = arith.negf %459 : vector<2x32xf32>
    %461 = math.exp %460 : vector<2x32xf32>
    %cst_140 = arith.constant 1.000000e+00 : f32
    %462 = vector.broadcast %cst_140 : f32 to vector<2x32xf32>
    %463 = arith.addf %462, %461 : vector<2x32xf32>
    %464 = arith.divf %462, %463 : vector<2x32xf32>
    %465 = vector.extract_strided_slice %456 {offsets = [0, 32], sizes = [2, 32], strides = [1, 1]} : vector<2x96xf32> to vector<2x32xf32>
    %466 = vector.extract_strided_slice %453 {offsets = [0, 32], sizes = [2, 32], strides = [1, 1]} : vector<2x96xf32> to vector<2x32xf32>
    %467 = arith.addf %465, %466 : vector<2x32xf32>
    %468 = arith.negf %467 : vector<2x32xf32>
    %469 = math.exp %468 : vector<2x32xf32>
    %cst_141 = arith.constant 1.000000e+00 : f32
    %470 = vector.broadcast %cst_141 : f32 to vector<2x32xf32>
    %471 = arith.addf %470, %469 : vector<2x32xf32>
    %472 = arith.divf %470, %471 : vector<2x32xf32>
    %473 = vector.extract_strided_slice %456 {offsets = [0, 64], sizes = [2, 32], strides = [1, 1]} : vector<2x96xf32> to vector<2x32xf32>
    %474 = vector.extract_strided_slice %453 {offsets = [0, 64], sizes = [2, 32], strides = [1, 1]} : vector<2x96xf32> to vector<2x32xf32>
    %475 = arith.addf %474, %310 : vector<2x32xf32>
    %476 = arith.mulf %464, %475 : vector<2x32xf32>
    %477 = arith.addf %473, %476 : vector<2x32xf32>
    %478 = math.tanh %477 : vector<2x32xf32>
    %cst_142 = arith.constant 1.000000e+00 : f32
    %479 = vector.broadcast %cst_142 : f32 to vector<2x32xf32>
    %480 = arith.subf %479, %472 : vector<2x32xf32>
    %481 = arith.mulf %480, %478 : vector<2x32xf32>
    %482 = arith.mulf %472, %448 : vector<2x32xf32>
    %483 = arith.addf %481, %482 : vector<2x32xf32>
    %484 = arith.index_cast %c4_i32_136 : i32 to index
    %c0_143 = arith.constant 0 : index
    %c0_144 = arith.constant 0 : index
    %485 = vector.load %arg16[%484, %c0_143, %c0_144] : memref<8x2x32xf32, #tpu.memory_space<vmem>>, vector<1x2x32xf32>
    %486 = vector.shape_cast %485 : vector<1x2x32xf32> to vector<2x32xf32>
    %487 = vector.shape_cast %483 : vector<2x32xf32> to vector<1x2x32xf32>
    tpu.vector_store %arg16[%484, %c0_143, %c0_144], %487 {strides = array<i32>} : memref<8x2x32xf32, #tpu.memory_space<vmem>>, vector<1x2x32xf32>,
    %c5_i32_145 = arith.constant 5 : i32
    %cst_146 = arith.constant dense<0.000000e+00> : vector<2x96xf32>
    %488 = tpu.matmul %483, %307, %cst_146 {dimension_numbers = #tpu.dot_dimension_numbers<[1], [0], [0], [1], [0, 0, 1, 1], [], []>} : vector<2x32xf32>, vector<32x96xf32>, vector<2x96xf32> -> vector<2x96xf32>
    %489 = arith.index_cast %c5_i32_145 : i32 to index
    %c0_147 = arith.constant 0 : index
    %c0_148 = arith.constant 0 : index
    %490 = vector.load %arg14[%489, %c0_147, %c0_148] : memref<8x2x96xf32, #tpu.memory_space<vmem>>, vector<1x2x96xf32>
    %491 = vector.shape_cast %490 : vector<1x2x96xf32> to vector<2x96xf32>
    %492 = vector.extract_strided_slice %491 {offsets = [0, 0], sizes = [2, 32], strides = [1, 1]} : vector<2x96xf32> to vector<2x32xf32>
    %493 = vector.extract_strided_slice %488 {offsets = [0, 0], sizes = [2, 32], strides = [1, 1]} : vector<2x96xf32> to vector<2x32xf32>
    %494 = arith.addf %492, %493 : vector<2x32xf32>
    %495 = arith.negf %494 : vector<2x32xf32>
    %496 = math.exp %495 : vector<2x32xf32>
    %cst_149 = arith.constant 1.000000e+00 : f32
    %497 = vector.broadcast %cst_149 : f32 to vector<2x32xf32>
    %498 = arith.addf %497, %496 : vector<2x32xf32>
    %499 = arith.divf %497, %498 : vector<2x32xf32>
    %500 = vector.extract_strided_slice %491 {offsets = [0, 32], sizes = [2, 32], strides = [1, 1]} : vector<2x96xf32> to vector<2x32xf32>
    %501 = vector.extract_strided_slice %488 {offsets = [0, 32], sizes = [2, 32], strides = [1, 1]} : vector<2x96xf32> to vector<2x32xf32>
    %502 = arith.addf %500, %501 : vector<2x32xf32>
    %503 = arith.negf %502 : vector<2x32xf32>
    %504 = math.exp %503 : vector<2x32xf32>
    %cst_150 = arith.constant 1.000000e+00 : f32
    %505 = vector.broadcast %cst_150 : f32 to vector<2x32xf32>
    %506 = arith.addf %505, %504 : vector<2x32xf32>
    %507 = arith.divf %505, %506 : vector<2x32xf32>
    %508 = vector.extract_strided_slice %491 {offsets = [0, 64], sizes = [2, 32], strides = [1, 1]} : vector<2x96xf32> to vector<2x32xf32>
    %509 = vector.extract_strided_slice %488 {offsets = [0, 64], sizes = [2, 32], strides = [1, 1]} : vector<2x96xf32> to vector<2x32xf32>
    %510 = arith.addf %509, %310 : vector<2x32xf32>
    %511 = arith.mulf %499, %510 : vector<2x32xf32>
    %512 = arith.addf %508, %511 : vector<2x32xf32>
    %513 = math.tanh %512 : vector<2x32xf32>
    %cst_151 = arith.constant 1.000000e+00 : f32
    %514 = vector.broadcast %cst_151 : f32 to vector<2x32xf32>
    %515 = arith.subf %514, %507 : vector<2x32xf32>
    %516 = arith.mulf %515, %513 : vector<2x32xf32>
    %517 = arith.mulf %507, %483 : vector<2x32xf32>
    %518 = arith.addf %516, %517 : vector<2x32xf32>
    %519 = arith.index_cast %c5_i32_145 : i32 to index
    %c0_152 = arith.constant 0 : index
    %c0_153 = arith.constant 0 : index
    %520 = vector.load %arg16[%519, %c0_152, %c0_153] : memref<8x2x32xf32, #tpu.memory_space<vmem>>, vector<1x2x32xf32>
    %521 = vector.shape_cast %520 : vector<1x2x32xf32> to vector<2x32xf32>
    %522 = vector.shape_cast %518 : vector<2x32xf32> to vector<1x2x32xf32>
    tpu.vector_store %arg16[%519, %c0_152, %c0_153], %522 {strides = array<i32>} : memref<8x2x32xf32, #tpu.memory_space<vmem>>, vector<1x2x32xf32>,
    %c6_i32_154 = arith.constant 6 : i32
    %cst_155 = arith.constant dense<0.000000e+00> : vector<2x96xf32>
    %523 = tpu.matmul %518, %307, %cst_155 {dimension_numbers = #tpu.dot_dimension_numbers<[1], [0], [0], [1], [0, 0, 1, 1], [], []>} : vector<2x32xf32>, vector<32x96xf32>, vector<2x96xf32> -> vector<2x96xf32>
    %524 = arith.index_cast %c6_i32_154 : i32 to index
    %c0_156 = arith.constant 0 : index
    %c0_157 = arith.constant 0 : index
    %525 = vector.load %arg14[%524, %c0_156, %c0_157] : memref<8x2x96xf32, #tpu.memory_space<vmem>>, vector<1x2x96xf32>
    %526 = vector.shape_cast %525 : vector<1x2x96xf32> to vector<2x96xf32>
    %527 = vector.extract_strided_slice %526 {offsets = [0, 0], sizes = [2, 32], strides = [1, 1]} : vector<2x96xf32> to vector<2x32xf32>
    %528 = vector.extract_strided_slice %523 {offsets = [0, 0], sizes = [2, 32], strides = [1, 1]} : vector<2x96xf32> to vector<2x32xf32>
    %529 = arith.addf %527, %528 : vector<2x32xf32>
    %530 = arith.negf %529 : vector<2x32xf32>
    %531 = math.exp %530 : vector<2x32xf32>
    %cst_158 = arith.constant 1.000000e+00 : f32
    %532 = vector.broadcast %cst_158 : f32 to vector<2x32xf32>
    %533 = arith.addf %532, %531 : vector<2x32xf32>
    %534 = arith.divf %532, %533 : vector<2x32xf32>
    %535 = vector.extract_strided_slice %526 {offsets = [0, 32], sizes = [2, 32], strides = [1, 1]} : vector<2x96xf32> to vector<2x32xf32>
    %536 = vector.extract_strided_slice %523 {offsets = [0, 32], sizes = [2, 32], strides = [1, 1]} : vector<2x96xf32> to vector<2x32xf32>
    %537 = arith.addf %535, %536 : vector<2x32xf32>
    %538 = arith.negf %537 : vector<2x32xf32>
    %539 = math.exp %538 : vector<2x32xf32>
    %cst_159 = arith.constant 1.000000e+00 : f32
    %540 = vector.broadcast %cst_159 : f32 to vector<2x32xf32>
    %541 = arith.addf %540, %539 : vector<2x32xf32>
    %542 = arith.divf %540, %541 : vector<2x32xf32>
    %543 = vector.extract_strided_slice %526 {offsets = [0, 64], sizes = [2, 32], strides = [1, 1]} : vector<2x96xf32> to vector<2x32xf32>
    %544 = vector.extract_strided_slice %523 {offsets = [0, 64], sizes = [2, 32], strides = [1, 1]} : vector<2x96xf32> to vector<2x32xf32>
    %545 = arith.addf %544, %310 : vector<2x32xf32>
    %546 = arith.mulf %534, %545 : vector<2x32xf32>
    %547 = arith.addf %543, %546 : vector<2x32xf32>
    %548 = math.tanh %547 : vector<2x32xf32>
    %cst_160 = arith.constant 1.000000e+00 : f32
    %549 = vector.broadcast %cst_160 : f32 to vector<2x32xf32>
    %550 = arith.subf %549, %542 : vector<2x32xf32>
    %551 = arith.mulf %550, %548 : vector<2x32xf32>
    %552 = arith.mulf %542, %518 : vector<2x32xf32>
    %553 = arith.addf %551, %552 : vector<2x32xf32>
    %554 = arith.index_cast %c6_i32_154 : i32 to index
    %c0_161 = arith.constant 0 : index
    %c0_162 = arith.constant 0 : index
    %555 = vector.load %arg16[%554, %c0_161, %c0_162] : memref<8x2x32xf32, #tpu.memory_space<vmem>>, vector<1x2x32xf32>
    %556 = vector.shape_cast %555 : vector<1x2x32xf32> to vector<2x32xf32>
    %557 = vector.shape_cast %553 : vector<2x32xf32> to vector<1x2x32xf32>
    tpu.vector_store %arg16[%554, %c0_161, %c0_162], %557 {strides = array<i32>} : memref<8x2x32xf32, #tpu.memory_space<vmem>>, vector<1x2x32xf32>,
    %c7_i32_163 = arith.constant 7 : i32
    %cst_164 = arith.constant dense<0.000000e+00> : vector<2x96xf32>
    %558 = tpu.matmul %553, %307, %cst_164 {dimension_numbers = #tpu.dot_dimension_numbers<[1], [0], [0], [1], [0, 0, 1, 1], [], []>} : vector<2x32xf32>, vector<32x96xf32>, vector<2x96xf32> -> vector<2x96xf32>
    %559 = arith.index_cast %c7_i32_163 : i32 to index
    %c0_165 = arith.constant 0 : index
    %c0_166 = arith.constant 0 : index
    %560 = vector.load %arg14[%559, %c0_165, %c0_166] : memref<8x2x96xf32, #tpu.memory_space<vmem>>, vector<1x2x96xf32>
    %561 = vector.shape_cast %560 : vector<1x2x96xf32> to vector<2x96xf32>
    %562 = vector.extract_strided_slice %561 {offsets = [0, 0], sizes = [2, 32], strides = [1, 1]} : vector<2x96xf32> to vector<2x32xf32>
    %563 = vector.extract_strided_slice %558 {offsets = [0, 0], sizes = [2, 32], strides = [1, 1]} : vector<2x96xf32> to vector<2x32xf32>
    %564 = arith.addf %562, %563 : vector<2x32xf32>
    %565 = arith.negf %564 : vector<2x32xf32>
    %566 = math.exp %565 : vector<2x32xf32>
    %cst_167 = arith.constant 1.000000e+00 : f32
    %567 = vector.broadcast %cst_167 : f32 to vector<2x32xf32>
    %568 = arith.addf %567, %566 : vector<2x32xf32>
    %569 = arith.divf %567, %568 : vector<2x32xf32>
    %570 = vector.extract_strided_slice %561 {offsets = [0, 32], sizes = [2, 32], strides = [1, 1]} : vector<2x96xf32> to vector<2x32xf32>
    %571 = vector.extract_strided_slice %558 {offsets = [0, 32], sizes = [2, 32], strides = [1, 1]} : vector<2x96xf32> to vector<2x32xf32>
    %572 = arith.addf %570, %571 : vector<2x32xf32>
    %573 = arith.negf %572 : vector<2x32xf32>
    %574 = math.exp %573 : vector<2x32xf32>
    %cst_168 = arith.constant 1.000000e+00 : f32
    %575 = vector.broadcast %cst_168 : f32 to vector<2x32xf32>
    %576 = arith.addf %575, %574 : vector<2x32xf32>
    %577 = arith.divf %575, %576 : vector<2x32xf32>
    %578 = vector.extract_strided_slice %561 {offsets = [0, 64], sizes = [2, 32], strides = [1, 1]} : vector<2x96xf32> to vector<2x32xf32>
    %579 = vector.extract_strided_slice %558 {offsets = [0, 64], sizes = [2, 32], strides = [1, 1]} : vector<2x96xf32> to vector<2x32xf32>
    %580 = arith.addf %579, %310 : vector<2x32xf32>
    %581 = arith.mulf %569, %580 : vector<2x32xf32>
    %582 = arith.addf %578, %581 : vector<2x32xf32>
    %583 = math.tanh %582 : vector<2x32xf32>
    %cst_169 = arith.constant 1.000000e+00 : f32
    %584 = vector.broadcast %cst_169 : f32 to vector<2x32xf32>
    %585 = arith.subf %584, %577 : vector<2x32xf32>
    %586 = arith.mulf %585, %583 : vector<2x32xf32>
    %587 = arith.mulf %577, %553 : vector<2x32xf32>
    %588 = arith.addf %586, %587 : vector<2x32xf32>
    %589 = arith.index_cast %c7_i32_163 : i32 to index
    %c0_170 = arith.constant 0 : index
    %c0_171 = arith.constant 0 : index
    %590 = vector.load %arg16[%589, %c0_170, %c0_171] : memref<8x2x32xf32, #tpu.memory_space<vmem>>, vector<1x2x32xf32>
    %591 = vector.shape_cast %590 : vector<1x2x32xf32> to vector<2x32xf32>
    %592 = vector.shape_cast %588 : vector<2x32xf32> to vector<1x2x32xf32>
    tpu.vector_store %arg16[%589, %c0_170, %c0_171], %592 {strides = array<i32>} : memref<8x2x32xf32, #tpu.memory_space<vmem>>, vector<1x2x32xf32>,
    %c8_i32_172 = arith.constant 8 : i32
    %c1_173 = arith.constant 1 : index
    %c0_174 = arith.constant 0 : index
    %c0_175 = arith.constant 0 : index
    %593 = vector.load %arg13[%c1_173, %c0_174, %c0_175] : memref<2x2x32xf32, #tpu.memory_space<vmem>>, vector<1x2x32xf32>
    %594 = vector.shape_cast %593 : vector<1x2x32xf32> to vector<2x32xf32>
    %595 = vector.shape_cast %588 : vector<2x32xf32> to vector<1x2x32xf32>
    tpu.vector_store %arg13[%c1_173, %c0_174, %c0_175], %595 {strides = array<i32>} : memref<2x2x32xf32, #tpu.memory_space<vmem>>, vector<1x2x32xf32>,
    %c0_176 = arith.constant 0 : index
    %c0_177 = arith.constant 0 : index
    %c0_178 = arith.constant 0 : index
    %596 = vector.load %arg16[%c0_176, %c0_177, %c0_178] : memref<8x2x32xf32, #tpu.memory_space<vmem>>, vector<8x2x32xf32>
    %597 = vector.extract_strided_slice %596 {offsets = [0, 1, 0], sizes = [8, 1, 32], strides = [1, 1, 1]} : vector<8x2x32xf32> to vector<8x1x32xf32>
    %598 = vector.shape_cast %597 : vector<8x1x32xf32> to vector<8x32xf32>
    %cst_179 = arith.constant 0.000000e+00 : f32
    %599 = vector.broadcast %cst_179 : f32 to vector<8x32xf32>
    %600 = arith.maximumf %598, %599 : vector<8x32xf32>
    %c0_180 = arith.constant 0 : index
    %c0_181 = arith.constant 0 : index
    %601 = vector.load %arg10[%c0_180, %c0_181] : memref<32x8xf32, #tpu.memory_space<vmem>>, vector<32x8xf32>
    %cst_182 = arith.constant dense<0.000000e+00> : vector<8x8xf32>
    %602 = tpu.matmul %600, %601, %cst_182 {dimension_numbers = #tpu.dot_dimension_numbers<[1], [0], [0], [1], [0, 0, 1, 1], [], []>} : vector<8x32xf32>, vector<32x8xf32>, vector<8x8xf32> -> vector<8x8xf32>
    %c0_183 = arith.constant 0 : index
    %c0_184 = arith.constant 0 : index
    %603 = vector.load %arg11[%c0_183, %c0_184] : memref<1x8xf32, #tpu.memory_space<vmem>>, vector<1x8xf32>
    %604 = vector.broadcast %603 : vector<1x8xf32> to vector<8x8xf32>
    %605 = arith.addf %602, %604 : vector<8x8xf32>
    %c0_185 = arith.constant 0 : index
    %c0_186 = arith.constant 0 : index
    %606 = vector.load %arg12[%c0_185, %c0_186] : memref<8x8xf32, #tpu.memory_space<vmem>>, vector<8x8xf32>
    tpu.vector_store %arg12[%c0_185, %c0_186], %605 {strides = array<i32>} : memref<8x8xf32, #tpu.memory_space<vmem>>, vector<8x8xf32>,
    return
  }
}

</mosaic_0001>

<llo_original>
// kernel: grunet_forward.1
$region0: #{grunet_forward.1}
  #allocation0 [shape = 'u32[]', space=smem, size = 0x4, offset = 0x4, fixed_abs, tag = 'smem constant byte address 0x4 - core index']
  #allocation1 [shape = 'u32[144,128]{1,0:T(1,128)}', space=vmem, size = 0x12000, scoped, tag = 'internal scratch']
  #allocation2 [shape = 'f32[8,2,96]{2,1,0:T(2,128)}', space=vmem, size = 0x2000, scoped, tag = 'scratch operand']
  #allocation3 [shape = 'f32[8,2,32]{2,1,0:T(2,128)}', space=vmem, size = 0x2000, scoped, tag = 'scratch operand']
  #allocation4 [shape = 'f32[8,2,32]{2,1,0:T(2,128)}', space=vmem, size = 0x2000, scoped, tag = 'scratch operand']
  %s0 = inlined_call_operand.hbm [shape: f32[8,2,16], index: 0, kind: input, shape index: {}]
  %s1 = inlined_call_operand.vmem [shape: f32[2,2,32], index: 1, kind: input, shape index: {}]
  %s2 = inlined_call_operand.hbm [shape: f32[16,96], index: 2, kind: input, shape index: {}]
  %s3 = inlined_call_operand.vmem [shape: f32[32,96], index: 3, kind: input, shape index: {}]
  %s4 = inlined_call_operand.vmem [shape: f32[1,96], index: 4, kind: input, shape index: {}]
  %s5 = inlined_call_operand.vmem [shape: f32[1,32], index: 5, kind: input, shape index: {}]
  %s6 = inlined_call_operand.vmem [shape: f32[32,96], index: 6, kind: input, shape index: {}]
  %s7 = inlined_call_operand.hbm [shape: f32[32,96], index: 7, kind: input, shape index: {}]
  %s8 = inlined_call_operand.hbm [shape: f32[1,96], index: 8, kind: input, shape index: {}]
  %s9 = inlined_call_operand.hbm [shape: f32[1,32], index: 9, kind: input, shape index: {}]
  %s10 = inlined_call_operand.vmem [shape: f32[32,8], index: 10, kind: input, shape index: {}]
  %s11 = inlined_call_operand.hbm [shape: f32[1,8], index: 11, kind: input, shape index: {}]
  %s12 = inlined_call_operand.hbm [shape: f32[8,8], index: 12, kind: output, shape index: {0}]
  %s13 = inlined_call_operand.hbm [shape: f32[2,2,32], index: 13, kind: output, shape index: {1}]
  %14 = xla_tuple %s12, %s13
  %s15 = sld [smem:[#allocation0]]
  $region90: #{grunet_forward.1} parent=0
    _
  %s17 = ssub.s32 1, %s15
  %s18 = scalar_select 0, %s17, %s15
  $region1: #{grunet_forward.1} parent=0
    #allocation5 [shape = 'u8[8192]{0}', space=vmem, size = 0x2000, scoped, tag = 'input window, operand 0, single buffered']
    #allocation6 [shape = 's32[1]{0}', space=sflag, size = 0x4, scoped, tag = 'scoped memory for grunet_forward.1']
    #allocation7 [shape = 's32[1]{0}', space=sflag, size = 0x4, scoped, tag = 'scoped memory for grunet_forward.1']
    #allocation8 [shape = 'u8[8192]{0}', space=vmem, size = 0x2000, scoped, tag = 'input window, operand 2, single buffered']
    #allocation9 [shape = 's32[1]{0}', space=sflag, size = 0x4, scoped, tag = 'scoped memory for grunet_forward.1']
    #allocation10 [shape = 'u8[16384]{0}', space=vmem, size = 0x4000, scoped, tag = 'input window, operand 7, single buffered']
    #allocation11 [shape = 'u8[512]{0}', space=vmem, size = 0x400, scoped, tag = 'input window, operand 8, single buffered']
    #allocation12 [shape = 's32[1]{0}', space=sflag, size = 0x4, scoped, tag = 'scoped memory for grunet_forward.1']
    #allocation13 [shape = 'u8[512]{0}', space=vmem, size = 0x400, scoped, tag = 'input window, operand 9, single buffered']
    #allocation14 [shape = 'u8[512]{0}', space=vmem, size = 0x400, scoped, tag = 'input window, operand 11, single buffered']
    #allocation15 [shape = 's32[1]{0}', space=sflag, size = 0x4, scoped, tag = 'scoped memory for grunet_forward.1']
    #allocation16 [shape = 'u8[4096]{0}', space=vmem, size = 0x1000, scoped, tag = 'output window, operand 0, single buffered']
    #allocation17 [shape = 'u8[2048]{0}', space=vmem, size = 0x800, scoped, tag = 'output window, operand 1, single buffered']
    #allocation18 [shape = 's32[1]{0}', space=sflag, size = 0x4, scoped, tag = 'scoped memory for grunet_forward.1']
    %19 = vsyncpa [#allocation6], 0
    %20 = vsyncpa [#allocation9], 0
    %21 = vsyncpa [#allocation12], 0
    %22 = vsyncpa [#allocation15], 0
    %23 = vsyncpa [#allocation7], 0
    %24 = vsyncpa [#allocation18], 0
    // Predicated region
    $region2: #{grunet_forward.1} parent=1 // pred_check
      _
    $region3: #{grunet_forward.1} parent=1 // pred_check_branch
      %26 = sbr.rel (0) target = $region5
    $region4: #{grunet_forward.1} parent=1 // pred_region
      %s28 = ssub.s32 256, 256
      %29 = vsyncadd [#allocation6], %s28
      %s30 = sshll.u32 [#allocation5], 4
      %s31 = int_to_ptr.vmem [resolvable:$true] %s30
      %36 = dma.hbm_to_vmem [thread:$0]  %s0, 256, %s31, [#allocation6], 32, 32, 2
    $region5: #{grunet_forward.1} parent=1 // pred_fallthru
      _
    // Predicated region
    $region6: #{grunet_forward.1} parent=1 // pred_check
      _
    $region7: #{grunet_forward.1} parent=1 // pred_check_branch
      %38 = sbr.rel (0) target = $region9
    $region8: #{grunet_forward.1} parent=1 // pred_region
      _
    $region9: #{grunet_forward.1} parent=1 // pred_fallthru
      _
    // Predicated region
    $region10: #{grunet_forward.1} parent=1 // pred_check
      _
    $region11: #{grunet_forward.1} parent=1 // pred_check_branch
      %40 = sbr.rel (0) target = $region13
    $region12: #{grunet_forward.1} parent=1 // pred_region
      %s42 = ssub.s32 256, 256
      %43 = vsyncadd [#allocation9], %s42
      %s44 = sshll.u32 [#allocation8], 4
      %s45 = int_to_ptr.vmem [resolvable:$true] %s44
      %50 = dma.hbm_to_vmem [thread:$0]  %s2, 256, %s45, [#allocation9], 128, 128, 8
    $region13: #{grunet_forward.1} parent=1 // pred_fallthru
      _
    // Predicated region
    $region14: #{grunet_forward.1} parent=1 // pred_check
      _
    $region15: #{grunet_forward.1} parent=1 // pred_check_branch
      %52 = sbr.rel (0) target = $region17
    $region16: #{grunet_forward.1} parent=1 // pred_region
      _
    $region17: #{grunet_forward.1} parent=1 // pred_fallthru
      _
    // Predicated region
    $region18: #{grunet_forward.1} parent=1 // pred_check
      _
    $region19: #{grunet_forward.1} parent=1 // pred_check_branch
      %54 = sbr.rel (0) target = $region21
    $region20: #{grunet_forward.1} parent=1 // pred_region
      _
    $region21: #{grunet_forward.1} parent=1 // pred_fallthru
      _
    // Predicated region
    $region22: #{grunet_forward.1} parent=1 // pred_check
      _
    $region23: #{grunet_forward.1} parent=1 // pred_check_branch
      %56 = sbr.rel (0) target = $region25
    $region24: #{grunet_forward.1} parent=1 // pred_region
      _
    $region25: #{grunet_forward.1} parent=1 // pred_fallthru
      _
    // Predicated region
    $region26: #{grunet_forward.1} parent=1 // pred_check
      _
    $region27: #{grunet_forward.1} parent=1 // pred_check_branch
      %58 = sbr.rel (0) target = $region29
    $region28: #{grunet_forward.1} parent=1 // pred_region
      _
    $region29: #{grunet_forward.1} parent=1 // pred_fallthru
      _
    // Predicated region
    $region30: #{grunet_forward.1} parent=1 // pred_check
      _
    $region31: #{grunet_forward.1} parent=1 // pred_check_branch
      %60 = sbr.rel (0) target = $region33
    $region32: #{grunet_forward.1} parent=1 // pred_region
      %s62 = ssub.s32 512, 512
      %63 = vsyncadd [#allocation9], %s62
      %s64 = sshll.u32 [#allocation10], 4
      %s65 = int_to_ptr.vmem [resolvable:$true] %s64
      %70 = dma.hbm_to_vmem [thread:$0]  %s7, 512, %s65, [#allocation9], 128, 128, 8
    $region33: #{grunet_forward.1} parent=1 // pred_fallthru
      _
    // Predicated region
    $region34: #{grunet_forward.1} parent=1 // pred_check
      _
    $region35: #{grunet_forward.1} parent=1 // pred_check_branch
      %72 = sbr.rel (0) target = $region37
    $region36: #{grunet_forward.1} parent=1 // pred_region
      %s74 = ssub.s32 16, 16
      %75 = vsyncadd [#allocation12], %s74
      %s77 = sshll.u32 [#allocation11], 4
      %s78 = int_to_ptr.vmem [resolvable:$true] %s77
      %80 = dma.hbm_to_vmem [thread:$0]  %s8, 16, %s78, [#allocation12]
    $region37: #{grunet_forward.1} parent=1 // pred_fallthru
      _
    // Predicated region
    $region38: #{grunet_forward.1} parent=1 // pred_check
      _
    $region39: #{grunet_forward.1} parent=1 // pred_check_branch
      %82 = sbr.rel (0) target = $region41
    $region40: #{grunet_forward.1} parent=1 // pred_region
      %s84 = ssub.s32 16, 16
      %85 = vsyncadd [#allocation12], %s84
      %s87 = sshll.u32 [#allocation13], 4
      %s88 = int_to_ptr.vmem [resolvable:$true] %s87
      %90 = dma.hbm_to_vmem [thread:$0]  %s9, 16, %s88, [#allocation12]
    $region41: #{grunet_forward.1} parent=1 // pred_fallthru
      _
    // Predicated region
    $region42: #{grunet_forward.1} parent=1 // pred_check
      _
    $region43: #{grunet_forward.1} parent=1 // pred_check_branch
      %92 = sbr.rel (0) target = $region45
    $region44: #{grunet_forward.1} parent=1 // pred_region
      _
    $region45: #{grunet_forward.1} parent=1 // pred_fallthru
      _
    // Predicated region
    $region46: #{grunet_forward.1} parent=1 // pred_check
      _
    $region47: #{grunet_forward.1} parent=1 // pred_check_branch
      %94 = sbr.rel (0) target = $region49
    $region48: #{grunet_forward.1} parent=1 // pred_region
      %s96 = ssub.s32 16, 16
      %97 = vsyncadd [#allocation15], %s96
      %s99 = sshll.u32 [#allocation14], 4
      %s100 = int_to_ptr.vmem [resolvable:$true] %s99
      %102 = dma.hbm_to_vmem [thread:$0]  %s11, 16, %s100, [#allocation15]
    $region49: #{grunet_forward.1} parent=1 // pred_fallthru
      _
    // Predicated region
    $region50: #{grunet_forward.1} parent=1 // pred_check
      _
    $region51: #{grunet_forward.1} parent=1 // pred_check_branch
      %104 = sbr.rel (0) target = $region53
    $region52: #{grunet_forward.1} parent=1 // pred_region
      %105 = dma.done [#allocation6], 256
    $region53: #{grunet_forward.1} parent=1 // pred_fallthru
      _
    // Predicated region
    $region54: #{grunet_forward.1} parent=1 // pred_check
      _
    $region55: #{grunet_forward.1} parent=1 // pred_check_branch
      %107 = sbr.rel (0) target = $region57
    $region56: #{grunet_forward.1} parent=1 // pred_region
      %108 = dma.done [#allocation9], 256
    $region57: #{grunet_forward.1} parent=1 // pred_fallthru
      _
    // Predicated region
    $region58: #{grunet_forward.1} parent=1 // pred_check
      _
    $region59: #{grunet_forward.1} parent=1 // pred_check_branch
      %110 = sbr.rel (0) target = $region61
    $region60: #{grunet_forward.1} parent=1 // pred_region
      %111 = dma.done [#allocation9], 512
    $region61: #{grunet_forward.1} parent=1 // pred_fallthru
      _
    // Predicated region
    $region62: #{grunet_forward.1} parent=1 // pred_check
      _
    $region63: #{grunet_forward.1} parent=1 // pred_check_branch
      %113 = sbr.rel (0) target = $region65
    $region64: #{grunet_forward.1} parent=1 // pred_region
      %114 = dma.done [#allocation12], 16
    $region65: #{grunet_forward.1} parent=1 // pred_fallthru
      _
    // Predicated region
    $region66: #{grunet_forward.1} parent=1 // pred_check
      _
    $region67: #{grunet_forward.1} parent=1 // pred_check_branch
      %116 = sbr.rel (0) target = $region69
    $region68: #{grunet_forward.1} parent=1 // pred_region
      %117 = dma.done [#allocation12], 16
    $region69: #{grunet_forward.1} parent=1 // pred_fallthru
      _
    // Predicated region
    $region70: #{grunet_forward.1} parent=1 // pred_check
      _
    $region71: #{grunet_forward.1} parent=1 // pred_check_branch
      %119 = sbr.rel (0) target = $region73
    $region72: #{grunet_forward.1} parent=1 // pred_region
      %120 = dma.done [#allocation15], 16
    $region73: #{grunet_forward.1} parent=1 // pred_fallthru
      _
    %v121 = vld [vmem:[#allocation5] sm:$0x3]
    %v122 = vld [vmem:[#allocation5 + $0x2] sm:$0x3]
    %v123 = vld [vmem:[#allocation5 + $0x4] sm:$0x3]
    %v124 = vld [vmem:[#allocation5 + $0x6] sm:$0x3]
    %v125 = vld [vmem:[#allocation5 + $0x8] sm:$0x3]
    %v126 = vld [vmem:[#allocation5 + $0xa] sm:$0x3]
    %v127 = vld [vmem:[#allocation5 + $0xc] sm:$0x3]
    %v128 = vld [vmem:[#allocation5 + $0xe] sm:$0x3]
    %v129 = vld [vmem:[#allocation8] sm:$0xff]
    %v130 = vld [vmem:[#allocation8 + $0x8] sm:$0xff]
    %v131 = vld [vmem:[%s4] sm:$0x1]
    %v133 = vlaneseq
    %v134 = vshrl.u32 %v133, 7
    %v135 = vsub.s32 0, %v134
    %v136 = vrot.slane %v131, %v135
    %v146 = vcombine.low %v121, %v122
    %v147 = vcombine.low %v123, %v124
    %v149 = vunpack.c.l.s4 1983009808
    %v150 = vunpack.c.0.s8 %v149
    %v151 = vlaneseq
    %v152 = vshrl.u32 %v151, 7
    %v153 = vsub.s32 %v150, %v152
    %v154 = vrot.slane %v146, %v153
    %v156 = vunpack.c.l.s4 1983009808
    %v157 = vunpack.c.0.s8 %v156
    %v158 = vlaneseq
    %v159 = vshrl.u32 %v158, 7
    %v160 = vsub.s32 %v157, %v159
    %v161 = vrot.slane %v147, %v160
    %v162 = vcombine.low %v154, %v161
    %v163 = vcombine.low %v125, %v126
    %v164 = vcombine.low %v127, %v128
    %v166 = vunpack.c.l.s4 1983009808
    %v167 = vunpack.c.0.s8 %v166
    %v168 = vlaneseq
    %v169 = vshrl.u32 %v168, 7
    %v170 = vsub.s32 %v167, %v169
    %v171 = vrot.slane %v163, %v170
    %v173 = vunpack.c.l.s4 1983009808
    %v174 = vunpack.c.0.s8 %v173
    %v175 = vlaneseq
    %v176 = vshrl.u32 %v175, 7
    %v177 = vsub.s32 %v174, %v176
    %v178 = vrot.slane %v164, %v177
    %v179 = vcombine.low %v171, %v178
    %vm180 = vcmask 130048
    %v181 = vsel %vm180, %v162, 0
    %v183 = vsel %vm180, %v179, 0
    %185 = vmatprep.subr.mxu0 0.0
    %186 = vmatpush1.msra.mxu0 %v129
    %187 = vmatprep.subr.mxu0 0.0
    %188 = vmatpush1.msra.mxu0 %v130
    %189 = vmatprep.subr.mxu0 0.0
    %190 = vmatpush1.msra.mxu0 0.0
    %191 = vmatprep.subr.mxu0 0.0
    %192 = vmatpush1.msra.mxu0 0.0
    %193 = vmatprep.subr.mxu0 0.0
    %194 = vmatpush1.msra.mxu0 0.0
    %195 = vmatprep.subr.mxu0 0.0
    %196 = vmatpush1.msra.mxu0 0.0
    %197 = vmatprep.subr.mxu0 0.0
    %198 = vmatpush1.msra.mxu0 0.0
    %199 = vmatprep.subr.mxu0 0.0
    %200 = vmatpush1.msra.mxu0 0.0
    %201 = vmatprep.subr.mxu0 0.0
    %202 = vmatpush1.msra.mxu0 0.0
    %203 = vmatprep.subr.mxu0 0.0
    %204 = vmatpush1.msra.mxu0 0.0
    %205 = vmatprep.subr.mxu0 0.0
    %206 = vmatpush1.msra.mxu0 0.0
    %207 = vmatprep.subr.mxu0 0.0
    %208 = vmatpush1.msra.mxu0 0.0
    %209 = vmatprep.subr.mxu0 0.0
    %210 = vmatpush1.msra.mxu0 0.0
    %211 = vmatprep.subr.mxu0 0.0
    %212 = vmatpush1.msra.mxu0 0.0
    %213 = vmatprep.subr.mxu0 0.0
    %214 = vmatpush1.msra.mxu0 0.0
    %215 = vmatprep.subr.mxu0 0.0
    %216 = vmatpush1.msra.mxu0 0.0
    %217 = vmatprep.subr.mxu0 0.0
    %218 = vmatpush1.msra.mxu0 0.0
    %219 = vmatprep.subr.mxu0 0.0
    %220 = vmatpush1.msra.mxu0 0.0
    %221 = vmatprep.subr.mxu0 0.0
    %222 = vmatpush1.msra.mxu0 0.0
    %223 = vmatprep.subr.mxu0 0.0
    %224 = vmatpush1.msra.mxu0 0.0
    %225 = vmatprep.subr.mxu0 0.0
    %226 = vmatpush1.msra.mxu0 0.0
    %227 = vmatprep.subr.mxu0 0.0
    %228 = vmatpush1.msra.mxu0 0.0
    %229 = vmatprep.subr.mxu0 0.0
    %230 = vmatpush1.msra.mxu0 0.0
    %231 = vmatprep.subr.mxu0 0.0
    %232 = vmatpush1.msra.mxu0 0.0
    %233 = vmatprep.subr.mxu0 0.0
    %234 = vmatpush1.msra.mxu0 0.0
    %235 = vmatprep.subr.mxu0 0.0
    %236 = vmatpush1.msra.mxu0 0.0
    %237 = vmatprep.subr.mxu0 0.0
    %238 = vmatpush1.msra.mxu0 0.0
    %239 = vmatprep.subr.mxu0 0.0
    %240 = vmatpush1.msra.mxu0 0.0
    %241 = vmatprep.subr.mxu0 0.0
    %242 = vmatpush1.msra.mxu0 0.0
    %243 = vmatprep.subr.mxu0 0.0
    %244 = vmatpush1.msra.mxu0 0.0
    %245 = vmatprep.subr.mxu0 0.0
    %246 = vmatpush1.msra.mxu0 0.0
    %247 = vmatprep.subr.mxu0 0.0
    %248 = vmatpush1.msra.mxu0 0.0
    %249 = vmatprep.mubr.f32.mxu0 0.0
    %250 = vmatmul.mubr.f32.gmra.mrb[0].mxu0 %v181
    %v251 = vpop.f32.mrb[0].mxu0
    %v252 = vadd.f32 %v136, %v251
    %v253 = vpop.f32.mrb[0].mxu0
    %254 = vmatprep.mubr.f32.mxu0 0.0
    %255 = vmatmul.mubr.f32.gmra.mrb[0].mxu0 %v183
    %v256 = vpop.f32.mrb[0].mxu0
    %v257 = vadd.f32 %v136, %v256
    %v258 = vpop.f32.mrb[0].mxu0
    %259 = vdwg.mxu0
    %v262 = vcombine.high %v252, %v252
    %v264 = vunpack.c.l.s4 1983009808
    %v265 = vunpack.c.0.s8 %v264
    %v266 = vlaneseq
    %v267 = vshrl.u32 %v266, 7
    %v268 = vsub.s32 %v265, %v267
    %v269 = vrot.slane %v252, %v268
    %v271 = vunpack.c.l.s4 1983009808
    %v272 = vunpack.c.0.s8 %v271
    %v273 = vlaneseq
    %v274 = vshrl.u32 %v273, 7
    %v275 = vsub.s32 %v272, %v274
    %v276 = vrot.slane %v262, %v275
    %v277 = vcombine.high %v269, %v269
    %v278 = vcombine.high %v276, %v276
    %v279 = vcombine.high %v257, %v257
    %v281 = vunpack.c.l.s4 1983009808
    %v282 = vunpack.c.0.s8 %v281
    %v283 = vlaneseq
    %v284 = vshrl.u32 %v283, 7
    %v285 = vsub.s32 %v282, %v284
    %v286 = vrot.slane %v257, %v285
    %v288 = vunpack.c.l.s4 1983009808
    %v289 = vunpack.c.0.s8 %v288
    %v290 = vlaneseq
    %v291 = vshrl.u32 %v290, 7
    %v292 = vsub.s32 %v289, %v291
    %v293 = vrot.slane %v279, %v292
    %v294 = vcombine.high %v286, %v286
    %v295 = vcombine.high %v293, %v293
    %vm304 = vcmask 779264
    %305 = vst.msk [vmem:[#allocation2] sm:$0x3] %vm304, %v269
    %306 = vst.msk [vmem:[#allocation2 + $0x2] sm:$0x3] %vm304, %v277
    %307 = vst.msk [vmem:[#allocation2 + $0x4] sm:$0x3] %vm304, %v276
    %308 = vst.msk [vmem:[#allocation2 + $0x6] sm:$0x3] %vm304, %v278
    %309 = vst.msk [vmem:[#allocation2 + $0x8] sm:$0x3] %vm304, %v286
    %310 = vst.msk [vmem:[#allocation2 + $0xa] sm:$0x3] %vm304, %v294
    %311 = vst.msk [vmem:[#allocation2 + $0xc] sm:$0x3] %vm304, %v293
    %312 = vst.msk [vmem:[#allocation2 + $0xe] sm:$0x3] %vm304, %v295
    %v313 = vld [vmem:[%s3] sm:$0xff]
    %v314 = vld [vmem:[%s3 + $0x8] sm:$0xff]
    %v315 = vld [vmem:[%s3 + $0x10] sm:$0xff]
    %v316 = vld [vmem:[%s3 + $0x18] sm:$0xff]
    %v317 = vld [vmem:[%s5] sm:$0x1]
    %v319 = vlaneseq
    %v320 = vshrl.u32 %v319, 7
    %v321 = vsub.s32 0, %v320
    %v322 = vrot.slane %v317, %v321
    %v323 = vld [vmem:[%s1] sm:$0x3]
    %vm324 = vcmask 261120
    %v326 = vsel %vm324, %v323, 0
    %328 = vmatprep.subr.mxu0 0.0
    %329 = vmatpush1.msra.mxu0 %v313
    %330 = vmatprep.subr.mxu0 0.0
    %331 = vmatpush1.msra.mxu0 %v314
    %332 = vmatprep.subr.mxu0 0.0
    %333 = vmatpush1.msra.mxu0 %v315
    %334 = vmatprep.subr.mxu0 0.0
    %335 = vmatpush1.msra.mxu0 %v316
    %336 = vmatprep.subr.mxu0 0.0
    %337 = vmatpush1.msra.mxu0 0.0
    %338 = vmatprep.subr.mxu0 0.0
    %339 = vmatpush1.msra.mxu0 0.0
    %340 = vmatprep.subr.mxu0 0.0
    %341 = vmatpush1.msra.mxu0 0.0
    %342 = vmatprep.subr.mxu0 0.0
    %343 = vmatpush1.msra.mxu0 0.0
    %344 = vmatprep.subr.mxu0 0.0
    %345 = vmatpush1.msra.mxu0 0.0
    %346 = vmatprep.subr.mxu0 0.0
    %347 = vmatpush1.msra.mxu0 0.0
    %348 = vmatprep.subr.mxu0 0.0
    %349 = vmatpush1.msra.mxu0 0.0
    %350 = vmatprep.subr.mxu0 0.0
    %351 = vmatpush1.msra.mxu0 0.0
    %352 = vmatprep.subr.mxu0 0.0
    %353 = vmatpush1.msra.mxu0 0.0
    %354 = vmatprep.subr.mxu0 0.0
    %355 = vmatpush1.msra.mxu0 0.0
    %356 = vmatprep.subr.mxu0 0.0
    %357 = vmatpush1.msra.mxu0 0.0
    %358 = vmatprep.subr.mxu0 0.0
    %359 = vmatpush1.msra.mxu0 0.0
    %360 = vmatprep.subr.mxu0 0.0
    %361 = vmatpush1.msra.mxu0 0.0
    %362 = vmatprep.subr.mxu0 0.0
    %363 = vmatpush1.msra.mxu0 0.0
    %364 = vmatprep.subr.mxu0 0.0
    %365 = vmatpush1.msra.mxu0 0.0
    %366 = vmatprep.subr.mxu0 0.0
    %367 = vmatpush1.msra.mxu0 0.0
    %368 = vmatprep.subr.mxu0 0.0
    %369 = vmatpush1.msra.mxu0 0.0
    %370 = vmatprep.subr.mxu0 0.0
    %371 = vmatpush1.msra.mxu0 0.0
    %372 = vmatprep.subr.mxu0 0.0
    %373 = vmatpush1.msra.mxu0 0.0
    %374 = vmatprep.subr.mxu0 0.0
    %375 = vmatpush1.msra.mxu0 0.0
    %376 = vmatprep.subr.mxu0 0.0
    %377 = vmatpush1.msra.mxu0 0.0
    %378 = vmatprep.subr.mxu0 0.0
    %379 = vmatpush1.msra.mxu0 0.0
    %380 = vmatprep.subr.mxu0 0.0
    %381 = vmatpush1.msra.mxu0 0.0
    %382 = vmatprep.subr.mxu0 0.0
    %383 = vmatpush1.msra.mxu0 0.0
    %384 = vmatprep.subr.mxu0 0.0
    %385 = vmatpush1.msra.mxu0 0.0
    %386 = vmatprep.subr.mxu0 0.0
    %387 = vmatpush1.msra.mxu0 0.0
    %388 = vmatprep.subr.mxu0 0.0
    %389 = vmatpush1.msra.mxu0 0.0
    %390 = vmatprep.subr.mxu0 0.0
    %391 = vmatpush1.msra.mxu0 0.0
    %392 = vmatprep.mubr.f32.mxu0 0.0
    %393 = vmatmul.mubr.f32.gmra.mrb[0].mxu0 %v326
    %v394 = vpop.f32.mrb[0].mxu0
    %v395 = vadd.f32 0.0, %v394
    %v396 = vpop.f32.mrb[0].mxu0
    %397 = vdwg.mxu0
    %v398 = vld [vmem:[#allocation2] sm:$0x3]
    %v399 = vadd.f32 %v398, %v395
    %v400 = vxor.u32 %v399, 2147483648
    %v401 = vmul.f32 %v400, 1.442695
    %v402 = vpow.pop %v401
    %v403 = vadd.f32 %v402, 1.0
    %v404 = vrcp.pop %v403
    %v405 = vmul.f32 1.0, %v404
    %406 = vrot.lane.b32.xlu0 %v322, 64
    %v407 = vpop.permute.xlu0 %406
    %v409 = vadd.f32 %v395, %v407
    %411 = vrot.lane.b32.xlu0 %v409, 64
    %v412 = vpop.permute.xlu0 %411
    %v414 = vmul.f32 %v405, %v412
    %416 = vrot.lane.b32.xlu0 %v414, 64
    %v417 = vpop.permute.xlu0 %416
    %v419 = vadd.f32 %v398, %v417
    %v420 = vtanh.pop %v419
    %v421 = vsub.f32 1.0, %v405
    %423 = vrot.lane.b32.xlu0 %v420, 96
    %v424 = vpop.permute.xlu0 %423
    %v426 = vmul.f32 %v421, %v424
    %427 = vrot.lane.b32.xlu0 %v323, 32
    %v428 = vpop.permute.xlu0 %427
    %v430 = vmul.f32 %v405, %v428
    %v431 = vadd.f32 %v426, %v430
    %433 = vrot.lane.b32.xlu0 %v431, 96
    %v434 = vpop.permute.xlu0 %433
    %vm436 = vcmask 254976
    %437 = vst.msk [vmem:[#allocation3] sm:$0x3] %vm436, %v434
    %v438 = vsel %vm324, %v434, 0
    %440 = vmatprep.subr.mxu0 0.0
    %441 = vmatpush1.msra.mxu0 %v313
    %442 = vmatprep.subr.mxu0 0.0
    %443 = vmatpush1.msra.mxu0 %v314
    %444 = vmatprep.subr.mxu0 0.0
    %445 = vmatpush1.msra.mxu0 %v315
    %446 = vmatprep.subr.mxu0 0.0
    %447 = vmatpush1.msra.mxu0 %v316
    %448 = vmatprep.subr.mxu0 0.0
    %449 = vmatpush1.msra.mxu0 0.0
    %450 = vmatprep.subr.mxu0 0.0
    %451 = vmatpush1.msra.mxu0 0.0
    %452 = vmatprep.subr.mxu0 0.0
    %453 = vmatpush1.msra.mxu0 0.0
    %454 = vmatprep.subr.mxu0 0.0
    %455 = vmatpush1.msra.mxu0 0.0
    %456 = vmatprep.subr.mxu0 0.0
    %457 = vmatpush1.msra.mxu0 0.0
    %458 = vmatprep.subr.mxu0 0.0
    %459 = vmatpush1.msra.mxu0 0.0
    %460 = vmatprep.subr.mxu0 0.0
    %461 = vmatpush1.msra.mxu0 0.0
    %462 = vmatprep.subr.mxu0 0.0
    %463 = vmatpush1.msra.mxu0 0.0
    %464 = vmatprep.subr.mxu0 0.0
    %465 = vmatpush1.msra.mxu0 0.0
    %466 = vmatprep.subr.mxu0 0.0
    %467 = vmatpush1.msra.mxu0 0.0
    %468 = vmatprep.subr.mxu0 0.0
    %469 = vmatpush1.msra.mxu0 0.0
    %470 = vmatprep.subr.mxu0 0.0
    %471 = vmatpush1.msra.mxu0 0.0
    %472 = vmatprep.subr.mxu0 0.0
    %473 = vmatpush1.msra.mxu0 0.0
    %474 = vmatprep.subr.mxu0 0.0
    %475 = vmatpush1.msra.mxu0 0.0
    %476 = vmatprep.subr.mxu0 0.0
    %477 = vmatpush1.msra.mxu0 0.0
    %478 = vmatprep.subr.mxu0 0.0
    %479 = vmatpush1.msra.mxu0 0.0
    %480 = vmatprep.subr.mxu0 0.0
    %481 = vmatpush1.msra.mxu0 0.0
    %482 = vmatprep.subr.mxu0 0.0
    %483 = vmatpush1.msra.mxu0 0.0
    %484 = vmatprep.subr.mxu0 0.0
    %485 = vmatpush1.msra.mxu0 0.0
    %486 = vmatprep.subr.mxu0 0.0
    %487 = vmatpush1.msra.mxu0 0.0
    %488 = vmatprep.subr.mxu0 0.0
    %489 = vmatpush1.msra.mxu0 0.0
    %490 = vmatprep.subr.mxu0 0.0
    %491 = vmatpush1.msra.mxu0 0.0
    %492 = vmatprep.subr.mxu0 0.0
    %493 = vmatpush1.msra.mxu0 0.0
    %494 = vmatprep.subr.mxu0 0.0
    %495 = vmatpush1.msra.mxu0 0.0
    %496 = vmatprep.subr.mxu0 0.0
    %497 = vmatpush1.msra.mxu0 0.0
    %498 = vmatprep.subr.mxu0 0.0
    %499 = vmatpush1.msra.mxu0 0.0
    %500 = vmatprep.subr.mxu0 0.0
    %501 = vmatpush1.msra.mxu0 0.0
    %502 = vmatprep.subr.mxu0 0.0
    %503 = vmatpush1.msra.mxu0 0.0
    %504 = vmatprep.mubr.f32.mxu0 0.0
    %505 = vmatmul.mubr.f32.gmra.mrb[0].mxu0 %v438
    %v506 = vpop.f32.mrb[0].mxu0
    %v507 = vadd.f32 0.0, %v506
    %v508 = vpop.f32.mrb[0].mxu0
    %509 = vdwg.mxu0
    %s510 = scalar_lea.vmem [#allocation2], 2
    %v511 = vld [vmem:[%s510] sm:$0x3]
    %v512 = vadd.f32 %v511, %v507
    %v513 = vxor.u32 %v512, 2147483648
    %v514 = vmul.f32 %v513, 1.442695
    %v515 = vpow.pop %v514
    %v516 = vadd.f32 %v515, 1.0
    %v517 = vrcp.pop %v516
    %v518 = vmul.f32 1.0, %v517
    %v519 = vadd.f32 %v507, %v407
    %521 = vrot.lane.b32.xlu0 %v519, 64
    %v522 = vpop.permute.xlu0 %521
    %v524 = vmul.f32 %v518, %v522
    %526 = vrot.lane.b32.xlu0 %v524, 64
    %v527 = vpop.permute.xlu0 %526
    %v529 = vadd.f32 %v511, %v527
    %v530 = vtanh.pop %v529
    %v531 = vsub.f32 1.0, %v518
    %533 = vrot.lane.b32.xlu0 %v530, 96
    %v534 = vpop.permute.xlu0 %533
    %v536 = vmul.f32 %v531, %v534
    %v537 = vmul.f32 %v518, %v431
    %v538 = vadd.f32 %v536, %v537
    %540 = vrot.lane.b32.xlu0 %v538, 96
    %v541 = vpop.permute.xlu0 %540
    %s543 = scalar_lea.vmem [#allocation3], 2
    %544 = vst.msk [vmem:[%s543] sm:$0x3] %vm436, %v541
    %v545 = vsel %vm324, %v541, 0
    %547 = vmatprep.subr.mxu0 0.0
    %548 = vmatpush1.msra.mxu0 %v313
    %549 = vmatprep.subr.mxu0 0.0
    %550 = vmatpush1.msra.mxu0 %v314
    %551 = vmatprep.subr.mxu0 0.0
    %552 = vmatpush1.msra.mxu0 %v315
    %553 = vmatprep.subr.mxu0 0.0
    %554 = vmatpush1.msra.mxu0 %v316
    %555 = vmatprep.subr.mxu0 0.0
    %556 = vmatpush1.msra.mxu0 0.0
    %557 = vmatprep.subr.mxu0 0.0
    %558 = vmatpush1.msra.mxu0 0.0
    %559 = vmatprep.subr.mxu0 0.0
    %560 = vmatpush1.msra.mxu0 0.0
    %561 = vmatprep.subr.mxu0 0.0
    %562 = vmatpush1.msra.mxu0 0.0
    %563 = vmatprep.subr.mxu0 0.0
    %564 = vmatpush1.msra.mxu0 0.0
    %565 = vmatprep.subr.mxu0 0.0
    %566 = vmatpush1.msra.mxu0 0.0
    %567 = vmatprep.subr.mxu0 0.0
    %568 = vmatpush1.msra.mxu0 0.0
    %569 = vmatprep.subr.mxu0 0.0
    %570 = vmatpush1.msra.mxu0 0.0
    %571 = vmatprep.subr.mxu0 0.0
    %572 = vmatpush1.msra.mxu0 0.0
    %573 = vmatprep.subr.mxu0 0.0
    %574 = vmatpush1.msra.mxu0 0.0
    %575 = vmatprep.subr.mxu0 0.0
    %576 = vmatpush1.msra.mxu0 0.0
    %577 = vmatprep.subr.mxu0 0.0
    %578 = vmatpush1.msra.mxu0 0.0
    %579 = vmatprep.subr.mxu0 0.0
    %580 = vmatpush1.msra.mxu0 0.0
    %581 = vmatprep.subr.mxu0 0.0
    %582 = vmatpush1.msra.mxu0 0.0
    %583 = vmatprep.subr.mxu0 0.0
    %584 = vmatpush1.msra.mxu0 0.0
    %585 = vmatprep.subr.mxu0 0.0
    %586 = vmatpush1.msra.mxu0 0.0
    %587 = vmatprep.subr.mxu0 0.0
    %588 = vmatpush1.msra.mxu0 0.0
    %589 = vmatprep.subr.mxu0 0.0
    %590 = vmatpush1.msra.mxu0 0.0
    %591 = vmatprep.subr.mxu0 0.0
    %592 = vmatpush1.msra.mxu0 0.0
    %593 = vmatprep.subr.mxu0 0.0
    %594 = vmatpush1.msra.mxu0 0.0
    %595 = vmatprep.subr.mxu0 0.0
    %596 = vmatpush1.msra.mxu0 0.0
    %597 = vmatprep.subr.mxu0 0.0
    %598 = vmatpush1.msra.mxu0 0.0
    %599 = vmatprep.subr.mxu0 0.0
    %600 = vmatpush1.msra.mxu0 0.0
    %601 = vmatprep.subr.mxu0 0.0
    %602 = vmatpush1.msra.mxu0 0.0
    %603 = vmatprep.subr.mxu0 0.0
    %604 = vmatpush1.msra.mxu0 0.0
    %605 = vmatprep.subr.mxu0 0.0
    %606 = vmatpush1.msra.mxu0 0.0
    %607 = vmatprep.subr.mxu0 0.0
    %608 = vmatpush1.msra.mxu0 0.0
    %609 = vmatprep.subr.mxu0 0.0
    %610 = vmatpush1.msra.mxu0 0.0
    %611 = vmatprep.mubr.f32.mxu0 0.0
    %612 = vmatmul.mubr.f32.gmra.mrb[0].mxu0 %v545
    %v613 = vpop.f32.mrb[0].mxu0
    %v614 = vadd.f32 0.0, %v613
    %v615 = vpop.f32.mrb[0].mxu0
    %616 = vdwg.mxu0
    %s617 = scalar_lea.vmem [#allocation2], 4
    %v618 = vld [vmem:[%s617] sm:$0x3]
    %v619 = vadd.f32 %v618, %v614
    %v620 = vxor.u32 %v619, 2147483648
    %v621 = vmul.f32 %v620, 1.442695
    %v622 = vpow.pop %v621
    %v623 = vadd.f32 %v622, 1.0
    %v624 = vrcp.pop %v623
    %v625 = vmul.f32 1.0, %v624
    %v626 = vadd.f32 %v614, %v407
    %628 = vrot.lane.b32.xlu0 %v626, 64
    %v629 = vpop.permute.xlu0 %628
    %v631 = vmul.f32 %v625, %v629
    %633 = vrot.lane.b32.xlu0 %v631, 64
    %v634 = vpop.permute.xlu0 %633
    %v636 = vadd.f32 %v618, %v634
    %v637 = vtanh.pop %v636
    %v638 = vsub.f32 1.0, %v625
    %640 = vrot.lane.b32.xlu0 %v637, 96
    %v641 = vpop.permute.xlu0 %640
    %v643 = vmul.f32 %v638, %v641
    %v644 = vmul.f32 %v625, %v538
    %v645 = vadd.f32 %v643, %v644
    %647 = vrot.lane.b32.xlu0 %v645, 96
    %v648 = vpop.permute.xlu0 %647
    %s650 = scalar_lea.vmem [#allocation3], 4
    %651 = vst.msk [vmem:[%s650] sm:$0x3] %vm436, %v648
    %v652 = vsel %vm324, %v648, 0
    %654 = vmatprep.subr.mxu0 0.0
    %655 = vmatpush1.msra.mxu0 %v313
    %656 = vmatprep.subr.mxu0 0.0
    %657 = vmatpush1.msra.mxu0 %v314
    %658 = vmatprep.subr.mxu0 0.0
    %659 = vmatpush1.msra.mxu0 %v315
    %660 = vmatprep.subr.mxu0 0.0
    %661 = vmatpush1.msra.mxu0 %v316
    %662 = vmatprep.subr.mxu0 0.0
    %663 = vmatpush1.msra.mxu0 0.0
    %664 = vmatprep.subr.mxu0 0.0
    %665 = vmatpush1.msra.mxu0 0.0
    %666 = vmatprep.subr.mxu0 0.0
    %667 = vmatpush1.msra.mxu0 0.0
    %668 = vmatprep.subr.mxu0 0.0
    %669 = vmatpush1.msra.mxu0 0.0
    %670 = vmatprep.subr.mxu0 0.0
    %671 = vmatpush1.msra.mxu0 0.0
    %672 = vmatprep.subr.mxu0 0.0
    %673 = vmatpush1.msra.mxu0 0.0
    %674 = vmatprep.subr.mxu0 0.0
    %675 = vmatpush1.msra.mxu0 0.0
    %676 = vmatprep.subr.mxu0 0.0
    %677 = vmatpush1.msra.mxu0 0.0
    %678 = vmatprep.subr.mxu0 0.0
    %679 = vmatpush1.msra.mxu0 0.0
    %680 = vmatprep.subr.mxu0 0.0
    %681 = vmatpush1.msra.mxu0 0.0
    %682 = vmatprep.subr.mxu0 0.0
    %683 = vmatpush1.msra.mxu0 0.0
    %684 = vmatprep.subr.mxu0 0.0
    %685 = vmatpush1.msra.mxu0 0.0
    %686 = vmatprep.subr.mxu0 0.0
    %687 = vmatpush1.msra.mxu0 0.0
    %688 = vmatprep.subr.mxu0 0.0
    %689 = vmatpush1.msra.mxu0 0.0
    %690 = vmatprep.subr.mxu0 0.0
    %691 = vmatpush1.msra.mxu0 0.0
    %692 = vmatprep.subr.mxu0 0.0
    %693 = vmatpush1.msra.mxu0 0.0
    %694 = vmatprep.subr.mxu0 0.0
    %695 = vmatpush1.msra.mxu0 0.0
    %696 = vmatprep.subr.mxu0 0.0
    %697 = vmatpush1.msra.mxu0 0.0
    %698 = vmatprep.subr.mxu0 0.0
    %699 = vmatpush1.msra.mxu0 0.0
    %700 = vmatprep.subr.mxu0 0.0
    %701 = vmatpush1.msra.mxu0 0.0
    %702 = vmatprep.subr.mxu0 0.0
    %703 = vmatpush1.msra.mxu0 0.0
    %704 = vmatprep.subr.mxu0 0.0
    %705 = vmatpush1.msra.mxu0 0.0
    %706 = vmatprep.subr.mxu0 0.0
    %707 = vmatpush1.msra.mxu0 0.0
    %708 = vmatprep.subr.mxu0 0.0
    %709 = vmatpush1.msra.mxu0 0.0
    %710 = vmatprep.subr.mxu0 0.0
    %711 = vmatpush1.msra.mxu0 0.0
    %712 = vmatprep.subr.mxu0 0.0
    %713 = vmatpush1.msra.mxu0 0.0
    %714 = vmatprep.subr.mxu0 0.0
    %715 = vmatpush1.msra.mxu0 0.0
    %716 = vmatprep.subr.mxu0 0.0
    %717 = vmatpush1.msra.mxu0 0.0
    %718 = vmatprep.mubr.f32.mxu0 0.0
    %719 = vmatmul.mubr.f32.gmra.mrb[0].mxu0 %v652
    %v720 = vpop.f32.mrb[0].mxu0
    %v721 = vadd.f32 0.0, %v720
    %v722 = vpop.f32.mrb[0].mxu0
    %723 = vdwg.mxu0
    %s724 = scalar_lea.vmem [#allocation2], 6
    %v725 = vld [vmem:[%s724] sm:$0x3]
    %v726 = vadd.f32 %v725, %v721
    %v727 = vxor.u32 %v726, 2147483648
    %v728 = vmul.f32 %v727, 1.442695
    %v729 = vpow.pop %v728
    %v730 = vadd.f32 %v729, 1.0
    %v731 = vrcp.pop %v730
    %v732 = vmul.f32 1.0, %v731
    %v733 = vadd.f32 %v721, %v407
    %735 = vrot.lane.b32.xlu0 %v733, 64
    %v736 = vpop.permute.xlu0 %735
    %v738 = vmul.f32 %v732, %v736
    %740 = vrot.lane.b32.xlu0 %v738, 64
    %v741 = vpop.permute.xlu0 %740
    %v743 = vadd.f32 %v725, %v741
    %v744 = vtanh.pop %v743
    %v745 = vsub.f32 1.0, %v732
    %747 = vrot.lane.b32.xlu0 %v744, 96
    %v748 = vpop.permute.xlu0 %747
    %v750 = vmul.f32 %v745, %v748
    %v751 = vmul.f32 %v732, %v645
    %v752 = vadd.f32 %v750, %v751
    %754 = vrot.lane.b32.xlu0 %v752, 96
    %v755 = vpop.permute.xlu0 %754
    %s757 = scalar_lea.vmem [#allocation3], 6
    %758 = vst.msk [vmem:[%s757] sm:$0x3] %vm436, %v755
    %v759 = vsel %vm324, %v755, 0
    %761 = vmatprep.subr.mxu0 0.0
    %762 = vmatpush1.msra.mxu0 %v313
    %763 = vmatprep.subr.mxu0 0.0
    %764 = vmatpush1.msra.mxu0 %v314
    %765 = vmatprep.subr.mxu0 0.0
    %766 = vmatpush1.msra.mxu0 %v315
    %767 = vmatprep.subr.mxu0 0.0
    %768 = vmatpush1.msra.mxu0 %v316
    %769 = vmatprep.subr.mxu0 0.0
    %770 = vmatpush1.msra.mxu0 0.0
    %771 = vmatprep.subr.mxu0 0.0
    %772 = vmatpush1.msra.mxu0 0.0
    %773 = vmatprep.subr.mxu0 0.0
    %774 = vmatpush1.msra.mxu0 0.0
    %775 = vmatprep.subr.mxu0 0.0
    %776 = vmatpush1.msra.mxu0 0.0
    %777 = vmatprep.subr.mxu0 0.0
    %778 = vmatpush1.msra.mxu0 0.0
    %779 = vmatprep.subr.mxu0 0.0
    %780 = vmatpush1.msra.mxu0 0.0
    %781 = vmatprep.subr.mxu0 0.0
    %782 = vmatpush1.msra.mxu0 0.0
    %783 = vmatprep.subr.mxu0 0.0
    %784 = vmatpush1.msra.mxu0 0.0
    %785 = vmatprep.subr.mxu0 0.0
    %786 = vmatpush1.msra.mxu0 0.0
    %787 = vmatprep.subr.mxu0 0.0
    %788 = vmatpush1.msra.mxu0 0.0
    %789 = vmatprep.subr.mxu0 0.0
    %790 = vmatpush1.msra.mxu0 0.0
    %791 = vmatprep.subr.mxu0 0.0
    %792 = vmatpush1.msra.mxu0 0.0
    %793 = vmatprep.subr.mxu0 0.0
    %794 = vmatpush1.msra.mxu0 0.0
    %795 = vmatprep.subr.mxu0 0.0
    %796 = vmatpush1.msra.mxu0 0.0
    %797 = vmatprep.subr.mxu0 0.0
    %798 = vmatpush1.msra.mxu0 0.0
    %799 = vmatprep.subr.mxu0 0.0
    %800 = vmatpush1.msra.mxu0 0.0
    %801 = vmatprep.subr.mxu0 0.0
    %802 = vmatpush1.msra.mxu0 0.0
    %803 = vmatprep.subr.mxu0 0.0
    %804 = vmatpush1.msra.mxu0 0.0
    %805 = vmatprep.subr.mxu0 0.0
    %806 = vmatpush1.msra.mxu0 0.0
    %807 = vmatprep.subr.mxu0 0.0
    %808 = vmatpush1.msra.mxu0 0.0
    %809 = vmatprep.subr.mxu0 0.0
    %810 = vmatpush1.msra.mxu0 0.0
    %811 = vmatprep.subr.mxu0 0.0
    %812 = vmatpush1.msra.mxu0 0.0
    %813 = vmatprep.subr.mxu0 0.0
    %814 = vmatpush1.msra.mxu0 0.0
    %815 = vmatprep.subr.mxu0 0.0
    %816 = vmatpush1.msra.mxu0 0.0
    %817 = vmatprep.subr.mxu0 0.0
    %818 = vmatpush1.msra.mxu0 0.0
    %819 = vmatprep.subr.mxu0 0.0
    %820 = vmatpush1.msra.mxu0 0.0
    %821 = vmatprep.subr.mxu0 0.0
    %822 = vmatpush1.msra.mxu0 0.0
    %823 = vmatprep.subr.mxu0 0.0
    %824 = vmatpush1.msra.mxu0 0.0
    %825 = vmatprep.mubr.f32.mxu0 0.0
    %826 = vmatmul.mubr.f32.gmra.mrb[0].mxu0 %v759
    %v827 = vpop.f32.mrb[0].mxu0
    %v828 = vadd.f32 0.0, %v827
    %v829 = vpop.f32.mrb[0].mxu0
    %830 = vdwg.mxu0
    %s831 = scalar_lea.vmem [#allocation2], 8
    %v832 = vld [vmem:[%s831] sm:$0x3]
    %v833 = vadd.f32 %v832, %v828
    %v834 = vxor.u32 %v833, 2147483648
    %v835 = vmul.f32 %v834, 1.442695
    %v836 = vpow.pop %v835
    %v837 = vadd.f32 %v836, 1.0
    %v838 = vrcp.pop %v837
    %v839 = vmul.f32 1.0, %v838
    %v840 = vadd.f32 %v828, %v407
    %842 = vrot.lane.b32.xlu0 %v840, 64
    %v843 = vpop.permute.xlu0 %842
    %v845 = vmul.f32 %v839, %v843
    %847 = vrot.lane.b32.xlu0 %v845, 64
    %v848 = vpop.permute.xlu0 %847
    %v850 = vadd.f32 %v832, %v848
    %v851 = vtanh.pop %v850
    %v852 = vsub.f32 1.0, %v839
    %854 = vrot.lane.b32.xlu0 %v851, 96
    %v855 = vpop.permute.xlu0 %854
    %v857 = vmul.f32 %v852, %v855
    %v858 = vmul.f32 %v839, %v752
    %v859 = vadd.f32 %v857, %v858
    %861 = vrot.lane.b32.xlu0 %v859, 96
    %v862 = vpop.permute.xlu0 %861
    %s864 = scalar_lea.vmem [#allocation3], 8
    %865 = vst.msk [vmem:[%s864] sm:$0x3] %vm436, %v862
    %v866 = vsel %vm324, %v862, 0
    %868 = vmatprep.subr.mxu0 0.0
    %869 = vmatpush1.msra.mxu0 %v313
    %870 = vmatprep.subr.mxu0 0.0
    %871 = vmatpush1.msra.mxu0 %v314
    %872 = vmatprep.subr.mxu0 0.0
    %873 = vmatpush1.msra.mxu0 %v315
    %874 = vmatprep.subr.mxu0 0.0
    %875 = vmatpush1.msra.mxu0 %v316
    %876 = vmatprep.subr.mxu0 0.0
    %877 = vmatpush1.msra.mxu0 0.0
    %878 = vmatprep.subr.mxu0 0.0
    %879 = vmatpush1.msra.mxu0 0.0
    %880 = vmatprep.subr.mxu0 0.0
    %881 = vmatpush1.msra.mxu0 0.0
    %882 = vmatprep.subr.mxu0 0.0
    %883 = vmatpush1.msra.mxu0 0.0
    %884 = vmatprep.subr.mxu0 0.0
    %885 = vmatpush1.msra.mxu0 0.0
    %886 = vmatprep.subr.mxu0 0.0
    %887 = vmatpush1.msra.mxu0 0.0
    %888 = vmatprep.subr.mxu0 0.0
    %889 = vmatpush1.msra.mxu0 0.0
    %890 = vmatprep.subr.mxu0 0.0
    %891 = vmatpush1.msra.mxu0 0.0
    %892 = vmatprep.subr.mxu0 0.0
    %893 = vmatpush1.msra.mxu0 0.0
    %894 = vmatprep.subr.mxu0 0.0
    %895 = vmatpush1.msra.mxu0 0.0
    %896 = vmatprep.subr.mxu0 0.0
    %897 = vmatpush1.msra.mxu0 0.0
    %898 = vmatprep.subr.mxu0 0.0
    %899 = vmatpush1.msra.mxu0 0.0
    %900 = vmatprep.subr.mxu0 0.0
    %901 = vmatpush1.msra.mxu0 0.0
    %902 = vmatprep.subr.mxu0 0.0
    %903 = vmatpush1.msra.mxu0 0.0
    %904 = vmatprep.subr.mxu0 0.0
    %905 = vmatpush1.msra.mxu0 0.0
    %906 = vmatprep.subr.mxu0 0.0
    %907 = vmatpush1.msra.mxu0 0.0
    %908 = vmatprep.subr.mxu0 0.0
    %909 = vmatpush1.msra.mxu0 0.0
    %910 = vmatprep.subr.mxu0 0.0
    %911 = vmatpush1.msra.mxu0 0.0
    %912 = vmatprep.subr.mxu0 0.0
    %913 = vmatpush1.msra.mxu0 0.0
    %914 = vmatprep.subr.mxu0 0.0
    %915 = vmatpush1.msra.mxu0 0.0
    %916 = vmatprep.subr.mxu0 0.0
    %917 = vmatpush1.msra.mxu0 0.0
    %918 = vmatprep.subr.mxu0 0.0
    %919 = vmatpush1.msra.mxu0 0.0
    %920 = vmatprep.subr.mxu0 0.0
    %921 = vmatpush1.msra.mxu0 0.0
    %922 = vmatprep.subr.mxu0 0.0
    %923 = vmatpush1.msra.mxu0 0.0
    %924 = vmatprep.subr.mxu0 0.0
    %925 = vmatpush1.msra.mxu0 0.0
    %926 = vmatprep.subr.mxu0 0.0
    %927 = vmatpush1.msra.mxu0 0.0
    %928 = vmatprep.subr.mxu0 0.0
    %929 = vmatpush1.msra.mxu0 0.0
    %930 = vmatprep.subr.mxu0 0.0
    %931 = vmatpush1.msra.mxu0 0.0
    %932 = vmatprep.mubr.f32.mxu0 0.0
    %933 = vmatmul.mubr.f32.gmra.mrb[0].mxu0 %v866
    %v934 = vpop.f32.mrb[0].mxu0
    %v935 = vadd.f32 0.0, %v934
    %v936 = vpop.f32.mrb[0].mxu0
    %937 = vdwg.mxu0
    %s938 = scalar_lea.vmem [#allocation2], 10
    %v939 = vld [vmem:[%s938] sm:$0x3]
    %v940 = vadd.f32 %v939, %v935
    %v941 = vxor.u32 %v940, 2147483648
    %v942 = vmul.f32 %v941, 1.442695
    %v943 = vpow.pop %v942
    %v944 = vadd.f32 %v943, 1.0
    %v945 = vrcp.pop %v944
    %v946 = vmul.f32 1.0, %v945
    %v947 = vadd.f32 %v935, %v407
    %949 = vrot.lane.b32.xlu0 %v947, 64
    %v950 = vpop.permute.xlu0 %949
    %v952 = vmul.f32 %v946, %v950
    %954 = vrot.lane.b32.xlu0 %v952, 64
    %v955 = vpop.permute.xlu0 %954
    %v957 = vadd.f32 %v939, %v955
    %v958 = vtanh.pop %v957
    %v959 = vsub.f32 1.0, %v946
    %961 = vrot.lane.b32.xlu0 %v958, 96
    %v962 = vpop.permute.xlu0 %961
    %v964 = vmul.f32 %v959, %v962
    %v965 = vmul.f32 %v946, %v859
    %v966 = vadd.f32 %v964, %v965
    %968 = vrot.lane.b32.xlu0 %v966, 96
    %v969 = vpop.permute.xlu0 %968
    %s971 = scalar_lea.vmem [#allocation3], 10
    %972 = vst.msk [vmem:[%s971] sm:$0x3] %vm436, %v969
    %v973 = vsel %vm324, %v969, 0
    %975 = vmatprep.subr.mxu0 0.0
    %976 = vmatpush1.msra.mxu0 %v313
    %977 = vmatprep.subr.mxu0 0.0
    %978 = vmatpush1.msra.mxu0 %v314
    %979 = vmatprep.subr.mxu0 0.0
    %980 = vmatpush1.msra.mxu0 %v315
    %981 = vmatprep.subr.mxu0 0.0
    %982 = vmatpush1.msra.mxu0 %v316
    %983 = vmatprep.subr.mxu0 0.0
    %984 = vmatpush1.msra.mxu0 0.0
    %985 = vmatprep.subr.mxu0 0.0
    %986 = vmatpush1.msra.mxu0 0.0
    %987 = vmatprep.subr.mxu0 0.0
    %988 = vmatpush1.msra.mxu0 0.0
    %989 = vmatprep.subr.mxu0 0.0
    %990 = vmatpush1.msra.mxu0 0.0
    %991 = vmatprep.subr.mxu0 0.0
    %992 = vmatpush1.msra.mxu0 0.0
    %993 = vmatprep.subr.mxu0 0.0
    %994 = vmatpush1.msra.mxu0 0.0
    %995 = vmatprep.subr.mxu0 0.0
    %996 = vmatpush1.msra.mxu0 0.0
    %997 = vmatprep.subr.mxu0 0.0
    %998 = vmatpush1.msra.mxu0 0.0
    %999 = vmatprep.subr.mxu0 0.0
    %1000 = vmatpush1.msra.mxu0 0.0
    %1001 = vmatprep.subr.mxu0 0.0
    %1002 = vmatpush1.msra.mxu0 0.0
    %1003 = vmatprep.subr.mxu0 0.0
    %1004 = vmatpush1.msra.mxu0 0.0
    %1005 = vmatprep.subr.mxu0 0.0
    %1006 = vmatpush1.msra.mxu0 0.0
    %1007 = vmatprep.subr.mxu0 0.0
    %1008 = vmatpush1.msra.mxu0 0.0
    %1009 = vmatprep.subr.mxu0 0.0
    %1010 = vmatpush1.msra.mxu0 0.0
    %1011 = vmatprep.subr.mxu0 0.0
    %1012 = vmatpush1.msra.mxu0 0.0
    %1013 = vmatprep.subr.mxu0 0.0
    %1014 = vmatpush1.msra.mxu0 0.0
    %1015 = vmatprep.subr.mxu0 0.0
    %1016 = vmatpush1.msra.mxu0 0.0
    %1017 = vmatprep.subr.mxu0 0.0
    %1018 = vmatpush1.msra.mxu0 0.0
    %1019 = vmatprep.subr.mxu0 0.0
    %1020 = vmatpush1.msra.mxu0 0.0
    %1021 = vmatprep.subr.mxu0 0.0
    %1022 = vmatpush1.msra.mxu0 0.0
    %1023 = vmatprep.subr.mxu0 0.0
    %1024 = vmatpush1.msra.mxu0 0.0
    %1025 = vmatprep.subr.mxu0 0.0
    %1026 = vmatpush1.msra.mxu0 0.0
    %1027 = vmatprep.subr.mxu0 0.0
    %1028 = vmatpush1.msra.mxu0 0.0
    %1029 = vmatprep.subr.mxu0 0.0
    %1030 = vmatpush1.msra.mxu0 0.0
    %1031 = vmatprep.subr.mxu0 0.0
    %1032 = vmatpush1.msra.mxu0 0.0
    %1033 = vmatprep.subr.mxu0 0.0
    %1034 = vmatpush1.msra.mxu0 0.0
    %1035 = vmatprep.subr.mxu0 0.0
    %1036 = vmatpush1.msra.mxu0 0.0
    %1037 = vmatprep.subr.mxu0 0.0
    %1038 = vmatpush1.msra.mxu0 0.0
    %1039 = vmatprep.mubr.f32.mxu0 0.0
    %1040 = vmatmul.mubr.f32.gmra.mrb[0].mxu0 %v973
    %v1041 = vpop.f32.mrb[0].mxu0
    %v1042 = vadd.f32 0.0, %v1041
    %v1043 = vpop.f32.mrb[0].mxu0
    %1044 = vdwg.mxu0
    %s1045 = scalar_lea.vmem [#allocation2], 12
    %v1046 = vld [vmem:[%s1045] sm:$0x3]
    %v1047 = vadd.f32 %v1046, %v1042
    %v1048 = vxor.u32 %v1047, 2147483648
    %v1049 = vmul.f32 %v1048, 1.442695
    %v1050 = vpow.pop %v1049
    %v1051 = vadd.f32 %v1050, 1.0
    %v1052 = vrcp.pop %v1051
    %v1053 = vmul.f32 1.0, %v1052
    %v1054 = vadd.f32 %v1042, %v407
    %1056 = vrot.lane.b32.xlu0 %v1054, 64
    %v1057 = vpop.permute.xlu0 %1056
    %v1059 = vmul.f32 %v1053, %v1057
    %1061 = vrot.lane.b32.xlu0 %v1059, 64
    %v1062 = vpop.permute.xlu0 %1061
    %v1064 = vadd.f32 %v1046, %v1062
    %v1065 = vtanh.pop %v1064
    %v1066 = vsub.f32 1.0, %v1053
    %1068 = vrot.lane.b32.xlu0 %v1065, 96
    %v1069 = vpop.permute.xlu0 %1068
    %v1071 = vmul.f32 %v1066, %v1069
    %v1072 = vmul.f32 %v1053, %v966
    %v1073 = vadd.f32 %v1071, %v1072
    %1075 = vrot.lane.b32.xlu0 %v1073, 96
    %v1076 = vpop.permute.xlu0 %1075
    %s1078 = scalar_lea.vmem [#allocation3], 12
    %1079 = vst.msk [vmem:[%s1078] sm:$0x3] %vm436, %v1076
    %v1080 = vsel %vm324, %v1076, 0
    %1082 = vmatprep.subr.mxu0 0.0
    %1083 = vmatpush1.msra.mxu0 %v313
    %1084 = vmatprep.subr.mxu0 0.0
    %1085 = vmatpush1.msra.mxu0 %v314
    %1086 = vmatprep.subr.mxu0 0.0
    %1087 = vmatpush1.msra.mxu0 %v315
    %1088 = vmatprep.subr.mxu0 0.0
    %1089 = vmatpush1.msra.mxu0 %v316
    %1090 = vmatprep.subr.mxu0 0.0
    %1091 = vmatpush1.msra.mxu0 0.0
    %1092 = vmatprep.subr.mxu0 0.0
    %1093 = vmatpush1.msra.mxu0 0.0
    %1094 = vmatprep.subr.mxu0 0.0
    %1095 = vmatpush1.msra.mxu0 0.0
    %1096 = vmatprep.subr.mxu0 0.0
    %1097 = vmatpush1.msra.mxu0 0.0
    %1098 = vmatprep.subr.mxu0 0.0
    %1099 = vmatpush1.msra.mxu0 0.0
    %1100 = vmatprep.subr.mxu0 0.0
    %1101 = vmatpush1.msra.mxu0 0.0
    %1102 = vmatprep.subr.mxu0 0.0
    %1103 = vmatpush1.msra.mxu0 0.0
    %1104 = vmatprep.subr.mxu0 0.0
    %1105 = vmatpush1.msra.mxu0 0.0
    %1106 = vmatprep.subr.mxu0 0.0
    %1107 = vmatpush1.msra.mxu0 0.0
    %1108 = vmatprep.subr.mxu0 0.0
    %1109 = vmatpush1.msra.mxu0 0.0
    %1110 = vmatprep.subr.mxu0 0.0
    %1111 = vmatpush1.msra.mxu0 0.0
    %1112 = vmatprep.subr.mxu0 0.0
    %1113 = vmatpush1.msra.mxu0 0.0
    %1114 = vmatprep.subr.mxu0 0.0
    %1115 = vmatpush1.msra.mxu0 0.0
    %1116 = vmatprep.subr.mxu0 0.0
    %1117 = vmatpush1.msra.mxu0 0.0
    %1118 = vmatprep.subr.mxu0 0.0
    %1119 = vmatpush1.msra.mxu0 0.0
    %1120 = vmatprep.subr.mxu0 0.0
    %1121 = vmatpush1.msra.mxu0 0.0
    %1122 = vmatprep.subr.mxu0 0.0
    %1123 = vmatpush1.msra.mxu0 0.0
    %1124 = vmatprep.subr.mxu0 0.0
    %1125 = vmatpush1.msra.mxu0 0.0
    %1126 = vmatprep.subr.mxu0 0.0
    %1127 = vmatpush1.msra.mxu0 0.0
    %1128 = vmatprep.subr.mxu0 0.0
    %1129 = vmatpush1.msra.mxu0 0.0
    %1130 = vmatprep.subr.mxu0 0.0
    %1131 = vmatpush1.msra.mxu0 0.0
    %1132 = vmatprep.subr.mxu0 0.0
    %1133 = vmatpush1.msra.mxu0 0.0
    %1134 = vmatprep.subr.mxu0 0.0
    %1135 = vmatpush1.msra.mxu0 0.0
    %1136 = vmatprep.subr.mxu0 0.0
    %1137 = vmatpush1.msra.mxu0 0.0
    %1138 = vmatprep.subr.mxu0 0.0
    %1139 = vmatpush1.msra.mxu0 0.0
    %1140 = vmatprep.subr.mxu0 0.0
    %1141 = vmatpush1.msra.mxu0 0.0
    %1142 = vmatprep.subr.mxu0 0.0
    %1143 = vmatpush1.msra.mxu0 0.0
    %1144 = vmatprep.subr.mxu0 0.0
    %1145 = vmatpush1.msra.mxu0 0.0
    %1146 = vmatprep.mubr.f32.mxu0 0.0
    %1147 = vmatmul.mubr.f32.gmra.mrb[0].mxu0 %v1080
    %v1148 = vpop.f32.mrb[0].mxu0
    %v1149 = vadd.f32 0.0, %v1148
    %v1150 = vpop.f32.mrb[0].mxu0
    %1151 = vdwg.mxu0
    %s1152 = scalar_lea.vmem [#allocation2], 14
    %v1153 = vld [vmem:[%s1152] sm:$0x3]
    %v1154 = vadd.f32 %v1153, %v1149
    %v1155 = vxor.u32 %v1154, 2147483648
    %v1156 = vmul.f32 %v1155, 1.442695
    %v1157 = vpow.pop %v1156
    %v1158 = vadd.f32 %v1157, 1.0
    %v1159 = vrcp.pop %v1158
    %v1160 = vmul.f32 1.0, %v1159
    %v1161 = vadd.f32 %v1149, %v407
    %1163 = vrot.lane.b32.xlu0 %v1161, 64
    %v1164 = vpop.permute.xlu0 %1163
    %v1166 = vmul.f32 %v1160, %v1164
    %1168 = vrot.lane.b32.xlu0 %v1166, 64
    %v1169 = vpop.permute.xlu0 %1168
    %v1171 = vadd.f32 %v1153, %v1169
    %v1172 = vtanh.pop %v1171
    %v1173 = vsub.f32 1.0, %v1160
    %1175 = vrot.lane.b32.xlu0 %v1172, 96
    %v1176 = vpop.permute.xlu0 %1175
    %v1178 = vmul.f32 %v1173, %v1176
    %v1179 = vmul.f32 %v1160, %v1073
    %v1180 = vadd.f32 %v1178, %v1179
    %1182 = vrot.lane.b32.xlu0 %v1180, 96
    %v1183 = vpop.permute.xlu0 %1182
    %s1185 = scalar_lea.vmem [#allocation3], 14
    %1186 = vst.msk [vmem:[%s1185] sm:$0x3] %vm436, %v1183
    %1187 = vst.msk [vmem:[#allocation17] sm:$0x3] %vm436, %v1183
    %v1188 = vld [vmem:[#allocation3] sm:$0x3]
    %v1189 = vld [vmem:[#allocation3 + $0x2] sm:$0x3]
    %v1190 = vld [vmem:[#allocation3 + $0x4] sm:$0x3]
    %v1191 = vld [vmem:[#allocation3 + $0x6] sm:$0x3]
    %v1192 = vld [vmem:[#allocation3 + $0x8] sm:$0x3]
    %v1193 = vld [vmem:[#allocation3 + $0xa] sm:$0x3]
    %v1194 = vld [vmem:[#allocation3 + $0xc] sm:$0x3]
    %v1195 = vld [vmem:[#allocation3 + $0xe] sm:$0x3]
    %v1196 = vld [vmem:[%s6] sm:$0xff]
    %v1197 = vld [vmem:[%s6 + $0x8] sm:$0xff]
    %v1198 = vld [vmem:[%s6 + $0x10] sm:$0xff]
    %v1199 = vld [vmem:[%s6 + $0x18] sm:$0xff]
    %v1200 = vld [vmem:[#allocation11] sm:$0x1]
    %v1202 = vlaneseq
    %v1203 = vshrl.u32 %v1202, 7
    %v1204 = vsub.s32 0, %v1203
    %v1205 = vrot.slane %v1200, %v1204
    %v1215 = vcombine.low %v1188, %v1189
    %v1216 = vcombine.low %v1190, %v1191
    %v1218 = vunpack.c.l.s4 1983009808
    %v1219 = vunpack.c.0.s8 %v1218
    %v1220 = vlaneseq
    %v1221 = vshrl.u32 %v1220, 7
    %v1222 = vsub.s32 %v1219, %v1221
    %v1223 = vrot.slane %v1215, %v1222
    %v1225 = vunpack.c.l.s4 1983009808
    %v1226 = vunpack.c.0.s8 %v1225
    %v1227 = vlaneseq
    %v1228 = vshrl.u32 %v1227, 7
    %v1229 = vsub.s32 %v1226, %v1228
    %v1230 = vrot.slane %v1216, %v1229
    %v1231 = vcombine.low %v1223, %v1230
    %v1232 = vcombine.low %v1192, %v1193
    %v1233 = vcombine.low %v1194, %v1195
    %v1235 = vunpack.c.l.s4 1983009808
    %v1236 = vunpack.c.0.s8 %v1235
    %v1237 = vlaneseq
    %v1238 = vshrl.u32 %v1237, 7
    %v1239 = vsub.s32 %v1236, %v1238
    %v1240 = vrot.slane %v1232, %v1239
    %v1242 = vunpack.c.l.s4 1983009808
    %v1243 = vunpack.c.0.s8 %v1242
    %v1244 = vlaneseq
    %v1245 = vshrl.u32 %v1244, 7
    %v1246 = vsub.s32 %v1243, %v1245
    %v1247 = vrot.slane %v1233, %v1246
    %v1248 = vcombine.low %v1240, %v1247
    %v1249 = vsel %vm324, %v1231, 0
    %v1251 = vsel %vm324, %v1248, 0
    %1253 = vmatprep.subr.mxu0 0.0
    %1254 = vmatpush1.msra.mxu0 %v1196
    %1255 = vmatprep.subr.mxu0 0.0
    %1256 = vmatpush1.msra.mxu0 %v1197
    %1257 = vmatprep.subr.mxu0 0.0
    %1258 = vmatpush1.msra.mxu0 %v1198
    %1259 = vmatprep.subr.mxu0 0.0
    %1260 = vmatpush1.msra.mxu0 %v1199
    %1261 = vmatprep.subr.mxu0 0.0
    %1262 = vmatpush1.msra.mxu0 0.0
    %1263 = vmatprep.subr.mxu0 0.0
    %1264 = vmatpush1.msra.mxu0 0.0
    %1265 = vmatprep.subr.mxu0 0.0
    %1266 = vmatpush1.msra.mxu0 0.0
    %1267 = vmatprep.subr.mxu0 0.0
    %1268 = vmatpush1.msra.mxu0 0.0
    %1269 = vmatprep.subr.mxu0 0.0
    %1270 = vmatpush1.msra.mxu0 0.0
    %1271 = vmatprep.subr.mxu0 0.0
    %1272 = vmatpush1.msra.mxu0 0.0
    %1273 = vmatprep.subr.mxu0 0.0
    %1274 = vmatpush1.msra.mxu0 0.0
    %1275 = vmatprep.subr.mxu0 0.0
    %1276 = vmatpush1.msra.mxu0 0.0
    %1277 = vmatprep.subr.mxu0 0.0
    %1278 = vmatpush1.msra.mxu0 0.0
    %1279 = vmatprep.subr.mxu0 0.0
    %1280 = vmatpush1.msra.mxu0 0.0
    %1281 = vmatprep.subr.mxu0 0.0
    %1282 = vmatpush1.msra.mxu0 0.0
    %1283 = vmatprep.subr.mxu0 0.0
    %1284 = vmatpush1.msra.mxu0 0.0
    %1285 = vmatprep.subr.mxu0 0.0
    %1286 = vmatpush1.msra.mxu0 0.0
    %1287 = vmatprep.subr.mxu0 0.0
    %1288 = vmatpush1.msra.mxu0 0.0
    %1289 = vmatprep.subr.mxu0 0.0
    %1290 = vmatpush1.msra.mxu0 0.0
    %1291 = vmatprep.subr.mxu0 0.0
    %1292 = vmatpush1.msra.mxu0 0.0
    %1293 = vmatprep.subr.mxu0 0.0
    %1294 = vmatpush1.msra.mxu0 0.0
    %1295 = vmatprep.subr.mxu0 0.0
    %1296 = vmatpush1.msra.mxu0 0.0
    %1297 = vmatprep.subr.mxu0 0.0
    %1298 = vmatpush1.msra.mxu0 0.0
    %1299 = vmatprep.subr.mxu0 0.0
    %1300 = vmatpush1.msra.mxu0 0.0
    %1301 = vmatprep.subr.mxu0 0.0
    %1302 = vmatpush1.msra.mxu0 0.0
    %1303 = vmatprep.subr.mxu0 0.0
    %1304 = vmatpush1.msra.mxu0 0.0
    %1305 = vmatprep.subr.mxu0 0.0
    %1306 = vmatpush1.msra.mxu0 0.0
    %1307 = vmatprep.subr.mxu0 0.0
    %1308 = vmatpush1.msra.mxu0 0.0
    %1309 = vmatprep.subr.mxu0 0.0
    %1310 = vmatpush1.msra.mxu0 0.0
    %1311 = vmatprep.subr.mxu0 0.0
    %1312 = vmatpush1.msra.mxu0 0.0
    %1313 = vmatprep.subr.mxu0 0.0
    %1314 = vmatpush1.msra.mxu0 0.0
    %1315 = vmatprep.subr.mxu0 0.0
    %1316 = vmatpush1.msra.mxu0 0.0
    %1317 = vmatprep.mubr.f32.mxu0 0.0
    %1318 = vmatmul.mubr.f32.gmra.mrb[0].mxu0 %v1249
    %v1319 = vpop.f32.mrb[0].mxu0
    %v1320 = vadd.f32 %v1205, %v1319
    %v1321 = vpop.f32.mrb[0].mxu0
    %1322 = vmatprep.mubr.f32.mxu0 0.0
    %1323 = vmatmul.mubr.f32.gmra.mrb[0].mxu0 %v1251
    %v1324 = vpop.f32.mrb[0].mxu0
    %v1325 = vadd.f32 %v1205, %v1324
    %v1326 = vpop.f32.mrb[0].mxu0
    %1327 = vdwg.mxu0
    %v1330 = vcombine.high %v1320, %v1320
    %v1332 = vunpack.c.l.s4 1983009808
    %v1333 = vunpack.c.0.s8 %v1332
    %v1334 = vlaneseq
    %v1335 = vshrl.u32 %v1334, 7
    %v1336 = vsub.s32 %v1333, %v1335
    %v1337 = vrot.slane %v1320, %v1336
    %v1339 = vunpack.c.l.s4 1983009808
    %v1340 = vunpack.c.0.s8 %v1339
    %v1341 = vlaneseq
    %v1342 = vshrl.u32 %v1341, 7
    %v1343 = vsub.s32 %v1340, %v1342
    %v1344 = vrot.slane %v1330, %v1343
    %v1345 = vcombine.high %v1337, %v1337
    %v1346 = vcombine.high %v1344, %v1344
    %v1347 = vcombine.high %v1325, %v1325
    %v1349 = vunpack.c.l.s4 1983009808
    %v1350 = vunpack.c.0.s8 %v1349
    %v1351 = vlaneseq
    %v1352 = vshrl.u32 %v1351, 7
    %v1353 = vsub.s32 %v1350, %v1352
    %v1354 = vrot.slane %v1325, %v1353
    %v1356 = vunpack.c.l.s4 1983009808
    %v1357 = vunpack.c.0.s8 %v1356
    %v1358 = vlaneseq
    %v1359 = vshrl.u32 %v1358, 7
    %v1360 = vsub.s32 %v1357, %v1359
    %v1361 = vrot.slane %v1347, %v1360
    %v1362 = vcombine.high %v1354, %v1354
    %v1363 = vcombine.high %v1361, %v1361
    %1372 = vst.msk [vmem:[#allocation2] sm:$0x3] %vm304, %v1337
    %1373 = vst.msk [vmem:[#allocation2 + $0x2] sm:$0x3] %vm304, %v1345
    %1374 = vst.msk [vmem:[#allocation2 + $0x4] sm:$0x3] %vm304, %v1344
    %1375 = vst.msk [vmem:[#allocation2 + $0x6] sm:$0x3] %vm304, %v1346
    %1376 = vst.msk [vmem:[#allocation2 + $0x8] sm:$0x3] %vm304, %v1354
    %1377 = vst.msk [vmem:[#allocation2 + $0xa] sm:$0x3] %vm304, %v1362
    %1378 = vst.msk [vmem:[#allocation2 + $0xc] sm:$0x3] %vm304, %v1361
    %1379 = vst.msk [vmem:[#allocation2 + $0xe] sm:$0x3] %vm304, %v1363
    %v1380 = vld [vmem:[#allocation10] sm:$0xff]
    %v1381 = vld [vmem:[#allocation10 + $0x8] sm:$0xff]
    %v1382 = vld [vmem:[#allocation10 + $0x10] sm:$0xff]
    %v1383 = vld [vmem:[#allocation10 + $0x18] sm:$0xff]
    %v1384 = vld [vmem:[#allocation13] sm:$0x1]
    %v1386 = vlaneseq
    %v1387 = vshrl.u32 %v1386, 7
    %v1388 = vsub.s32 0, %v1387
    %v1389 = vrot.slane %v1384, %v1388
    %s1390 = scalar_lea.vmem %s1, 2
    %v1391 = vld [vmem:[%s1390] sm:$0x3]
    %v1393 = vsel %vm324, %v1391, 0
    %1395 = vmatprep.subr.mxu0 0.0
    %1396 = vmatpush1.msra.mxu0 %v1380
    %1397 = vmatprep.subr.mxu0 0.0
    %1398 = vmatpush1.msra.mxu0 %v1381
    %1399 = vmatprep.subr.mxu0 0.0
    %1400 = vmatpush1.msra.mxu0 %v1382
    %1401 = vmatprep.subr.mxu0 0.0
    %1402 = vmatpush1.msra.mxu0 %v1383
    %1403 = vmatprep.subr.mxu0 0.0
    %1404 = vmatpush1.msra.mxu0 0.0
    %1405 = vmatprep.subr.mxu0 0.0
    %1406 = vmatpush1.msra.mxu0 0.0
    %1407 = vmatprep.subr.mxu0 0.0
    %1408 = vmatpush1.msra.mxu0 0.0
    %1409 = vmatprep.subr.mxu0 0.0
    %1410 = vmatpush1.msra.mxu0 0.0
    %1411 = vmatprep.subr.mxu0 0.0
    %1412 = vmatpush1.msra.mxu0 0.0
    %1413 = vmatprep.subr.mxu0 0.0
    %1414 = vmatpush1.msra.mxu0 0.0
    %1415 = vmatprep.subr.mxu0 0.0
    %1416 = vmatpush1.msra.mxu0 0.0
    %1417 = vmatprep.subr.mxu0 0.0
    %1418 = vmatpush1.msra.mxu0 0.0
    %1419 = vmatprep.subr.mxu0 0.0
    %1420 = vmatpush1.msra.mxu0 0.0
    %1421 = vmatprep.subr.mxu0 0.0
    %1422 = vmatpush1.msra.mxu0 0.0
    %1423 = vmatprep.subr.mxu0 0.0
    %1424 = vmatpush1.msra.mxu0 0.0
    %1425 = vmatprep.subr.mxu0 0.0
    %1426 = vmatpush1.msra.mxu0 0.0
    %1427 = vmatprep.subr.mxu0 0.0
    %1428 = vmatpush1.msra.mxu0 0.0
    %1429 = vmatprep.subr.mxu0 0.0
    %1430 = vmatpush1.msra.mxu0 0.0
    %1431 = vmatprep.subr.mxu0 0.0
    %1432 = vmatpush1.msra.mxu0 0.0
    %1433 = vmatprep.subr.mxu0 0.0
    %1434 = vmatpush1.msra.mxu0 0.0
    %1435 = vmatprep.subr.mxu0 0.0
    %1436 = vmatpush1.msra.mxu0 0.0
    %1437 = vmatprep.subr.mxu0 0.0
    %1438 = vmatpush1.msra.mxu0 0.0
    %1439 = vmatprep.subr.mxu0 0.0
    %1440 = vmatpush1.msra.mxu0 0.0
    %1441 = vmatprep.subr.mxu0 0.0
    %1442 = vmatpush1.msra.mxu0 0.0
    %1443 = vmatprep.subr.mxu0 0.0
    %1444 = vmatpush1.msra.mxu0 0.0
    %1445 = vmatprep.subr.mxu0 0.0
    %1446 = vmatpush1.msra.mxu0 0.0
    %1447 = vmatprep.subr.mxu0 0.0
    %1448 = vmatpush1.msra.mxu0 0.0
    %1449 = vmatprep.subr.mxu0 0.0
    %1450 = vmatpush1.msra.mxu0 0.0
    %1451 = vmatprep.subr.mxu0 0.0
    %1452 = vmatpush1.msra.mxu0 0.0
    %1453 = vmatprep.subr.mxu0 0.0
    %1454 = vmatpush1.msra.mxu0 0.0
    %1455 = vmatprep.subr.mxu0 0.0
    %1456 = vmatpush1.msra.mxu0 0.0
    %1457 = vmatprep.subr.mxu0 0.0
    %1458 = vmatpush1.msra.mxu0 0.0
    %1459 = vmatprep.mubr.f32.mxu0 0.0
    %1460 = vmatmul.mubr.f32.gmra.mrb[0].mxu0 %v1393
    %v1461 = vpop.f32.mrb[0].mxu0
    %v1462 = vadd.f32 0.0, %v1461
    %v1463 = vpop.f32.mrb[0].mxu0
    %1464 = vdwg.mxu0
    %v1465 = vld [vmem:[#allocation2] sm:$0x3]
    %v1466 = vadd.f32 %v1465, %v1462
    %v1467 = vxor.u32 %v1466, 2147483648
    %v1468 = vmul.f32 %v1467, 1.442695
    %v1469 = vpow.pop %v1468
    %v1470 = vadd.f32 %v1469, 1.0
    %v1471 = vrcp.pop %v1470
    %v1472 = vmul.f32 1.0, %v1471
    %1473 = vrot.lane.b32.xlu0 %v1389, 64
    %v1474 = vpop.permute.xlu0 %1473
    %v1476 = vadd.f32 %v1462, %v1474
    %1478 = vrot.lane.b32.xlu0 %v1476, 64
    %v1479 = vpop.permute.xlu0 %1478
    %v1481 = vmul.f32 %v1472, %v1479
    %1483 = vrot.lane.b32.xlu0 %v1481, 64
    %v1484 = vpop.permute.xlu0 %1483
    %v1486 = vadd.f32 %v1465, %v1484
    %v1487 = vtanh.pop %v1486
    %v1488 = vsub.f32 1.0, %v1472
    %1490 = vrot.lane.b32.xlu0 %v1487, 96
    %v1491 = vpop.permute.xlu0 %1490
    %v1493 = vmul.f32 %v1488, %v1491
    %1494 = vrot.lane.b32.xlu0 %v1391, 32
    %v1495 = vpop.permute.xlu0 %1494
    %v1497 = vmul.f32 %v1472, %v1495
    %v1498 = vadd.f32 %v1493, %v1497
    %1500 = vrot.lane.b32.xlu0 %v1498, 96
    %v1501 = vpop.permute.xlu0 %1500
    %1503 = vst.msk [vmem:[#allocation4] sm:$0x3] %vm436, %v1501
    %v1504 = vsel %vm324, %v1501, 0
    %1506 = vmatprep.subr.mxu0 0.0
    %1507 = vmatpush1.msra.mxu0 %v1380
    %1508 = vmatprep.subr.mxu0 0.0
    %1509 = vmatpush1.msra.mxu0 %v1381
    %1510 = vmatprep.subr.mxu0 0.0
    %1511 = vmatpush1.msra.mxu0 %v1382
    %1512 = vmatprep.subr.mxu0 0.0
    %1513 = vmatpush1.msra.mxu0 %v1383
    %1514 = vmatprep.subr.mxu0 0.0
    %1515 = vmatpush1.msra.mxu0 0.0
    %1516 = vmatprep.subr.mxu0 0.0
    %1517 = vmatpush1.msra.mxu0 0.0
    %1518 = vmatprep.subr.mxu0 0.0
    %1519 = vmatpush1.msra.mxu0 0.0
    %1520 = vmatprep.subr.mxu0 0.0
    %1521 = vmatpush1.msra.mxu0 0.0
    %1522 = vmatprep.subr.mxu0 0.0
    %1523 = vmatpush1.msra.mxu0 0.0
    %1524 = vmatprep.subr.mxu0 0.0
    %1525 = vmatpush1.msra.mxu0 0.0
    %1526 = vmatprep.subr.mxu0 0.0
    %1527 = vmatpush1.msra.mxu0 0.0
    %1528 = vmatprep.subr.mxu0 0.0
    %1529 = vmatpush1.msra.mxu0 0.0
    %1530 = vmatprep.subr.mxu0 0.0
    %1531 = vmatpush1.msra.mxu0 0.0
    %1532 = vmatprep.subr.mxu0 0.0
    %1533 = vmatpush1.msra.mxu0 0.0
    %1534 = vmatprep.subr.mxu0 0.0
    %1535 = vmatpush1.msra.mxu0 0.0
    %1536 = vmatprep.subr.mxu0 0.0
    %1537 = vmatpush1.msra.mxu0 0.0
    %1538 = vmatprep.subr.mxu0 0.0
    %1539 = vmatpush1.msra.mxu0 0.0
    %1540 = vmatprep.subr.mxu0 0.0
    %1541 = vmatpush1.msra.mxu0 0.0
    %1542 = vmatprep.subr.mxu0 0.0
    %1543 = vmatpush1.msra.mxu0 0.0
    %1544 = vmatprep.subr.mxu0 0.0
    %1545 = vmatpush1.msra.mxu0 0.0
    %1546 = vmatprep.subr.mxu0 0.0
    %1547 = vmatpush1.msra.mxu0 0.0
    %1548 = vmatprep.subr.mxu0 0.0
    %1549 = vmatpush1.msra.mxu0 0.0
    %1550 = vmatprep.subr.mxu0 0.0
    %1551 = vmatpush1.msra.mxu0 0.0
    %1552 = vmatprep.subr.mxu0 0.0
    %1553 = vmatpush1.msra.mxu0 0.0
    %1554 = vmatprep.subr.mxu0 0.0
    %1555 = vmatpush1.msra.mxu0 0.0
    %1556 = vmatprep.subr.mxu0 0.0
    %1557 = vmatpush1.msra.mxu0 0.0
    %1558 = vmatprep.subr.mxu0 0.0
    %1559 = vmatpush1.msra.mxu0 0.0
    %1560 = vmatprep.subr.mxu0 0.0
    %1561 = vmatpush1.msra.mxu0 0.0
    %1562 = vmatprep.subr.mxu0 0.0
    %1563 = vmatpush1.msra.mxu0 0.0
    %1564 = vmatprep.subr.mxu0 0.0
    %1565 = vmatpush1.msra.mxu0 0.0
    %1566 = vmatprep.subr.mxu0 0.0
    %1567 = vmatpush1.msra.mxu0 0.0
    %1568 = vmatprep.subr.mxu0 0.0
    %1569 = vmatpush1.msra.mxu0 0.0
    %1570 = vmatprep.mubr.f32.mxu0 0.0
    %1571 = vmatmul.mubr.f32.gmra.mrb[0].mxu0 %v1504
    %v1572 = vpop.f32.mrb[0].mxu0
    %v1573 = vadd.f32 0.0, %v1572
    %v1574 = vpop.f32.mrb[0].mxu0
    %1575 = vdwg.mxu0
    %v1576 = vld [vmem:[%s510] sm:$0x3]
    %v1577 = vadd.f32 %v1576, %v1573
    %v1578 = vxor.u32 %v1577, 2147483648
    %v1579 = vmul.f32 %v1578, 1.442695
    %v1580 = vpow.pop %v1579
    %v1581 = vadd.f32 %v1580, 1.0
    %v1582 = vrcp.pop %v1581
    %v1583 = vmul.f32 1.0, %v1582
    %v1584 = vadd.f32 %v1573, %v1474
    %1586 = vrot.lane.b32.xlu0 %v1584, 64
    %v1587 = vpop.permute.xlu0 %1586
    %v1589 = vmul.f32 %v1583, %v1587
    %1591 = vrot.lane.b32.xlu0 %v1589, 64
    %v1592 = vpop.permute.xlu0 %1591
    %v1594 = vadd.f32 %v1576, %v1592
    %v1595 = vtanh.pop %v1594
    %v1596 = vsub.f32 1.0, %v1583
    %1598 = vrot.lane.b32.xlu0 %v1595, 96
    %v1599 = vpop.permute.xlu0 %1598
    %v1601 = vmul.f32 %v1596, %v1599
    %v1602 = vmul.f32 %v1583, %v1498
    %v1603 = vadd.f32 %v1601, %v1602
    %1605 = vrot.lane.b32.xlu0 %v1603, 96
    %v1606 = vpop.permute.xlu0 %1605
    %s1608 = scalar_lea.vmem [#allocation4], 2
    %1609 = vst.msk [vmem:[%s1608] sm:$0x3] %vm436, %v1606
    %v1610 = vsel %vm324, %v1606, 0
    %1612 = vmatprep.subr.mxu0 0.0
    %1613 = vmatpush1.msra.mxu0 %v1380
    %1614 = vmatprep.subr.mxu0 0.0
    %1615 = vmatpush1.msra.mxu0 %v1381
    %1616 = vmatprep.subr.mxu0 0.0
    %1617 = vmatpush1.msra.mxu0 %v1382
    %1618 = vmatprep.subr.mxu0 0.0
    %1619 = vmatpush1.msra.mxu0 %v1383
    %1620 = vmatprep.subr.mxu0 0.0
    %1621 = vmatpush1.msra.mxu0 0.0
    %1622 = vmatprep.subr.mxu0 0.0
    %1623 = vmatpush1.msra.mxu0 0.0
    %1624 = vmatprep.subr.mxu0 0.0
    %1625 = vmatpush1.msra.mxu0 0.0
    %1626 = vmatprep.subr.mxu0 0.0
    %1627 = vmatpush1.msra.mxu0 0.0
    %1628 = vmatprep.subr.mxu0 0.0
    %1629 = vmatpush1.msra.mxu0 0.0
    %1630 = vmatprep.subr.mxu0 0.0
    %1631 = vmatpush1.msra.mxu0 0.0
    %1632 = vmatprep.subr.mxu0 0.0
    %1633 = vmatpush1.msra.mxu0 0.0
    %1634 = vmatprep.subr.mxu0 0.0
    %1635 = vmatpush1.msra.mxu0 0.0
    %1636 = vmatprep.subr.mxu0 0.0
    %1637 = vmatpush1.msra.mxu0 0.0
    %1638 = vmatprep.subr.mxu0 0.0
    %1639 = vmatpush1.msra.mxu0 0.0
    %1640 = vmatprep.subr.mxu0 0.0
    %1641 = vmatpush1.msra.mxu0 0.0
    %1642 = vmatprep.subr.mxu0 0.0
    %1643 = vmatpush1.msra.mxu0 0.0
    %1644 = vmatprep.subr.mxu0 0.0
    %1645 = vmatpush1.msra.mxu0 0.0
    %1646 = vmatprep.subr.mxu0 0.0
    %1647 = vmatpush1.msra.mxu0 0.0
    %1648 = vmatprep.subr.mxu0 0.0
    %1649 = vmatpush1.msra.mxu0 0.0
    %1650 = vmatprep.subr.mxu0 0.0
    %1651 = vmatpush1.msra.mxu0 0.0
    %1652 = vmatprep.subr.mxu0 0.0
    %1653 = vmatpush1.msra.mxu0 0.0
    %1654 = vmatprep.subr.mxu0 0.0
    %1655 = vmatpush1.msra.mxu0 0.0
    %1656 = vmatprep.subr.mxu0 0.0
    %1657 = vmatpush1.msra.mxu0 0.0
    %1658 = vmatprep.subr.mxu0 0.0
    %1659 = vmatpush1.msra.mxu0 0.0
    %1660 = vmatprep.subr.mxu0 0.0
    %1661 = vmatpush1.msra.mxu0 0.0
    %1662 = vmatprep.subr.mxu0 0.0
    %1663 = vmatpush1.msra.mxu0 0.0
    %1664 = vmatprep.subr.mxu0 0.0
    %1665 = vmatpush1.msra.mxu0 0.0
    %1666 = vmatprep.subr.mxu0 0.0
    %1667 = vmatpush1.msra.mxu0 0.0
    %1668 = vmatprep.subr.mxu0 0.0
    %1669 = vmatpush1.msra.mxu0 0.0
    %1670 = vmatprep.subr.mxu0 0.0
    %1671 = vmatpush1.msra.mxu0 0.0
    %1672 = vmatprep.subr.mxu0 0.0
    %1673 = vmatpush1.msra.mxu0 0.0
    %1674 = vmatprep.subr.mxu0 0.0
    %1675 = vmatpush1.msra.mxu0 0.0
    %1676 = vmatprep.mubr.f32.mxu0 0.0
    %1677 = vmatmul.mubr.f32.gmra.mrb[0].mxu0 %v1610
    %v1678 = vpop.f32.mrb[0].mxu0
    %v1679 = vadd.f32 0.0, %v1678
    %v1680 = vpop.f32.mrb[0].mxu0
    %1681 = vdwg.mxu0
    %v1682 = vld [vmem:[%s617] sm:$0x3]
    %v1683 = vadd.f32 %v1682, %v1679
    %v1684 = vxor.u32 %v1683, 2147483648
    %v1685 = vmul.f32 %v1684, 1.442695
    %v1686 = vpow.pop %v1685
    %v1687 = vadd.f32 %v1686, 1.0
    %v1688 = vrcp.pop %v1687
    %v1689 = vmul.f32 1.0, %v1688
    %v1690 = vadd.f32 %v1679, %v1474
    %1692 = vrot.lane.b32.xlu0 %v1690, 64
    %v1693 = vpop.permute.xlu0 %1692
    %v1695 = vmul.f32 %v1689, %v1693
    %1697 = vrot.lane.b32.xlu0 %v1695, 64
    %v1698 = vpop.permute.xlu0 %1697
    %v1700 = vadd.f32 %v1682, %v1698
    %v1701 = vtanh.pop %v1700
    %v1702 = vsub.f32 1.0, %v1689
    %1704 = vrot.lane.b32.xlu0 %v1701, 96
    %v1705 = vpop.permute.xlu0 %1704
    %v1707 = vmul.f32 %v1702, %v1705
    %v1708 = vmul.f32 %v1689, %v1603
    %v1709 = vadd.f32 %v1707, %v1708
    %1711 = vrot.lane.b32.xlu0 %v1709, 96
    %v1712 = vpop.permute.xlu0 %1711
    %s1714 = scalar_lea.vmem [#allocation4], 4
    %1715 = vst.msk [vmem:[%s1714] sm:$0x3] %vm436, %v1712
    %v1716 = vsel %vm324, %v1712, 0
    %1718 = vmatprep.subr.mxu0 0.0
    %1719 = vmatpush1.msra.mxu0 %v1380
    %1720 = vmatprep.subr.mxu0 0.0
    %1721 = vmatpush1.msra.mxu0 %v1381
    %1722 = vmatprep.subr.mxu0 0.0
    %1723 = vmatpush1.msra.mxu0 %v1382
    %1724 = vmatprep.subr.mxu0 0.0
    %1725 = vmatpush1.msra.mxu0 %v1383
    %1726 = vmatprep.subr.mxu0 0.0
    %1727 = vmatpush1.msra.mxu0 0.0
    %1728 = vmatprep.subr.mxu0 0.0
    %1729 = vmatpush1.msra.mxu0 0.0
    %1730 = vmatprep.subr.mxu0 0.0
    %1731 = vmatpush1.msra.mxu0 0.0
    %1732 = vmatprep.subr.mxu0 0.0
    %1733 = vmatpush1.msra.mxu0 0.0
    %1734 = vmatprep.subr.mxu0 0.0
    %1735 = vmatpush1.msra.mxu0 0.0
    %1736 = vmatprep.subr.mxu0 0.0
    %1737 = vmatpush1.msra.mxu0 0.0
    %1738 = vmatprep.subr.mxu0 0.0
    %1739 = vmatpush1.msra.mxu0 0.0
    %1740 = vmatprep.subr.mxu0 0.0
    %1741 = vmatpush1.msra.mxu0 0.0
    %1742 = vmatprep.subr.mxu0 0.0
    %1743 = vmatpush1.msra.mxu0 0.0
    %1744 = vmatprep.subr.mxu0 0.0
    %1745 = vmatpush1.msra.mxu0 0.0
    %1746 = vmatprep.subr.mxu0 0.0
    %1747 = vmatpush1.msra.mxu0 0.0
    %1748 = vmatprep.subr.mxu0 0.0
    %1749 = vmatpush1.msra.mxu0 0.0
    %1750 = vmatprep.subr.mxu0 0.0
    %1751 = vmatpush1.msra.mxu0 0.0
    %1752 = vmatprep.subr.mxu0 0.0
    %1753 = vmatpush1.msra.mxu0 0.0
    %1754 = vmatprep.subr.mxu0 0.0
    %1755 = vmatpush1.msra.mxu0 0.0
    %1756 = vmatprep.subr.mxu0 0.0
    %1757 = vmatpush1.msra.mxu0 0.0
    %1758 = vmatprep.subr.mxu0 0.0
    %1759 = vmatpush1.msra.mxu0 0.0
    %1760 = vmatprep.subr.mxu0 0.0
    %1761 = vmatpush1.msra.mxu0 0.0
    %1762 = vmatprep.subr.mxu0 0.0
    %1763 = vmatpush1.msra.mxu0 0.0
    %1764 = vmatprep.subr.mxu0 0.0
    %1765 = vmatpush1.msra.mxu0 0.0
    %1766 = vmatprep.subr.mxu0 0.0
    %1767 = vmatpush1.msra.mxu0 0.0
    %1768 = vmatprep.subr.mxu0 0.0
    %1769 = vmatpush1.msra.mxu0 0.0
    %1770 = vmatprep.subr.mxu0 0.0
    %1771 = vmatpush1.msra.mxu0 0.0
    %1772 = vmatprep.subr.mxu0 0.0
    %1773 = vmatpush1.msra.mxu0 0.0
    %1774 = vmatprep.subr.mxu0 0.0
    %1775 = vmatpush1.msra.mxu0 0.0
    %1776 = vmatprep.subr.mxu0 0.0
    %1777 = vmatpush1.msra.mxu0 0.0
    %1778 = vmatprep.subr.mxu0 0.0
    %1779 = vmatpush1.msra.mxu0 0.0
    %1780 = vmatprep.subr.mxu0 0.0
    %1781 = vmatpush1.msra.mxu0 0.0
    %1782 = vmatprep.mubr.f32.mxu0 0.0
    %1783 = vmatmul.mubr.f32.gmra.mrb[0].mxu0 %v1716
    %v1784 = vpop.f32.mrb[0].mxu0
    %v1785 = vadd.f32 0.0, %v1784
    %v1786 = vpop.f32.mrb[0].mxu0
    %1787 = vdwg.mxu0
    %v1788 = vld [vmem:[%s724] sm:$0x3]
    %v1789 = vadd.f32 %v1788, %v1785
    %v1790 = vxor.u32 %v1789, 2147483648
    %v1791 = vmul.f32 %v1790, 1.442695
    %v1792 = vpow.pop %v1791
    %v1793 = vadd.f32 %v1792, 1.0
    %v1794 = vrcp.pop %v1793
    %v1795 = vmul.f32 1.0, %v1794
    %v1796 = vadd.f32 %v1785, %v1474
    %1798 = vrot.lane.b32.xlu0 %v1796, 64
    %v1799 = vpop.permute.xlu0 %1798
    %v1801 = vmul.f32 %v1795, %v1799
    %1803 = vrot.lane.b32.xlu0 %v1801, 64
    %v1804 = vpop.permute.xlu0 %1803
    %v1806 = vadd.f32 %v1788, %v1804
    %v1807 = vtanh.pop %v1806
    %v1808 = vsub.f32 1.0, %v1795
    %1810 = vrot.lane.b32.xlu0 %v1807, 96
    %v1811 = vpop.permute.xlu0 %1810
    %v1813 = vmul.f32 %v1808, %v1811
    %v1814 = vmul.f32 %v1795, %v1709
    %v1815 = vadd.f32 %v1813, %v1814
    %1817 = vrot.lane.b32.xlu0 %v1815, 96
    %v1818 = vpop.permute.xlu0 %1817
    %s1820 = scalar_lea.vmem [#allocation4], 6
    %1821 = vst.msk [vmem:[%s1820] sm:$0x3] %vm436, %v1818
    %v1822 = vsel %vm324, %v1818, 0
    %1824 = vmatprep.subr.mxu0 0.0
    %1825 = vmatpush1.msra.mxu0 %v1380
    %1826 = vmatprep.subr.mxu0 0.0
    %1827 = vmatpush1.msra.mxu0 %v1381
    %1828 = vmatprep.subr.mxu0 0.0
    %1829 = vmatpush1.msra.mxu0 %v1382
    %1830 = vmatprep.subr.mxu0 0.0
    %1831 = vmatpush1.msra.mxu0 %v1383
    %1832 = vmatprep.subr.mxu0 0.0
    %1833 = vmatpush1.msra.mxu0 0.0
    %1834 = vmatprep.subr.mxu0 0.0
    %1835 = vmatpush1.msra.mxu0 0.0
    %1836 = vmatprep.subr.mxu0 0.0
    %1837 = vmatpush1.msra.mxu0 0.0
    %1838 = vmatprep.subr.mxu0 0.0
    %1839 = vmatpush1.msra.mxu0 0.0
    %1840 = vmatprep.subr.mxu0 0.0
    %1841 = vmatpush1.msra.mxu0 0.0
    %1842 = vmatprep.subr.mxu0 0.0
    %1843 = vmatpush1.msra.mxu0 0.0
    %1844 = vmatprep.subr.mxu0 0.0
    %1845 = vmatpush1.msra.mxu0 0.0
    %1846 = vmatprep.subr.mxu0 0.0
    %1847 = vmatpush1.msra.mxu0 0.0
    %1848 = vmatprep.subr.mxu0 0.0
    %1849 = vmatpush1.msra.mxu0 0.0
    %1850 = vmatprep.subr.mxu0 0.0
    %1851 = vmatpush1.msra.mxu0 0.0
    %1852 = vmatprep.subr.mxu0 0.0
    %1853 = vmatpush1.msra.mxu0 0.0
    %1854 = vmatprep.subr.mxu0 0.0
    %1855 = vmatpush1.msra.mxu0 0.0
    %1856 = vmatprep.subr.mxu0 0.0
    %1857 = vmatpush1.msra.mxu0 0.0
    %1858 = vmatprep.subr.mxu0 0.0
    %1859 = vmatpush1.msra.mxu0 0.0
    %1860 = vmatprep.subr.mxu0 0.0
    %1861 = vmatpush1.msra.mxu0 0.0
    %1862 = vmatprep.subr.mxu0 0.0
    %1863 = vmatpush1.msra.mxu0 0.0
    %1864 = vmatprep.subr.mxu0 0.0
    %1865 = vmatpush1.msra.mxu0 0.0
    %1866 = vmatprep.subr.mxu0 0.0
    %1867 = vmatpush1.msra.mxu0 0.0
    %1868 = vmatprep.subr.mxu0 0.0
    %1869 = vmatpush1.msra.mxu0 0.0
    %1870 = vmatprep.subr.mxu0 0.0
    %1871 = vmatpush1.msra.mxu0 0.0
    %1872 = vmatprep.subr.mxu0 0.0
    %1873 = vmatpush1.msra.mxu0 0.0
    %1874 = vmatprep.subr.mxu0 0.0
    %1875 = vmatpush1.msra.mxu0 0.0
    %1876 = vmatprep.subr.mxu0 0.0
    %1877 = vmatpush1.msra.mxu0 0.0
    %1878 = vmatprep.subr.mxu0 0.0
    %1879 = vmatpush1.msra.mxu0 0.0
    %1880 = vmatprep.subr.mxu0 0.0
    %1881 = vmatpush1.msra.mxu0 0.0
    %1882 = vmatprep.subr.mxu0 0.0
    %1883 = vmatpush1.msra.mxu0 0.0
    %1884 = vmatprep.subr.mxu0 0.0
    %1885 = vmatpush1.msra.mxu0 0.0
    %1886 = vmatprep.subr.mxu0 0.0
    %1887 = vmatpush1.msra.mxu0 0.0
    %1888 = vmatprep.mubr.f32.mxu0 0.0
    %1889 = vmatmul.mubr.f32.gmra.mrb[0].mxu0 %v1822
    %v1890 = vpop.f32.mrb[0].mxu0
    %v1891 = vadd.f32 0.0, %v1890
    %v1892 = vpop.f32.mrb[0].mxu0
    %1893 = vdwg.mxu0
    %v1894 = vld [vmem:[%s831] sm:$0x3]
    %v1895 = vadd.f32 %v1894, %v1891
    %v1896 = vxor.u32 %v1895, 2147483648
    %v1897 = vmul.f32 %v1896, 1.442695
    %v1898 = vpow.pop %v1897
    %v1899 = vadd.f32 %v1898, 1.0
    %v1900 = vrcp.pop %v1899
    %v1901 = vmul.f32 1.0, %v1900
    %v1902 = vadd.f32 %v1891, %v1474
    %1904 = vrot.lane.b32.xlu0 %v1902, 64
    %v1905 = vpop.permute.xlu0 %1904
    %v1907 = vmul.f32 %v1901, %v1905
    %1909 = vrot.lane.b32.xlu0 %v1907, 64
    %v1910 = vpop.permute.xlu0 %1909
    %v1912 = vadd.f32 %v1894, %v1910
    %v1913 = vtanh.pop %v1912
    %v1914 = vsub.f32 1.0, %v1901
    %1916 = vrot.lane.b32.xlu0 %v1913, 96
    %v1917 = vpop.permute.xlu0 %1916
    %v1919 = vmul.f32 %v1914, %v1917
    %v1920 = vmul.f32 %v1901, %v1815
    %v1921 = vadd.f32 %v1919, %v1920
    %1923 = vrot.lane.b32.xlu0 %v1921, 96
    %v1924 = vpop.permute.xlu0 %1923
    %s1926 = scalar_lea.vmem [#allocation4], 8
    %1927 = vst.msk [vmem:[%s1926] sm:$0x3] %vm436, %v1924
    %v1928 = vsel %vm324, %v1924, 0
    %1930 = vmatprep.subr.mxu0 0.0
    %1931 = vmatpush1.msra.mxu0 %v1380
    %1932 = vmatprep.subr.mxu0 0.0
    %1933 = vmatpush1.msra.mxu0 %v1381
    %1934 = vmatprep.subr.mxu0 0.0
    %1935 = vmatpush1.msra.mxu0 %v1382
    %1936 = vmatprep.subr.mxu0 0.0
    %1937 = vmatpush1.msra.mxu0 %v1383
    %1938 = vmatprep.subr.mxu0 0.0
    %1939 = vmatpush1.msra.mxu0 0.0
    %1940 = vmatprep.subr.mxu0 0.0
    %1941 = vmatpush1.msra.mxu0 0.0
    %1942 = vmatprep.subr.mxu0 0.0
    %1943 = vmatpush1.msra.mxu0 0.0
    %1944 = vmatprep.subr.mxu0 0.0
    %1945 = vmatpush1.msra.mxu0 0.0
    %1946 = vmatprep.subr.mxu0 0.0
    %1947 = vmatpush1.msra.mxu0 0.0
    %1948 = vmatprep.subr.mxu0 0.0
    %1949 = vmatpush1.msra.mxu0 0.0
    %1950 = vmatprep.subr.mxu0 0.0
    %1951 = vmatpush1.msra.mxu0 0.0
    %1952 = vmatprep.subr.mxu0 0.0
    %1953 = vmatpush1.msra.mxu0 0.0
    %1954 = vmatprep.subr.mxu0 0.0
    %1955 = vmatpush1.msra.mxu0 0.0
    %1956 = vmatprep.subr.mxu0 0.0
    %1957 = vmatpush1.msra.mxu0 0.0
    %1958 = vmatprep.subr.mxu0 0.0
    %1959 = vmatpush1.msra.mxu0 0.0
    %1960 = vmatprep.subr.mxu0 0.0
    %1961 = vmatpush1.msra.mxu0 0.0
    %1962 = vmatprep.subr.mxu0 0.0
    %1963 = vmatpush1.msra.mxu0 0.0
    %1964 = vmatprep.subr.mxu0 0.0
    %1965 = vmatpush1.msra.mxu0 0.0
    %1966 = vmatprep.subr.mxu0 0.0
    %1967 = vmatpush1.msra.mxu0 0.0
    %1968 = vmatprep.subr.mxu0 0.0
    %1969 = vmatpush1.msra.mxu0 0.0
    %1970 = vmatprep.subr.mxu0 0.0
    %1971 = vmatpush1.msra.mxu0 0.0
    %1972 = vmatprep.subr.mxu0 0.0
    %1973 = vmatpush1.msra.mxu0 0.0
    %1974 = vmatprep.subr.mxu0 0.0
    %1975 = vmatpush1.msra.mxu0 0.0
    %1976 = vmatprep.subr.mxu0 0.0
    %1977 = vmatpush1.msra.mxu0 0.0
    %1978 = vmatprep.subr.mxu0 0.0
    %1979 = vmatpush1.msra.mxu0 0.0
    %1980 = vmatprep.subr.mxu0 0.0
    %1981 = vmatpush1.msra.mxu0 0.0
    %1982 = vmatprep.subr.mxu0 0.0
    %1983 = vmatpush1.msra.mxu0 0.0
    %1984 = vmatprep.subr.mxu0 0.0
    %1985 = vmatpush1.msra.mxu0 0.0
    %1986 = vmatprep.subr.mxu0 0.0
    %1987 = vmatpush1.msra.mxu0 0.0
    %1988 = vmatprep.subr.mxu0 0.0
    %1989 = vmatpush1.msra.mxu0 0.0
    %1990 = vmatprep.subr.mxu0 0.0
    %1991 = vmatpush1.msra.mxu0 0.0
    %1992 = vmatprep.subr.mxu0 0.0
    %1993 = vmatpush1.msra.mxu0 0.0
    %1994 = vmatprep.mubr.f32.mxu0 0.0
    %1995 = vmatmul.mubr.f32.gmra.mrb[0].mxu0 %v1928
    %v1996 = vpop.f32.mrb[0].mxu0
    %v1997 = vadd.f32 0.0, %v1996
    %v1998 = vpop.f32.mrb[0].mxu0
    %1999 = vdwg.mxu0
    %v2000 = vld [vmem:[%s938] sm:$0x3]
    %v2001 = vadd.f32 %v2000, %v1997
    %v2002 = vxor.u32 %v2001, 2147483648
    %v2003 = vmul.f32 %v2002, 1.442695
    %v2004 = vpow.pop %v2003
    %v2005 = vadd.f32 %v2004, 1.0
    %v2006 = vrcp.pop %v2005
    %v2007 = vmul.f32 1.0, %v2006
    %v2008 = vadd.f32 %v1997, %v1474
    %2010 = vrot.lane.b32.xlu0 %v2008, 64
    %v2011 = vpop.permute.xlu0 %2010
    %v2013 = vmul.f32 %v2007, %v2011
    %2015 = vrot.lane.b32.xlu0 %v2013, 64
    %v2016 = vpop.permute.xlu0 %2015
    %v2018 = vadd.f32 %v2000, %v2016
    %v2019 = vtanh.pop %v2018
    %v2020 = vsub.f32 1.0, %v2007
    %2022 = vrot.lane.b32.xlu0 %v2019, 96
    %v2023 = vpop.permute.xlu0 %2022
    %v2025 = vmul.f32 %v2020, %v2023
    %v2026 = vmul.f32 %v2007, %v1921
    %v2027 = vadd.f32 %v2025, %v2026
    %2029 = vrot.lane.b32.xlu0 %v2027, 96
    %v2030 = vpop.permute.xlu0 %2029
    %s2032 = scalar_lea.vmem [#allocation4], 10
    %2033 = vst.msk [vmem:[%s2032] sm:$0x3] %vm436, %v2030
    %v2034 = vsel %vm324, %v2030, 0
    %2036 = vmatprep.subr.mxu0 0.0
    %2037 = vmatpush1.msra.mxu0 %v1380
    %2038 = vmatprep.subr.mxu0 0.0
    %2039 = vmatpush1.msra.mxu0 %v1381
    %2040 = vmatprep.subr.mxu0 0.0
    %2041 = vmatpush1.msra.mxu0 %v1382
    %2042 = vmatprep.subr.mxu0 0.0
    %2043 = vmatpush1.msra.mxu0 %v1383
    %2044 = vmatprep.subr.mxu0 0.0
    %2045 = vmatpush1.msra.mxu0 0.0
    %2046 = vmatprep.subr.mxu0 0.0
    %2047 = vmatpush1.msra.mxu0 0.0
    %2048 = vmatprep.subr.mxu0 0.0
    %2049 = vmatpush1.msra.mxu0 0.0
    %2050 = vmatprep.subr.mxu0 0.0
    %2051 = vmatpush1.msra.mxu0 0.0
    %2052 = vmatprep.subr.mxu0 0.0
    %2053 = vmatpush1.msra.mxu0 0.0
    %2054 = vmatprep.subr.mxu0 0.0
    %2055 = vmatpush1.msra.mxu0 0.0
    %2056 = vmatprep.subr.mxu0 0.0
    %2057 = vmatpush1.msra.mxu0 0.0
    %2058 = vmatprep.subr.mxu0 0.0
    %2059 = vmatpush1.msra.mxu0 0.0
    %2060 = vmatprep.subr.mxu0 0.0
    %2061 = vmatpush1.msra.mxu0 0.0
    %2062 = vmatprep.subr.mxu0 0.0
    %2063 = vmatpush1.msra.mxu0 0.0
    %2064 = vmatprep.subr.mxu0 0.0
    %2065 = vmatpush1.msra.mxu0 0.0
    %2066 = vmatprep.subr.mxu0 0.0
    %2067 = vmatpush1.msra.mxu0 0.0
    %2068 = vmatprep.subr.mxu0 0.0
    %2069 = vmatpush1.msra.mxu0 0.0
    %2070 = vmatprep.subr.mxu0 0.0
    %2071 = vmatpush1.msra.mxu0 0.0
    %2072 = vmatprep.subr.mxu0 0.0
    %2073 = vmatpush1.msra.mxu0 0.0
    %2074 = vmatprep.subr.mxu0 0.0
    %2075 = vmatpush1.msra.mxu0 0.0
    %2076 = vmatprep.subr.mxu0 0.0
    %2077 = vmatpush1.msra.mxu0 0.0
    %2078 = vmatprep.subr.mxu0 0.0
    %2079 = vmatpush1.msra.mxu0 0.0
    %2080 = vmatprep.subr.mxu0 0.0
    %2081 = vmatpush1.msra.mxu0 0.0
    %2082 = vmatprep.subr.mxu0 0.0
    %2083 = vmatpush1.msra.mxu0 0.0
    %2084 = vmatprep.subr.mxu0 0.0
    %2085 = vmatpush1.msra.mxu0 0.0
    %2086 = vmatprep.subr.mxu0 0.0
    %2087 = vmatpush1.msra.mxu0 0.0
    %2088 = vmatprep.subr.mxu0 0.0
    %2089 = vmatpush1.msra.mxu0 0.0
    %2090 = vmatprep.subr.mxu0 0.0
    %2091 = vmatpush1.msra.mxu0 0.0
    %2092 = vmatprep.subr.mxu0 0.0
    %2093 = vmatpush1.msra.mxu0 0.0
    %2094 = vmatprep.subr.mxu0 0.0
    %2095 = vmatpush1.msra.mxu0 0.0
    %2096 = vmatprep.subr.mxu0 0.0
    %2097 = vmatpush1.msra.mxu0 0.0
    %2098 = vmatprep.subr.mxu0 0.0
    %2099 = vmatpush1.msra.mxu0 0.0
    %2100 = vmatprep.mubr.f32.mxu0 0.0
    %2101 = vmatmul.mubr.f32.gmra.mrb[0].mxu0 %v2034
    %v2102 = vpop.f32.mrb[0].mxu0
    %v2103 = vadd.f32 0.0, %v2102
    %v2104 = vpop.f32.mrb[0].mxu0
    %2105 = vdwg.mxu0
    %v2106 = vld [vmem:[%s1045] sm:$0x3]
    %v2107 = vadd.f32 %v2106, %v2103
    %v2108 = vxor.u32 %v2107, 2147483648
    %v2109 = vmul.f32 %v2108, 1.442695
    %v2110 = vpow.pop %v2109
    %v2111 = vadd.f32 %v2110, 1.0
    %v2112 = vrcp.pop %v2111
    %v2113 = vmul.f32 1.0, %v2112
    %v2114 = vadd.f32 %v2103, %v1474
    %2116 = vrot.lane.b32.xlu0 %v2114, 64
    %v2117 = vpop.permute.xlu0 %2116
    %v2119 = vmul.f32 %v2113, %v2117
    %2121 = vrot.lane.b32.xlu0 %v2119, 64
    %v2122 = vpop.permute.xlu0 %2121
    %v2124 = vadd.f32 %v2106, %v2122
    %v2125 = vtanh.pop %v2124
    %v2126 = vsub.f32 1.0, %v2113
    %2128 = vrot.lane.b32.xlu0 %v2125, 96
    %v2129 = vpop.permute.xlu0 %2128
    %v2131 = vmul.f32 %v2126, %v2129
    %v2132 = vmul.f32 %v2113, %v2027
    %v2133 = vadd.f32 %v2131, %v2132
    %2135 = vrot.lane.b32.xlu0 %v2133, 96
    %v2136 = vpop.permute.xlu0 %2135
    %s2138 = scalar_lea.vmem [#allocation4], 12
    %2139 = vst.msk [vmem:[%s2138] sm:$0x3] %vm436, %v2136
    %v2140 = vsel %vm324, %v2136, 0
    %2142 = vmatprep.subr.mxu0 0.0
    %2143 = vmatpush1.msra.mxu0 %v1380
    %2144 = vmatprep.subr.mxu0 0.0
    %2145 = vmatpush1.msra.mxu0 %v1381
    %2146 = vmatprep.subr.mxu0 0.0
    %2147 = vmatpush1.msra.mxu0 %v1382
    %2148 = vmatprep.subr.mxu0 0.0
    %2149 = vmatpush1.msra.mxu0 %v1383
    %2150 = vmatprep.subr.mxu0 0.0
    %2151 = vmatpush1.msra.mxu0 0.0
    %2152 = vmatprep.subr.mxu0 0.0
    %2153 = vmatpush1.msra.mxu0 0.0
    %2154 = vmatprep.subr.mxu0 0.0
    %2155 = vmatpush1.msra.mxu0 0.0
    %2156 = vmatprep.subr.mxu0 0.0
    %2157 = vmatpush1.msra.mxu0 0.0
    %2158 = vmatprep.subr.mxu0 0.0
    %2159 = vmatpush1.msra.mxu0 0.0
    %2160 = vmatprep.subr.mxu0 0.0
    %2161 = vmatpush1.msra.mxu0 0.0
    %2162 = vmatprep.subr.mxu0 0.0
    %2163 = vmatpush1.msra.mxu0 0.0
    %2164 = vmatprep.subr.mxu0 0.0
    %2165 = vmatpush1.msra.mxu0 0.0
    %2166 = vmatprep.subr.mxu0 0.0
    %2167 = vmatpush1.msra.mxu0 0.0
    %2168 = vmatprep.subr.mxu0 0.0
    %2169 = vmatpush1.msra.mxu0 0.0
    %2170 = vmatprep.subr.mxu0 0.0
    %2171 = vmatpush1.msra.mxu0 0.0
    %2172 = vmatprep.subr.mxu0 0.0
    %2173 = vmatpush1.msra.mxu0 0.0
    %2174 = vmatprep.subr.mxu0 0.0
    %2175 = vmatpush1.msra.mxu0 0.0
    %2176 = vmatprep.subr.mxu0 0.0
    %2177 = vmatpush1.msra.mxu0 0.0
    %2178 = vmatprep.subr.mxu0 0.0
    %2179 = vmatpush1.msra.mxu0 0.0
    %2180 = vmatprep.subr.mxu0 0.0
    %2181 = vmatpush1.msra.mxu0 0.0
    %2182 = vmatprep.subr.mxu0 0.0
    %2183 = vmatpush1.msra.mxu0 0.0
    %2184 = vmatprep.subr.mxu0 0.0
    %2185 = vmatpush1.msra.mxu0 0.0
    %2186 = vmatprep.subr.mxu0 0.0
    %2187 = vmatpush1.msra.mxu0 0.0
    %2188 = vmatprep.subr.mxu0 0.0
    %2189 = vmatpush1.msra.mxu0 0.0
    %2190 = vmatprep.subr.mxu0 0.0
    %2191 = vmatpush1.msra.mxu0 0.0
    %2192 = vmatprep.subr.mxu0 0.0
    %2193 = vmatpush1.msra.mxu0 0.0
    %2194 = vmatprep.subr.mxu0 0.0
    %2195 = vmatpush1.msra.mxu0 0.0
    %2196 = vmatprep.subr.mxu0 0.0
    %2197 = vmatpush1.msra.mxu0 0.0
    %2198 = vmatprep.subr.mxu0 0.0
    %2199 = vmatpush1.msra.mxu0 0.0
    %2200 = vmatprep.subr.mxu0 0.0
    %2201 = vmatpush1.msra.mxu0 0.0
    %2202 = vmatprep.subr.mxu0 0.0
    %2203 = vmatpush1.msra.mxu0 0.0
    %2204 = vmatprep.subr.mxu0 0.0
    %2205 = vmatpush1.msra.mxu0 0.0
    %2206 = vmatprep.mubr.f32.mxu0 0.0
    %2207 = vmatmul.mubr.f32.gmra.mrb[0].mxu0 %v2140
    %v2208 = vpop.f32.mrb[0].mxu0
    %v2209 = vadd.f32 0.0, %v2208
    %v2210 = vpop.f32.mrb[0].mxu0
    %2211 = vdwg.mxu0
    %v2212 = vld [vmem:[%s1152] sm:$0x3]
    %v2213 = vadd.f32 %v2212, %v2209
    %v2214 = vxor.u32 %v2213, 2147483648
    %v2215 = vmul.f32 %v2214, 1.442695
    %v2216 = vpow.pop %v2215
    %v2217 = vadd.f32 %v2216, 1.0
    %v2218 = vrcp.pop %v2217
    %v2219 = vmul.f32 1.0, %v2218
    %v2220 = vadd.f32 %v2209, %v1474
    %2222 = vrot.lane.b32.xlu0 %v2220, 64
    %v2223 = vpop.permute.xlu0 %2222
    %v2225 = vmul.f32 %v2219, %v2223
    %2227 = vrot.lane.b32.xlu0 %v2225, 64
    %v2228 = vpop.permute.xlu0 %2227
    %v2230 = vadd.f32 %v2212, %v2228
    %v2231 = vtanh.pop %v2230
    %v2232 = vsub.f32 1.0, %v2219
    %2234 = vrot.lane.b32.xlu0 %v2231, 96
    %v2235 = vpop.permute.xlu0 %2234
    %v2237 = vmul.f32 %v2232, %v2235
    %v2238 = vmul.f32 %v2219, %v2133
    %v2239 = vadd.f32 %v2237, %v2238
    %2241 = vrot.lane.b32.xlu0 %v2239, 96
    %v2242 = vpop.permute.xlu0 %2241
    %s2244 = scalar_lea.vmem [#allocation4], 14
    %2245 = vst.msk [vmem:[%s2244] sm:$0x3] %vm436, %v2242
    %s2246 = scalar_lea.vmem [#allocation17], 2
    %2247 = vst.msk [vmem:[%s2246] sm:$0x3] %vm436, %v2242
    %v2248 = vld [vmem:[#allocation4] sm:$0x3]
    %v2249 = vld [vmem:[#allocation4 + $0x2] sm:$0x3]
    %v2250 = vld [vmem:[#allocation4 + $0x4] sm:$0x3]
    %v2251 = vld [vmem:[#allocation4 + $0x6] sm:$0x3]
    %v2252 = vld [vmem:[#allocation4 + $0x8] sm:$0x3]
    %v2253 = vld [vmem:[#allocation4 + $0xa] sm:$0x3]
    %v2254 = vld [vmem:[#allocation4 + $0xc] sm:$0x3]
    %v2255 = vld [vmem:[#allocation4 + $0xe] sm:$0x3]
    %v2256 = vmax.f32 %v2248, 0.0
    %v2257 = vmax.f32 %v2249, 0.0
    %v2258 = vmax.f32 %v2250, 0.0
    %v2259 = vmax.f32 %v2251, 0.0
    %v2260 = vmax.f32 %v2252, 0.0
    %v2261 = vmax.f32 %v2253, 0.0
    %v2262 = vmax.f32 %v2254, 0.0
    %v2263 = vmax.f32 %v2255, 0.0
    %v2264 = vld [vmem:[%s10] sm:$0xff]
    %v2265 = vld [vmem:[%s10 + $0x8] sm:$0xff]
    %v2266 = vld [vmem:[%s10 + $0x10] sm:$0xff]
    %v2267 = vld [vmem:[%s10 + $0x18] sm:$0xff]
    %v2268 = vld [vmem:[#allocation14] sm:$0x1]
    %v2270 = vlaneseq
    %v2271 = vshrl.u32 %v2270, 7
    %v2272 = vsub.s32 0, %v2271
    %v2273 = vrot.slane %v2268, %v2272
    %v2283 = vrot.slane %v2256, 1
    %vm2284 = vcmask 1041409
    %v2285 = vsel %vm2284, %v2257, %v2283
    %v2286 = vrot.slane %v2258, 7
    %vm2287 = vcmask 1042434
    %v2288 = vsel %vm2287, %v2286, %v2285
    %v2289 = vrot.slane %v2259, 6
    %vm2290 = vcmask 1043459
    %v2291 = vsel %vm2290, %v2289, %v2288
    %v2292 = vrot.slane %v2260, 5
    %vm2293 = vcmask 1044484
    %v2294 = vsel %vm2293, %v2292, %v2291
    %v2295 = vrot.slane %v2261, 4
    %vm2296 = vcmask 1045509
    %v2297 = vsel %vm2296, %v2295, %v2294
    %v2298 = vrot.slane %v2262, 3
    %vm2299 = vcmask 1046534
    %v2300 = vsel %vm2299, %v2298, %v2297
    %v2301 = vrot.slane %v2263, 2
    %vm2302 = vcmask 1047559
    %v2303 = vsel %vm2302, %v2301, %v2300
    %v2304 = vsel %vm324, %v2303, 0
    %2306 = vmatprep.subr.mxu0 0.0
    %2307 = vmatpush1.msra.mxu0 %v2264
    %2308 = vmatprep.subr.mxu0 0.0
    %2309 = vmatpush1.msra.mxu0 %v2265
    %2310 = vmatprep.subr.mxu0 0.0
    %2311 = vmatpush1.msra.mxu0 %v2266
    %2312 = vmatprep.subr.mxu0 0.0
    %2313 = vmatpush1.msra.mxu0 %v2267
    %2314 = vmatprep.subr.mxu0 0.0
    %2315 = vmatpush1.msra.mxu0 0.0
    %2316 = vmatprep.subr.mxu0 0.0
    %2317 = vmatpush1.msra.mxu0 0.0
    %2318 = vmatprep.subr.mxu0 0.0
    %2319 = vmatpush1.msra.mxu0 0.0
    %2320 = vmatprep.subr.mxu0 0.0
    %2321 = vmatpush1.msra.mxu0 0.0
    %2322 = vmatprep.subr.mxu0 0.0
    %2323 = vmatpush1.msra.mxu0 0.0
    %2324 = vmatprep.subr.mxu0 0.0
    %2325 = vmatpush1.msra.mxu0 0.0
    %2326 = vmatprep.subr.mxu0 0.0
    %2327 = vmatpush1.msra.mxu0 0.0
    %2328 = vmatprep.subr.mxu0 0.0
    %2329 = vmatpush1.msra.mxu0 0.0
    %2330 = vmatprep.subr.mxu0 0.0
    %2331 = vmatpush1.msra.mxu0 0.0
    %2332 = vmatprep.subr.mxu0 0.0
    %2333 = vmatpush1.msra.mxu0 0.0
    %2334 = vmatprep.subr.mxu0 0.0
    %2335 = vmatpush1.msra.mxu0 0.0
    %2336 = vmatprep.subr.mxu0 0.0
    %2337 = vmatpush1.msra.mxu0 0.0
    %2338 = vmatprep.subr.mxu0 0.0
    %2339 = vmatpush1.msra.mxu0 0.0
    %2340 = vmatprep.subr.mxu0 0.0
    %2341 = vmatpush1.msra.mxu0 0.0
    %2342 = vmatprep.subr.mxu0 0.0
    %2343 = vmatpush1.msra.mxu0 0.0
    %2344 = vmatprep.subr.mxu0 0.0
    %2345 = vmatpush1.msra.mxu0 0.0
    %2346 = vmatprep.subr.mxu0 0.0
    %2347 = vmatpush1.msra.mxu0 0.0
    %2348 = vmatprep.subr.mxu0 0.0
    %2349 = vmatpush1.msra.mxu0 0.0
    %2350 = vmatprep.subr.mxu0 0.0
    %2351 = vmatpush1.msra.mxu0 0.0
    %2352 = vmatprep.subr.mxu0 0.0
    %2353 = vmatpush1.msra.mxu0 0.0
    %2354 = vmatprep.subr.mxu0 0.0
    %2355 = vmatpush1.msra.mxu0 0.0
    %2356 = vmatprep.subr.mxu0 0.0
    %2357 = vmatpush1.msra.mxu0 0.0
    %2358 = vmatprep.subr.mxu0 0.0
    %2359 = vmatpush1.msra.mxu0 0.0
    %2360 = vmatprep.subr.mxu0 0.0
    %2361 = vmatpush1.msra.mxu0 0.0
    %2362 = vmatprep.subr.mxu0 0.0
    %2363 = vmatpush1.msra.mxu0 0.0
    %2364 = vmatprep.subr.mxu0 0.0
    %2365 = vmatpush1.msra.mxu0 0.0
    %2366 = vmatprep.subr.mxu0 0.0
    %2367 = vmatpush1.msra.mxu0 0.0
    %2368 = vmatprep.subr.mxu0 0.0
    %2369 = vmatpush1.msra.mxu0 0.0
    %2370 = vmatprep.mubr.f32.mxu0 0.0
    %2371 = vmatmul.mubr.f32.gmra.mrb[0].mxu0 %v2304
    %v2372 = vpop.f32.mrb[0].mxu0
    %v2373 = vadd.f32 %v2273, %v2372
    %v2374 = vpop.f32.mrb[0].mxu0
    %2375 = vdwg.mxu0
    %vm2376 = vcmask 64512
    %2377 = vst.msk [vmem:[#allocation16] sm:$0xff] %vm2376, %v2373
    // Predicated region
    $region74: #{grunet_forward.1} parent=1 // pred_check
      _
    $region75: #{grunet_forward.1} parent=1 // pred_check_branch
      %2379 = sbr.rel (0) target = $region77
    $region76: #{grunet_forward.1} parent=1 // pred_region
      %s2381 = ssub.s32 128, 128
      %2382 = vsyncadd [#allocation7], %s2381
      %s2384 = sshll.u32 [#allocation16], 4
      %s2385 = int_to_ptr.vmem [resolvable:$true] %s2384
      %2387 = dma.vmem_to_hbm [thread:$0]  %s2385, 128, %s12, [#allocation7]
    $region77: #{grunet_forward.1} parent=1 // pred_fallthru
      _
    // Predicated region
    $region78: #{grunet_forward.1} parent=1 // pred_check
      _
    $region79: #{grunet_forward.1} parent=1 // pred_check_branch
      %2389 = sbr.rel (0) target = $region81
    $region80: #{grunet_forward.1} parent=1 // pred_region
      %s2391 = ssub.s32 64, 64
      %2392 = vsyncadd [#allocation18], %s2391
      %s2393 = sshll.u32 [#allocation17], 4
      %s2394 = int_to_ptr.vmem [resolvable:$true] %s2393
      %2399 = dma.vmem_to_hbm [thread:$0]  %s2394, 64, %s13, [#allocation18], 32, 32, 2
    $region81: #{grunet_forward.1} parent=1 // pred_fallthru
      _
    // Predicated region
    $region82: #{grunet_forward.1} parent=1 // pred_check
      _
    $region83: #{grunet_forward.1} parent=1 // pred_check_branch
      %2401 = sbr.rel (0) target = $region85
    $region84: #{grunet_forward.1} parent=1 // pred_region
      %2402 = dma.done [#allocation7], 128
    $region85: #{grunet_forward.1} parent=1 // pred_fallthru
      _
    // Predicated region
    $region86: #{grunet_forward.1} parent=1 // pred_check
      _
    $region87: #{grunet_forward.1} parent=1 // pred_check_branch
      %2404 = sbr.rel (0) target = $region89
    $region88: #{grunet_forward.1} parent=1 // pred_region
      %2405 = dma.done [#allocation18], 64
    $region89: #{grunet_forward.1} parent=1 // pred_fallthru
      _
    %2406 = vsyncpa [#allocation6], 1
    %2407 = vsyncpa [#allocation9], 1
    %2408 = vsyncpa [#allocation12], 1
    %2409 = vsyncpa [#allocation15], 1
    %2410 = vsyncpa [#allocation7], 1
    %2411 = vsyncpa [#allocation18], 1

</llo_original>
